<compile_context>
chip_gen: v7x
topology: tpu7x:2x2x1
jax: 0.10.0
libtpu: 0.0.40
codegen_flags: <defaults>
</compile_context>

<pallas_src>
import jax
import jax.numpy as jnp
from jax.experimental import pallas as pl
from jax.experimental.pallas import tpu as pltpu

INPUT_SIZE = 114
HIDDEN = 256
NUM_LAYERS = 5
SEQ_LEN = 5          # fc1 expects hidden_size * 5 features => seq_len must be 5
D_PAD = 256          # layer-0 input padded 114 -> 256 with zeros (== HIDDEN)


def _lstm_step(gates, c):
    """Gate columns are pre-permuted to (i, f, o, g): one wide sigmoid + one tanh."""
    H = HIDDEN
    ifo = jax.nn.sigmoid(gates[:, :3 * H])      # (B, 3H)  -> i | f | o
    g = jnp.tanh(gates[:, 3 * H:])              # (B, H)
    c_new = ifo[:, H:2 * H] * c + ifo[:, :H] * g
    h_new = ifo[:, 2 * H:] * jnp.tanh(c_new)
    return h_new, c_new


def lstm_mlp_kernel(x_ref, w_ih_ref, w_hh_ref, b_ref,
                    fc1w_ref, fc1b_ref, fc2w_ref, fc2b_ref,
                    fc3w_ref, fc3b_ref, fc4w_ref, fc4b_ref,
                    out_ref, act_ref):
    l = pl.program_id(0)
    T, B, H = act_ref.shape                     # (SEQ_LEN, padded batch, HIDDEN)

    # Layer 0 reads the (padded) input sequence; later layers read the previous
    # layer's h sequence, carried across grid steps in VMEM scratch.
    @pl.when(l == 0)
    def _():
        act_ref[...] = x_ref[...]

    w_ih = w_ih_ref[0]                          # (D_PAD, 4H) bf16
    w_hh = w_hh_ref[0]                          # (H,     4H) bf16
    b = b_ref[0]                                # (1, 4H)     f32  (b_ih + b_hh)

    act = act_ref[...]                          # (T, B, H) f32

    # Hoisted input projection: all T timesteps in ONE MXU matmul, bias folded in.
    # B is a multiple of 8, so the (T, B, H) -> (T*B, H) merge is tile-aligned.
    xproj = jnp.dot(act.reshape(T * B, H).astype(jnp.bfloat16), w_ih,
                    preferred_element_type=jnp.float32) + b       # (T*B, 4H) f32

    # t = 0: h0 = c0 = 0, so the recurrent matmul vanishes.
    h, c = _lstm_step(xproj[0:B, :], jnp.zeros((B, H), jnp.float32))
    act_ref[0] = h
    outs = [h]

    # Serial recurrence: only h @ W_hh remains on the latency-critical chain.
    for t in range(1, T):
        gates = xproj[t * B:(t + 1) * B, :] + jnp.dot(
            h.astype(jnp.bfloat16), w_hh, preferred_element_type=jnp.float32)
        h, c = _lstm_step(gates, c)
        act_ref[t] = h
        outs.append(h)

    # MLP head on the final layer's output sequence.
    @pl.when(l == pl.num_programs(0) - 1)
    def _():
        # torch x.reshape(B, -1) on (B, T, H) == concat over time along features, so
        # fc1(feat) == sum_t h_t @ fc1w[t*H:(t+1)*H] -- avoids materializing (B, T*H).
        h1 = fc1b_ref[...]                                          # (1, 256) f32
        for t in range(T):
            h1 = h1 + jnp.dot(outs[t].astype(jnp.bfloat16),
                              fc1w_ref[t * H:(t + 1) * H, :],
                              preferred_element_type=jnp.float32)
        h1 = jnp.maximum(h1, 0.0)
        h2 = jnp.maximum(
            jnp.dot(h1.astype(jnp.bfloat16), fc2w_ref[...],
                    preferred_element_type=jnp.float32) + fc2b_ref[...], 0.0)
        h3 = jnp.maximum(
            jnp.dot(h2.astype(jnp.bfloat16), fc3w_ref[...],
                    preferred_element_type=jnp.float32) + fc3b_ref[...], 0.0)
        logits = jnp.dot(h3.astype(jnp.bfloat16), fc4w_ref[...],
                         preferred_element_type=jnp.float32) + fc4b_ref[...]
        out_ref[...] = jax.nn.sigmoid(logits)                       # (B, 1)


def make_params(key):
    """Deterministic synthetic parameters matching nn.LSTM / nn.Linear shapes.

    Weights are pre-transposed to (in, out), gate columns permuted from PyTorch's
    (i, f, g, o) to (i, f, o, g), and matmul weights stored in bf16.
    """
    H = HIDDEN
    k = 1.0 / jnp.sqrt(jnp.float32(H))
    keys = iter(jax.random.split(key, 4 * NUM_LAYERS + 8))

    def u(shape, bound):
        return jax.random.uniform(next(keys), shape, jnp.float32, -bound, bound)

    def reorder_gates(w):   # last axis (4H) laid out (i,f,g,o) -> (i,f,o,g)
        return jnp.concatenate(
            [w[..., :2 * H], w[..., 3 * H:], w[..., 2 * H:3 * H]], axis=-1)

    w_ih_list, w_hh_list, b_list = [], [], []
    for l in range(NUM_LAYERS):
        in_dim = INPUT_SIZE if l == 0 else H
        w_ih = u((4 * H, in_dim), k)                           # torch layout (4H, in)
        w_ih = jnp.pad(w_ih, ((0, 0), (0, D_PAD - in_dim)))    # pad input dim -> 256
        w_hh = u((4 * H, H), k)                                # torch layout (4H, H)
        b_ih = u((4 * H,), k)
        b_hh = u((4 * H,), k)
        w_ih_list.append(reorder_gates(w_ih.T).astype(jnp.bfloat16))   # (D_PAD, 4H)
        w_hh_list.append(reorder_gates(w_hh.T).astype(jnp.bfloat16))   # (H, 4H)
        b_list.append(reorder_gates((b_ih + b_hh)[None, :]))           # (1, 4H) f32

    params = {
        "w_ih": jnp.stack(w_ih_list),        # (L, D_PAD, 4H) bf16
        "w_hh": jnp.stack(w_hh_list),        # (L, H, 4H)     bf16
        "b": jnp.stack(b_list),              # (L, 1, 4H)     f32
    }

    def linear(in_dim, out_dim):
        kk = 1.0 / jnp.sqrt(jnp.float32(in_dim))
        w = jax.random.uniform(next(keys), (out_dim, in_dim), jnp.float32, -kk, kk)
        bb = jax.random.uniform(next(keys), (1, out_dim), jnp.float32, -kk, kk)
        return w.T.astype(jnp.bfloat16), bb  # (in, out) bf16, (1, out) f32

    params["fc1w"], params["fc1b"] = linear(H * SEQ_LEN, 256)
    params["fc2w"], params["fc2b"] = linear(256, 128)
    params["fc3w"], params["fc3b"] = linear(128, 64)
    params["fc4w"], params["fc4b"] = linear(64, 1)
    return params


@jax.jit
def lstm_forward(x, params):
    B, T, D = x.shape
    assert T == SEQ_LEN and D == INPUT_SIZE
    H = HIDDEN
    Bp = max(8, ((B + 7) // 8) * 8)              # pad batch to a sublane multiple

    # Time-major (T, Bp, D_PAD) so the kernel does tile-aligned per-timestep stores.
    x_tb = jnp.transpose(x.astype(jnp.float32), (1, 0, 2))
    x_tb = jnp.pad(x_tb, ((0, 0), (0, Bp - B), (0, D_PAD - D)))

    const2 = lambda l: (0, 0)
    const3 = lambda l: (0, 0, 0)
    per_layer = lambda l: (l, 0, 0)

    in_specs = [
        pl.BlockSpec((T, Bp, D_PAD), const3),         # x (fetched once)
        pl.BlockSpec((1, D_PAD, 4 * H), per_layer),   # w_ih[l]  (pipelined per layer)
        pl.BlockSpec((1, H, 4 * H), per_layer),       # w_hh[l]
        pl.BlockSpec((1, 1, 4 * H), per_layer),       # b[l]
        pl.BlockSpec((H * SEQ_LEN, 256), const2),     # fc1w (fetched once)
        pl.BlockSpec((1, 256), const2),               # fc1b
        pl.BlockSpec((256, 128), const2),             # fc2w
        pl.BlockSpec((1, 128), const2),               # fc2b
        pl.BlockSpec((128, 64), const2),              # fc3w
        pl.BlockSpec((1, 64), const2),                # fc3b
        pl.BlockSpec((64, 1), const2),                # fc4w
        pl.BlockSpec((1, 1), const2),                 # fc4b
    ]

    grid_spec = pltpu.PrefetchScalarGridSpec(
        num_scalar_prefetch=0,
        grid=(NUM_LAYERS,),
        in_specs=in_specs,
        out_specs=pl.BlockSpec((Bp, 1), const2),
        scratch_shapes=[pltpu.VMEM((SEQ_LEN, Bp, H), jnp.float32)],   # inter-layer h sequence
    )

    out = pl.pallas_call(
        lstm_mlp_kernel,
        out_shape=jax.ShapeDtypeStruct((Bp, 1), jnp.float32),
        grid_spec=grid_spec,
        compiler_params=pltpu.CompilerParams(
            dimension_semantics=("arbitrary",),          # layer axis carries state
            vmem_limit_bytes=32 * 1024 * 1024,           # within v7x's 64 MiB physical VMEM
        ),
    )(x_tb, params["w_ih"], params["w_hh"], params["b"],
      params["fc1w"], params["fc1b"], params["fc2w"], params["fc2b"],
      params["fc3w"], params["fc3b"], params["fc4w"], params["fc4b"])
    return out[:B]


if __name__ == "__main__":
    key = jax.random.PRNGKey(0)
    k_x, k_p = jax.random.split(key)
    # batch=2, seq=5 (required by fc1 = hidden*5), features=114
    # TODO(synk): for serving, batch requests to >=128 rows per call to fill the MXU.
    x = jax.random.normal(k_x, (2, SEQ_LEN, INPUT_SIZE), jnp.float32)
    params = make_params(k_p)

    out = lstm_forward(x, params)
    jax.block_until_ready(out)
    assert out.shape == (2, 1)
    print("KERNEL_OK")
</pallas_src>

<mosaic_0001>
module attributes {stable_mosaic.version = 11 : i64} {
  func.func @lstm_mlp_kernel(%arg0: i32, %arg1: memref<5x8x256xf32, #tpu.memory_space<vmem>>, %arg2: memref<1x256x1024xbf16, #tpu.memory_space<vmem>>, %arg3: memref<1x256x1024xbf16, #tpu.memory_space<vmem>>, %arg4: memref<1x1x1024xf32, #tpu.memory_space<vmem>>, %arg5: memref<1280x256xbf16, #tpu.memory_space<vmem>>, %arg6: memref<1x256xf32, #tpu.memory_space<vmem>>, %arg7: memref<256x128xbf16, #tpu.memory_space<vmem>>, %arg8: memref<1x128xf32, #tpu.memory_space<vmem>>, %arg9: memref<128x64xbf16, #tpu.memory_space<vmem>>, %arg10: memref<1x64xf32, #tpu.memory_space<vmem>>, %arg11: memref<64x1xbf16, #tpu.memory_space<vmem>>, %arg12: memref<1x1xf32, #tpu.memory_space<vmem>>, %arg13: memref<8x1xf32, #tpu.memory_space<vmem>>, %arg14: memref<5x8x256xf32, #tpu.memory_space<vmem>>) attributes {dimension_semantics = [#tpu.dimension_semantics<arbitrary>], iteration_bounds = array<i64: 5>, scalar_prefetch = 0 : i64, scratch_operands = 1 : i64, tpu.core_type = #tpu.core_type<tc>, window_params = [{pipeline_mode = #tpu.pipeline_mode<synchronous>, transform_indices = @transform_0, window_bounds = array<i64: 5, 8, 256>}, {transform_indices = @transform_1, window_bounds = array<i64: 1, 256, 1024>}, {transform_indices = @transform_2, window_bounds = array<i64: 1, 256, 1024>}, {transform_indices = @transform_3, window_bounds = array<i64: 1, 1, 1024>}, {pipeline_mode = #tpu.pipeline_mode<synchronous>, transform_indices = @transform_4, window_bounds = array<i64: 1280, 256>}, {pipeline_mode = #tpu.pipeline_mode<synchronous>, transform_indices = @transform_5, window_bounds = array<i64: 1, 256>}, {pipeline_mode = #tpu.pipeline_mode<synchronous>, transform_indices = @transform_6, window_bounds = array<i64: 256, 128>}, {pipeline_mode = #tpu.pipeline_mode<synchronous>, transform_indices = @transform_7, window_bounds = array<i64: 1, 128>}, {pipeline_mode = #tpu.pipeline_mode<synchronous>, transform_indices = @transform_8, window_bounds = array<i64: 128, 64>}, {pipeline_mode = #tpu.pipeline_mode<synchronous>, transform_indices = @transform_9, window_bounds = array<i64: 1, 64>}, {pipeline_mode = #tpu.pipeline_mode<synchronous>, transform_indices = @transform_10, window_bounds = array<i64: 64, 1>}, {pipeline_mode = #tpu.pipeline_mode<synchronous>, transform_indices = @transform_11, window_bounds = array<i64: 1, 1>}, {pipeline_mode = #tpu.pipeline_mode<synchronous>, transform_indices = @transform_12, window_bounds = array<i64: 8, 1>}]} {
    %c0_i32 = arith.constant 0 : i32
    %0 = arith.cmpi eq, %arg0, %c0_i32 : i32
    %1 = arith.extui %0 : i1 to i32
    %c0_i32_0 = arith.constant 0 : i32
    %2 = arith.cmpi ne, %1, %c0_i32_0 : i32
    scf.if %2 {
      %c0_34 = arith.constant 0 : index
      %c0_35 = arith.constant 0 : index
      %c0_36 = arith.constant 0 : index
      %131 = vector.load %arg1[%c0_34, %c0_35, %c0_36] : memref<5x8x256xf32, #tpu.memory_space<vmem>>, vector<5x8x256xf32>
      %c0_37 = arith.constant 0 : index
      %c0_38 = arith.constant 0 : index
      %c0_39 = arith.constant 0 : index
      %132 = vector.load %arg14[%c0_37, %c0_38, %c0_39] : memref<5x8x256xf32, #tpu.memory_space<vmem>>, vector<5x8x256xf32>
      tpu.vector_store %arg14[%c0_37, %c0_38, %c0_39], %131 {strides = array<i32>} : memref<5x8x256xf32, #tpu.memory_space<vmem>>, vector<5x8x256xf32>,
    } else {
    }
    %c0 = arith.constant 0 : index
    %c0_1 = arith.constant 0 : index
    %c0_2 = arith.constant 0 : index
    %3 = vector.load %arg2[%c0, %c0_1, %c0_2] : memref<1x256x1024xbf16, #tpu.memory_space<vmem>>, vector<1x256x1024xbf16>
    %4 = vector.shape_cast %3 : vector<1x256x1024xbf16> to vector<256x1024xbf16>
    %c0_3 = arith.constant 0 : index
    %c0_4 = arith.constant 0 : index
    %c0_5 = arith.constant 0 : index
    %5 = vector.load %arg3[%c0_3, %c0_4, %c0_5] : memref<1x256x1024xbf16, #tpu.memory_space<vmem>>, vector<1x256x1024xbf16>
    %6 = vector.shape_cast %5 : vector<1x256x1024xbf16> to vector<256x1024xbf16>
    %c0_6 = arith.constant 0 : index
    %c0_7 = arith.constant 0 : index
    %c0_8 = arith.constant 0 : index
    %7 = vector.load %arg4[%c0_6, %c0_7, %c0_8] : memref<1x1x1024xf32, #tpu.memory_space<vmem>>, vector<1x1x1024xf32>
    %8 = vector.shape_cast %7 : vector<1x1x1024xf32> to vector<1x1024xf32>
    %c0_9 = arith.constant 0 : index
    %c0_10 = arith.constant 0 : index
    %c0_11 = arith.constant 0 : index
    %9 = vector.load %arg14[%c0_9, %c0_10, %c0_11] : memref<5x8x256xf32, #tpu.memory_space<vmem>>, vector<5x8x256xf32>
    %10 = vector.shape_cast %9 : vector<5x8x256xf32> to vector<40x256xf32>
    %11 = arith.truncf %10 : vector<40x256xf32> to vector<40x256xbf16>
    %cst = arith.constant dense<0.000000e+00> : vector<40x1024xf32>
    %12 = tpu.matmul %11, %4, %cst {dimension_numbers = #tpu.dot_dimension_numbers<[1], [0], [0], [1], [0, 0, 1, 1], [], []>} : vector<40x256xbf16>, vector<256x1024xbf16>, vector<40x1024xf32> -> vector<40x1024xf32>
    %13 = vector.broadcast %8 : vector<1x1024xf32> to vector<40x1024xf32>
    %14 = arith.addf %12, %13 : vector<40x1024xf32>
    %15 = vector.extract_strided_slice %14 {offsets = [0, 0], sizes = [8, 1024], strides = [1, 1]} : vector<40x1024xf32> to vector<8x1024xf32>
    %cst_12 = arith.constant 0.000000e+00 : f32
    %16 = vector.broadcast %cst_12 : f32 to vector<8x256xf32>
    %17 = vector.extract_strided_slice %15 {offsets = [0, 0], sizes = [8, 768], strides = [1, 1]} : vector<8x1024xf32> to vector<8x768xf32>
    %18 = arith.negf %17 : vector<8x768xf32>
    %19 = math.exp %18 : vector<8x768xf32>
    %cst_13 = arith.constant 1.000000e+00 : f32
    %20 = vector.broadcast %cst_13 : f32 to vector<8x768xf32>
    %21 = arith.addf %20, %19 : vector<8x768xf32>
    %22 = arith.divf %20, %21 : vector<8x768xf32>
    %23 = vector.extract_strided_slice %15 {offsets = [0, 768], sizes = [8, 256], strides = [1, 1]} : vector<8x1024xf32> to vector<8x256xf32>
    %24 = math.tanh %23 : vector<8x256xf32>
    %25 = vector.extract_strided_slice %22 {offsets = [0, 256], sizes = [8, 256], strides = [1, 1]} : vector<8x768xf32> to vector<8x256xf32>
    %26 = arith.mulf %25, %16 : vector<8x256xf32>
    %27 = vector.extract_strided_slice %22 {offsets = [0, 0], sizes = [8, 256], strides = [1, 1]} : vector<8x768xf32> to vector<8x256xf32>
    %28 = arith.mulf %27, %24 : vector<8x256xf32>
    %29 = arith.addf %26, %28 : vector<8x256xf32>
    %30 = vector.extract_strided_slice %22 {offsets = [0, 512], sizes = [8, 256], strides = [1, 1]} : vector<8x768xf32> to vector<8x256xf32>
    %31 = math.tanh %29 : vector<8x256xf32>
    %32 = arith.mulf %30, %31 : vector<8x256xf32>
    %c0_14 = arith.constant 0 : index
    %c0_15 = arith.constant 0 : index
    %c0_16 = arith.constant 0 : index
    %33 = vector.load %arg14[%c0_14, %c0_15, %c0_16] : memref<5x8x256xf32, #tpu.memory_space<vmem>>, vector<1x8x256xf32>
    %34 = vector.shape_cast %33 : vector<1x8x256xf32> to vector<8x256xf32>
    %35 = vector.shape_cast %32 : vector<8x256xf32> to vector<1x8x256xf32>
    tpu.vector_store %arg14[%c0_14, %c0_15, %c0_16], %35 {strides = array<i32>} : memref<5x8x256xf32, #tpu.memory_space<vmem>>, vector<1x8x256xf32>,
    %36 = vector.extract_strided_slice %14 {offsets = [8, 0], sizes = [8, 1024], strides = [1, 1]} : vector<40x1024xf32> to vector<8x1024xf32>
    %37 = arith.truncf %32 : vector<8x256xf32> to vector<8x256xbf16>
    %cst_17 = arith.constant dense<0.000000e+00> : vector<8x1024xf32>
    %38 = tpu.matmul %37, %6, %cst_17 {dimension_numbers = #tpu.dot_dimension_numbers<[1], [0], [0], [1], [0, 0, 1, 1], [], []>} : vector<8x256xbf16>, vector<256x1024xbf16>, vector<8x1024xf32> -> vector<8x1024xf32>
    %39 = arith.addf %36, %38 : vector<8x1024xf32>
    %40 = vector.extract_strided_slice %39 {offsets = [0, 0], sizes = [8, 768], strides = [1, 1]} : vector<8x1024xf32> to vector<8x768xf32>
    %41 = arith.negf %40 : vector<8x768xf32>
    %42 = math.exp %41 : vector<8x768xf32>
    %cst_18 = arith.constant 1.000000e+00 : f32
    %43 = vector.broadcast %cst_18 : f32 to vector<8x768xf32>
    %44 = arith.addf %43, %42 : vector<8x768xf32>
    %45 = arith.divf %43, %44 : vector<8x768xf32>
    %46 = vector.extract_strided_slice %39 {offsets = [0, 768], sizes = [8, 256], strides = [1, 1]} : vector<8x1024xf32> to vector<8x256xf32>
    %47 = math.tanh %46 : vector<8x256xf32>
    %48 = vector.extract_strided_slice %45 {offsets = [0, 256], sizes = [8, 256], strides = [1, 1]} : vector<8x768xf32> to vector<8x256xf32>
    %49 = arith.mulf %48, %29 : vector<8x256xf32>
    %50 = vector.extract_strided_slice %45 {offsets = [0, 0], sizes = [8, 256], strides = [1, 1]} : vector<8x768xf32> to vector<8x256xf32>
    %51 = arith.mulf %50, %47 : vector<8x256xf32>
    %52 = arith.addf %49, %51 : vector<8x256xf32>
    %53 = vector.extract_strided_slice %45 {offsets = [0, 512], sizes = [8, 256], strides = [1, 1]} : vector<8x768xf32> to vector<8x256xf32>
    %54 = math.tanh %52 : vector<8x256xf32>
    %55 = arith.mulf %53, %54 : vector<8x256xf32>
    %c1 = arith.constant 1 : index
    %c0_19 = arith.constant 0 : index
    %c0_20 = arith.constant 0 : index
    %56 = vector.load %arg14[%c1, %c0_19, %c0_20] : memref<5x8x256xf32, #tpu.memory_space<vmem>>, vector<1x8x256xf32>
    %57 = vector.shape_cast %56 : vector<1x8x256xf32> to vector<8x256xf32>
    %58 = vector.shape_cast %55 : vector<8x256xf32> to vector<1x8x256xf32>
    tpu.vector_store %arg14[%c1, %c0_19, %c0_20], %58 {strides = array<i32>} : memref<5x8x256xf32, #tpu.memory_space<vmem>>, vector<1x8x256xf32>,
    %59 = vector.extract_strided_slice %14 {offsets = [16, 0], sizes = [8, 1024], strides = [1, 1]} : vector<40x1024xf32> to vector<8x1024xf32>
    %60 = arith.truncf %55 : vector<8x256xf32> to vector<8x256xbf16>
    %cst_21 = arith.constant dense<0.000000e+00> : vector<8x1024xf32>
    %61 = tpu.matmul %60, %6, %cst_21 {dimension_numbers = #tpu.dot_dimension_numbers<[1], [0], [0], [1], [0, 0, 1, 1], [], []>} : vector<8x256xbf16>, vector<256x1024xbf16>, vector<8x1024xf32> -> vector<8x1024xf32>
    %62 = arith.addf %59, %61 : vector<8x1024xf32>
    %63 = vector.extract_strided_slice %62 {offsets = [0, 0], sizes = [8, 768], strides = [1, 1]} : vector<8x1024xf32> to vector<8x768xf32>
    %64 = arith.negf %63 : vector<8x768xf32>
    %65 = math.exp %64 : vector<8x768xf32>
    %cst_22 = arith.constant 1.000000e+00 : f32
    %66 = vector.broadcast %cst_22 : f32 to vector<8x768xf32>
    %67 = arith.addf %66, %65 : vector<8x768xf32>
    %68 = arith.divf %66, %67 : vector<8x768xf32>
    %69 = vector.extract_strided_slice %62 {offsets = [0, 768], sizes = [8, 256], strides = [1, 1]} : vector<8x1024xf32> to vector<8x256xf32>
    %70 = math.tanh %69 : vector<8x256xf32>
    %71 = vector.extract_strided_slice %68 {offsets = [0, 256], sizes = [8, 256], strides = [1, 1]} : vector<8x768xf32> to vector<8x256xf32>
    %72 = arith.mulf %71, %52 : vector<8x256xf32>
    %73 = vector.extract_strided_slice %68 {offsets = [0, 0], sizes = [8, 256], strides = [1, 1]} : vector<8x768xf32> to vector<8x256xf32>
    %74 = arith.mulf %73, %70 : vector<8x256xf32>
    %75 = arith.addf %72, %74 : vector<8x256xf32>
    %76 = vector.extract_strided_slice %68 {offsets = [0, 512], sizes = [8, 256], strides = [1, 1]} : vector<8x768xf32> to vector<8x256xf32>
    %77 = math.tanh %75 : vector<8x256xf32>
    %78 = arith.mulf %76, %77 : vector<8x256xf32>
    %c2 = arith.constant 2 : index
    %c0_23 = arith.constant 0 : index
    %c0_24 = arith.constant 0 : index
    %79 = vector.load %arg14[%c2, %c0_23, %c0_24] : memref<5x8x256xf32, #tpu.memory_space<vmem>>, vector<1x8x256xf32>
    %80 = vector.shape_cast %79 : vector<1x8x256xf32> to vector<8x256xf32>
    %81 = vector.shape_cast %78 : vector<8x256xf32> to vector<1x8x256xf32>
    tpu.vector_store %arg14[%c2, %c0_23, %c0_24], %81 {strides = array<i32>} : memref<5x8x256xf32, #tpu.memory_space<vmem>>, vector<1x8x256xf32>,
    %82 = vector.extract_strided_slice %14 {offsets = [24, 0], sizes = [8, 1024], strides = [1, 1]} : vector<40x1024xf32> to vector<8x1024xf32>
    %83 = arith.truncf %78 : vector<8x256xf32> to vector<8x256xbf16>
    %cst_25 = arith.constant dense<0.000000e+00> : vector<8x1024xf32>
    %84 = tpu.matmul %83, %6, %cst_25 {dimension_numbers = #tpu.dot_dimension_numbers<[1], [0], [0], [1], [0, 0, 1, 1], [], []>} : vector<8x256xbf16>, vector<256x1024xbf16>, vector<8x1024xf32> -> vector<8x1024xf32>
    %85 = arith.addf %82, %84 : vector<8x1024xf32>
    %86 = vector.extract_strided_slice %85 {offsets = [0, 0], sizes = [8, 768], strides = [1, 1]} : vector<8x1024xf32> to vector<8x768xf32>
    %87 = arith.negf %86 : vector<8x768xf32>
    %88 = math.exp %87 : vector<8x768xf32>
    %cst_26 = arith.constant 1.000000e+00 : f32
    %89 = vector.broadcast %cst_26 : f32 to vector<8x768xf32>
    %90 = arith.addf %89, %88 : vector<8x768xf32>
    %91 = arith.divf %89, %90 : vector<8x768xf32>
    %92 = vector.extract_strided_slice %85 {offsets = [0, 768], sizes = [8, 256], strides = [1, 1]} : vector<8x1024xf32> to vector<8x256xf32>
    %93 = math.tanh %92 : vector<8x256xf32>
    %94 = vector.extract_strided_slice %91 {offsets = [0, 256], sizes = [8, 256], strides = [1, 1]} : vector<8x768xf32> to vector<8x256xf32>
    %95 = arith.mulf %94, %75 : vector<8x256xf32>
    %96 = vector.extract_strided_slice %91 {offsets = [0, 0], sizes = [8, 256], strides = [1, 1]} : vector<8x768xf32> to vector<8x256xf32>
    %97 = arith.mulf %96, %93 : vector<8x256xf32>
    %98 = arith.addf %95, %97 : vector<8x256xf32>
    %99 = vector.extract_strided_slice %91 {offsets = [0, 512], sizes = [8, 256], strides = [1, 1]} : vector<8x768xf32> to vector<8x256xf32>
    %100 = math.tanh %98 : vector<8x256xf32>
    %101 = arith.mulf %99, %100 : vector<8x256xf32>
    %c3 = arith.constant 3 : index
    %c0_27 = arith.constant 0 : index
    %c0_28 = arith.constant 0 : index
    %102 = vector.load %arg14[%c3, %c0_27, %c0_28] : memref<5x8x256xf32, #tpu.memory_space<vmem>>, vector<1x8x256xf32>
    %103 = vector.shape_cast %102 : vector<1x8x256xf32> to vector<8x256xf32>
    %104 = vector.shape_cast %101 : vector<8x256xf32> to vector<1x8x256xf32>
    tpu.vector_store %arg14[%c3, %c0_27, %c0_28], %104 {strides = array<i32>} : memref<5x8x256xf32, #tpu.memory_space<vmem>>, vector<1x8x256xf32>,
    %105 = vector.extract_strided_slice %14 {offsets = [32, 0], sizes = [8, 1024], strides = [1, 1]} : vector<40x1024xf32> to vector<8x1024xf32>
    %106 = arith.truncf %101 : vector<8x256xf32> to vector<8x256xbf16>
    %cst_29 = arith.constant dense<0.000000e+00> : vector<8x1024xf32>
    %107 = tpu.matmul %106, %6, %cst_29 {dimension_numbers = #tpu.dot_dimension_numbers<[1], [0], [0], [1], [0, 0, 1, 1], [], []>} : vector<8x256xbf16>, vector<256x1024xbf16>, vector<8x1024xf32> -> vector<8x1024xf32>
    %108 = arith.addf %105, %107 : vector<8x1024xf32>
    %109 = vector.extract_strided_slice %108 {offsets = [0, 0], sizes = [8, 768], strides = [1, 1]} : vector<8x1024xf32> to vector<8x768xf32>
    %110 = arith.negf %109 : vector<8x768xf32>
    %111 = math.exp %110 : vector<8x768xf32>
    %cst_30 = arith.constant 1.000000e+00 : f32
    %112 = vector.broadcast %cst_30 : f32 to vector<8x768xf32>
    %113 = arith.addf %112, %111 : vector<8x768xf32>
    %114 = arith.divf %112, %113 : vector<8x768xf32>
    %115 = vector.extract_strided_slice %108 {offsets = [0, 768], sizes = [8, 256], strides = [1, 1]} : vector<8x1024xf32> to vector<8x256xf32>
    %116 = math.tanh %115 : vector<8x256xf32>
    %117 = vector.extract_strided_slice %114 {offsets = [0, 256], sizes = [8, 256], strides = [1, 1]} : vector<8x768xf32> to vector<8x256xf32>
    %118 = arith.mulf %117, %98 : vector<8x256xf32>
    %119 = vector.extract_strided_slice %114 {offsets = [0, 0], sizes = [8, 256], strides = [1, 1]} : vector<8x768xf32> to vector<8x256xf32>
    %120 = arith.mulf %119, %116 : vector<8x256xf32>
    %121 = arith.addf %118, %120 : vector<8x256xf32>
    %122 = vector.extract_strided_slice %114 {offsets = [0, 512], sizes = [8, 256], strides = [1, 1]} : vector<8x768xf32> to vector<8x256xf32>
    %123 = math.tanh %121 : vector<8x256xf32>
    %124 = arith.mulf %122, %123 : vector<8x256xf32>
    %c4 = arith.constant 4 : index
    %c0_31 = arith.constant 0 : index
    %c0_32 = arith.constant 0 : index
    %125 = vector.load %arg14[%c4, %c0_31, %c0_32] : memref<5x8x256xf32, #tpu.memory_space<vmem>>, vector<1x8x256xf32>
    %126 = vector.shape_cast %125 : vector<1x8x256xf32> to vector<8x256xf32>
    %127 = vector.shape_cast %124 : vector<8x256xf32> to vector<1x8x256xf32>
    tpu.vector_store %arg14[%c4, %c0_31, %c0_32], %127 {strides = array<i32>} : memref<5x8x256xf32, #tpu.memory_space<vmem>>, vector<1x8x256xf32>,
    %c4_i32 = arith.constant 4 : i32
    %128 = arith.cmpi eq, %arg0, %c4_i32 : i32
    %129 = arith.extui %128 : i1 to i32
    %c0_i32_33 = arith.constant 0 : i32
    %130 = arith.cmpi ne, %129, %c0_i32_33 : i32
    scf.if %130 {
      %c0_34 = arith.constant 0 : index
      %c0_35 = arith.constant 0 : index
      %131 = vector.load %arg6[%c0_34, %c0_35] : memref<1x256xf32, #tpu.memory_space<vmem>>, vector<1x256xf32>
      %132 = arith.truncf %32 : vector<8x256xf32> to vector<8x256xbf16>
      %c0_36 = arith.constant 0 : index
      %c0_37 = arith.constant 0 : index
      %133 = vector.load %arg5[%c0_36, %c0_37] : memref<1280x256xbf16, #tpu.memory_space<vmem>>, vector<256x256xbf16>
      %cst_38 = arith.constant dense<0.000000e+00> : vector<8x256xf32>
      %134 = tpu.matmul %132, %133, %cst_38 {dimension_numbers = #tpu.dot_dimension_numbers<[1], [0], [0], [1], [0, 0, 1, 1], [], []>} : vector<8x256xbf16>, vector<256x256xbf16>, vector<8x256xf32> -> vector<8x256xf32>
      %135 = vector.broadcast %131 : vector<1x256xf32> to vector<8x256xf32>
      %136 = arith.addf %135, %134 : vector<8x256xf32>
      %137 = arith.truncf %55 : vector<8x256xf32> to vector<8x256xbf16>
      %c256 = arith.constant 256 : index
      %c0_39 = arith.constant 0 : index
      %138 = vector.load %arg5[%c256, %c0_39] : memref<1280x256xbf16, #tpu.memory_space<vmem>>, vector<256x256xbf16>
      %cst_40 = arith.constant dense<0.000000e+00> : vector<8x256xf32>
      %139 = tpu.matmul %137, %138, %cst_40 {dimension_numbers = #tpu.dot_dimension_numbers<[1], [0], [0], [1], [0, 0, 1, 1], [], []>} : vector<8x256xbf16>, vector<256x256xbf16>, vector<8x256xf32> -> vector<8x256xf32>
      %140 = arith.addf %136, %139 : vector<8x256xf32>
      %141 = arith.truncf %78 : vector<8x256xf32> to vector<8x256xbf16>
      %c512 = arith.constant 512 : index
      %c0_41 = arith.constant 0 : index
      %142 = vector.load %arg5[%c512, %c0_41] : memref<1280x256xbf16, #tpu.memory_space<vmem>>, vector<256x256xbf16>
      %cst_42 = arith.constant dense<0.000000e+00> : vector<8x256xf32>
      %143 = tpu.matmul %141, %142, %cst_42 {dimension_numbers = #tpu.dot_dimension_numbers<[1], [0], [0], [1], [0, 0, 1, 1], [], []>} : vector<8x256xbf16>, vector<256x256xbf16>, vector<8x256xf32> -> vector<8x256xf32>
      %144 = arith.addf %140, %143 : vector<8x256xf32>
      %145 = arith.truncf %101 : vector<8x256xf32> to vector<8x256xbf16>
      %c768 = arith.constant 768 : index
      %c0_43 = arith.constant 0 : index
      %146 = vector.load %arg5[%c768, %c0_43] : memref<1280x256xbf16, #tpu.memory_space<vmem>>, vector<256x256xbf16>
      %cst_44 = arith.constant dense<0.000000e+00> : vector<8x256xf32>
      %147 = tpu.matmul %145, %146, %cst_44 {dimension_numbers = #tpu.dot_dimension_numbers<[1], [0], [0], [1], [0, 0, 1, 1], [], []>} : vector<8x256xbf16>, vector<256x256xbf16>, vector<8x256xf32> -> vector<8x256xf32>
      %148 = arith.addf %144, %147 : vector<8x256xf32>
      %149 = arith.truncf %124 : vector<8x256xf32> to vector<8x256xbf16>
      %c1024 = arith.constant 1024 : index
      %c0_45 = arith.constant 0 : index
      %150 = vector.load %arg5[%c1024, %c0_45] : memref<1280x256xbf16, #tpu.memory_space<vmem>>, vector<256x256xbf16>
      %cst_46 = arith.constant dense<0.000000e+00> : vector<8x256xf32>
      %151 = tpu.matmul %149, %150, %cst_46 {dimension_numbers = #tpu.dot_dimension_numbers<[1], [0], [0], [1], [0, 0, 1, 1], [], []>} : vector<8x256xbf16>, vector<256x256xbf16>, vector<8x256xf32> -> vector<8x256xf32>
      %152 = arith.addf %148, %151 : vector<8x256xf32>
      %cst_47 = arith.constant 0.000000e+00 : f32
      %153 = vector.broadcast %cst_47 : f32 to vector<8x256xf32>
      %154 = arith.maximumf %152, %153 : vector<8x256xf32>
      %155 = arith.truncf %154 : vector<8x256xf32> to vector<8x256xbf16>
      %c0_48 = arith.constant 0 : index
      %c0_49 = arith.constant 0 : index
      %156 = vector.load %arg7[%c0_48, %c0_49] : memref<256x128xbf16, #tpu.memory_space<vmem>>, vector<256x128xbf16>
      %cst_50 = arith.constant dense<0.000000e+00> : vector<8x128xf32>
      %157 = tpu.matmul %155, %156, %cst_50 {dimension_numbers = #tpu.dot_dimension_numbers<[1], [0], [0], [1], [0, 0, 1, 1], [], []>} : vector<8x256xbf16>, vector<256x128xbf16>, vector<8x128xf32> -> vector<8x128xf32>
      %c0_51 = arith.constant 0 : index
      %c0_52 = arith.constant 0 : index
      %158 = vector.load %arg8[%c0_51, %c0_52] : memref<1x128xf32, #tpu.memory_space<vmem>>, vector<1x128xf32>
      %159 = vector.broadcast %158 : vector<1x128xf32> to vector<8x128xf32>
      %160 = arith.addf %157, %159 : vector<8x128xf32>
      %cst_53 = arith.constant 0.000000e+00 : f32
      %161 = vector.broadcast %cst_53 : f32 to vector<8x128xf32>
      %162 = arith.maximumf %160, %161 : vector<8x128xf32>
      %163 = arith.truncf %162 : vector<8x128xf32> to vector<8x128xbf16>
      %c0_54 = arith.constant 0 : index
      %c0_55 = arith.constant 0 : index
      %164 = vector.load %arg9[%c0_54, %c0_55] : memref<128x64xbf16, #tpu.memory_space<vmem>>, vector<128x64xbf16>
      %cst_56 = arith.constant dense<0.000000e+00> : vector<8x64xf32>
      %165 = tpu.matmul %163, %164, %cst_56 {dimension_numbers = #tpu.dot_dimension_numbers<[1], [0], [0], [1], [0, 0, 1, 1], [], []>} : vector<8x128xbf16>, vector<128x64xbf16>, vector<8x64xf32> -> vector<8x64xf32>
      %c0_57 = arith.constant 0 : index
      %c0_58 = arith.constant 0 : index
      %166 = vector.load %arg10[%c0_57, %c0_58] : memref<1x64xf32, #tpu.memory_space<vmem>>, vector<1x64xf32>
      %167 = vector.broadcast %166 : vector<1x64xf32> to vector<8x64xf32>
      %168 = arith.addf %165, %167 : vector<8x64xf32>
      %cst_59 = arith.constant 0.000000e+00 : f32
      %169 = vector.broadcast %cst_59 : f32 to vector<8x64xf32>
      %170 = arith.maximumf %168, %169 : vector<8x64xf32>
      %171 = arith.truncf %170 : vector<8x64xf32> to vector<8x64xbf16>
      %c0_60 = arith.constant 0 : index
      %c0_61 = arith.constant 0 : index
      %172 = vector.load %arg11[%c0_60, %c0_61] : memref<64x1xbf16, #tpu.memory_space<vmem>>, vector<64x1xbf16>
      %cst_62 = arith.constant dense<0.000000e+00> : vector<8x1xf32>
      %173 = tpu.matmul %171, %172, %cst_62 {dimension_numbers = #tpu.dot_dimension_numbers<[1], [0], [0], [1], [0, 0, 1, 1], [], []>} : vector<8x64xbf16>, vector<64x1xbf16>, vector<8x1xf32> -> vector<8x1xf32>
      %c0_63 = arith.constant 0 : index
      %c0_64 = arith.constant 0 : index
      %174 = vector.load %arg12[%c0_63, %c0_64] : memref<1x1xf32, #tpu.memory_space<vmem>>, vector<1x1xf32>
      %175 = vector.broadcast %174 : vector<1x1xf32> to vector<8x1xf32>
      %176 = arith.addf %173, %175 : vector<8x1xf32>
      %177 = arith.negf %176 : vector<8x1xf32>
      %178 = math.exp %177 : vector<8x1xf32>
      %cst_65 = arith.constant 1.000000e+00 : f32
      %179 = vector.broadcast %cst_65 : f32 to vector<8x1xf32>
      %180 = arith.addf %179, %178 : vector<8x1xf32>
      %181 = arith.divf %179, %180 : vector<8x1xf32>
      %c0_66 = arith.constant 0 : index
      %c0_67 = arith.constant 0 : index
      %182 = vector.load %arg13[%c0_66, %c0_67] : memref<8x1xf32, #tpu.memory_space<vmem>>, vector<8x1xf32>
      tpu.vector_store %arg13[%c0_66, %c0_67], %181 {strides = array<i32>} : memref<8x1xf32, #tpu.memory_space<vmem>>, vector<8x1xf32>,
    } else {
    }
    return
  }
  func.func @transform_0(%arg0: i32) -> (i32, i32, i32) {
    %c0_i32 = arith.constant 0 : i32
    %c0_i32_0 = arith.constant 0 : i32
    %c0_i32_1 = arith.constant 0 : i32
    %c0_i32_2 = arith.constant 0 : i32
    return %c0_i32, %c0_i32_0, %c0_i32_1 : i32, i32, i32
  }
  func.func @transform_1(%arg0: i32) -> (i32, i32, i32) {
    %c0_i32 = arith.constant 0 : i32
    %c0_i32_0 = arith.constant 0 : i32
    %c0_i32_1 = arith.constant 0 : i32
    return %arg0, %c0_i32, %c0_i32_0 : i32, i32, i32
  }
  func.func @transform_2(%arg0: i32) -> (i32, i32, i32) {
    %c0_i32 = arith.constant 0 : i32
    %c0_i32_0 = arith.constant 0 : i32
    %c0_i32_1 = arith.constant 0 : i32
    return %arg0, %c0_i32, %c0_i32_0 : i32, i32, i32
  }
  func.func @transform_3(%arg0: i32) -> (i32, i32, i32) {
    %c0_i32 = arith.constant 0 : i32
    %c0_i32_0 = arith.constant 0 : i32
    %c0_i32_1 = arith.constant 0 : i32
    return %arg0, %c0_i32, %c0_i32_0 : i32, i32, i32
  }
  func.func @transform_4(%arg0: i32) -> (i32, i32) {
    %c0_i32 = arith.constant 0 : i32
    %c0_i32_0 = arith.constant 0 : i32
    %c0_i32_1 = arith.constant 0 : i32
    return %c0_i32, %c0_i32_0 : i32, i32
  }
  func.func @transform_5(%arg0: i32) -> (i32, i32) {
    %c0_i32 = arith.constant 0 : i32
    %c0_i32_0 = arith.constant 0 : i32
    %c0_i32_1 = arith.constant 0 : i32
    return %c0_i32, %c0_i32_0 : i32, i32
  }
  func.func @transform_6(%arg0: i32) -> (i32, i32) {
    %c0_i32 = arith.constant 0 : i32
    %c0_i32_0 = arith.constant 0 : i32
    %c0_i32_1 = arith.constant 0 : i32
    return %c0_i32, %c0_i32_0 : i32, i32
  }
  func.func @transform_7(%arg0: i32) -> (i32, i32) {
    %c0_i32 = arith.constant 0 : i32
    %c0_i32_0 = arith.constant 0 : i32
    %c0_i32_1 = arith.constant 0 : i32
    return %c0_i32, %c0_i32_0 : i32, i32
  }
  func.func @transform_8(%arg0: i32) -> (i32, i32) {
    %c0_i32 = arith.constant 0 : i32
    %c0_i32_0 = arith.constant 0 : i32
    %c0_i32_1 = arith.constant 0 : i32
    return %c0_i32, %c0_i32_0 : i32, i32
  }
  func.func @transform_9(%arg0: i32) -> (i32, i32) {
    %c0_i32 = arith.constant 0 : i32
    %c0_i32_0 = arith.constant 0 : i32
    %c0_i32_1 = arith.constant 0 : i32
    return %c0_i32, %c0_i32_0 : i32, i32
  }
  func.func @transform_10(%arg0: i32) -> (i32, i32) {
    %c0_i32 = arith.constant 0 : i32
    %c0_i32_0 = arith.constant 0 : i32
    %c0_i32_1 = arith.constant 0 : i32
    return %c0_i32, %c0_i32_0 : i32, i32
  }
  func.func @transform_11(%arg0: i32) -> (i32, i32) {
    %c0_i32 = arith.constant 0 : i32
    %c0_i32_0 = arith.constant 0 : i32
    %c0_i32_1 = arith.constant 0 : i32
    return %c0_i32, %c0_i32_0 : i32, i32
  }
  func.func @transform_12(%arg0: i32) -> (i32, i32) {
    %c0_i32 = arith.constant 0 : i32
    %c0_i32_0 = arith.constant 0 : i32
    %c0_i32_1 = arith.constant 0 : i32
    return %c0_i32, %c0_i32_0 : i32, i32
  }
}

</mosaic_0001>

<llo_original>
// kernel: lstm_forward.1
$region0: #{lstm_forward.1}
  #allocation0 [shape = 'u32[]', space=smem, size = 0x4, offset = 0x4, fixed_abs, tag = 'smem constant byte address 0x4 - core index']
  #allocation1 [shape = 'u32[144,128]{1,0:T(1,128)}', space=vmem, size = 0x12000, scoped, tag = 'internal scratch']
  #allocation2 [shape = 'f32[5,8,256]{2,1,0:T(8,128)}', space=vmem, size = 0xa000, scoped, tag = 'scratch operand']
  #allocation3 [shape = 'f32[1,1]{1,0:T(1,128)S(1)}', space=vmem, size = 0x200, scoped, tag = 'scoped memory for lstm_forward.1']
  %s0 = inlined_call_operand.vmem [shape: f32[5,8,256], index: 0, kind: input, shape index: {}]
  %s1 = inlined_call_operand.hbm [shape: bf16[5,256,1024], index: 1, kind: input, shape index: {}]
  %s2 = inlined_call_operand.hbm [shape: bf16[5,256,1024], index: 2, kind: input, shape index: {}]
  %s3 = inlined_call_operand.hbm [shape: f32[5,1,1024], index: 3, kind: input, shape index: {}]
  %s4 = inlined_call_operand.hbm [shape: bf16[1280,256], index: 4, kind: input, shape index: {}]
  %s5 = inlined_call_operand.hbm [shape: f32[1,256], index: 5, kind: input, shape index: {}]
  %s6 = inlined_call_operand.hbm [shape: bf16[256,128], index: 6, kind: input, shape index: {}]
  %s7 = inlined_call_operand.hbm [shape: f32[1,128], index: 7, kind: input, shape index: {}]
  %s8 = inlined_call_operand.vmem [shape: bf16[128,64], index: 8, kind: input, shape index: {}]
  %s9 = inlined_call_operand.hbm [shape: f32[1,64], index: 9, kind: input, shape index: {}]
  %s10 = inlined_call_operand.vmem [shape: bf16[64,1], index: 10, kind: input, shape index: {}]
  %s11 = inlined_call_operand.<no memory space> [shape: f32[1,1], index: 11, kind: input, shape index: {}]
  %s12 = inlined_call_operand.vmem [shape: f32[8,1], index: 12, kind: output, shape index: {}]
  %s13 = sld [smem:[#allocation0]]
  $region121: #{lstm_forward.1} parent=0
    _
  %s15 = ssub.s32 1, %s13
  %s16 = scalar_select 0, %s15, %s13
  %v17 = vstv %s11
  %18 = vst [vmem:[#allocation3] sm:$0x1] %v17
  $region1: #{lstm_forward.1} parent=0
    #allocation4 [shape = 'u8[1048576]{0}', space=vmem, size = 0x100000, scoped, tag = 'input window, operand 1']
    #allocation5 [shape = 's32[2]{0}', space=sflag, size = 0x8, scoped, tag = 'scoped memory for lstm_forward.1']
    #allocation6 [shape = 'u8[1048576]{0}', space=vmem, size = 0x100000, scoped, tag = 'input window, operand 2']
    #allocation7 [shape = 's32[2]{0}', space=sflag, size = 0x8, scoped, tag = 'scoped memory for lstm_forward.1']
    #allocation8 [shape = 'u8[8192]{0}', space=vmem, size = 0x2000, scoped, tag = 'input window, operand 3']
    #allocation9 [shape = 'u8[655360]{0}', space=vmem, size = 0xa0000, scoped, tag = 'input window, operand 4, single buffered']
    #allocation10 [shape = 's32[1]{0}', space=sflag, size = 0x4, scoped, tag = 'scoped memory for lstm_forward.1']
    #allocation11 [shape = 'u8[1024]{0}', space=vmem, size = 0x400, scoped, tag = 'input window, operand 5, single buffered']
    #allocation12 [shape = 'u8[65536]{0}', space=vmem, size = 0x10000, scoped, tag = 'input window, operand 6, single buffered']
    #allocation13 [shape = 's32[1]{0}', space=sflag, size = 0x4, scoped, tag = 'scoped memory for lstm_forward.1']
    #allocation14 [shape = 'u8[512]{0}', space=vmem, size = 0x400, scoped, tag = 'input window, operand 7, single buffered']
    #allocation15 [shape = 'u8[512]{0}', space=vmem, size = 0x400, scoped, tag = 'input window, operand 9, single buffered']
    #allocation16 [shape = 's32[1]{0}', space=sflag, size = 0x4, scoped, tag = 'scoped memory for lstm_forward.1']
    %19 = vsyncpa [#allocation5], 0
    %s20 = scalar_lea.sflag [#allocation5], 1
    %21 = vsyncpa %s20, 0
    %22 = vsyncpa [#allocation7], 0
    %s23 = scalar_lea.sflag [#allocation7], 1
    %24 = vsyncpa %s23, 0
    %25 = vsyncpa [#allocation10], 0
    %26 = vsyncpa [#allocation13], 0
    %27 = vsyncpa [#allocation16], 0
    loop: start=0, step=1, limit=7
    $region2: #{lstm_forward.1} parent=1 // loop_pre_header
      _
    $region3: #{lstm_forward.1} parent=1 // loop_header
      %s29 = sphi 0, %s33
      %p30 = scmp.ge.s32.totalorder %s29, 7
      %s37 = sphi 0, %s37
      %s39 = sphi 0, %s37
      %s40 = sphi 0, %s39
      %s54 = sphi 0, %s40
      %s60 = sphi 0, %s62
      %s63 = sphi 0, %s60
      %s64 = sphi 0, %s63
      %s80 = sphi 0, %s64
      %s86 = sphi 0, %s88
      %s89 = sphi 0, %s86
      %s90 = sphi 0, %s89
      %s106 = sphi 0, %s90
      %s112 = sphi 0, %s114
      %s115 = sphi 0, %s112
      %s116 = sphi 0, %s115
      %s132 = sphi 0, %s116
      %s136 = sphi 0, %s136
      %s138 = sphi 0, %s136
      %s139 = sphi 0, %s138
      %s153 = sphi 0, %s139
      %s157 = sphi 0, %s157
      %s159 = sphi 0, %s157
      %s160 = sphi 0, %s159
      %s174 = sphi 0, %s160
      %s178 = sphi 0, %s178
      %s180 = sphi 0, %s178
      %s181 = sphi 0, %s180
      %s195 = sphi 0, %s181
      %s199 = sphi 0, %s199
      %s201 = sphi 0, %s199
      %s202 = sphi 0, %s201
      %s216 = sphi 0, %s202
      %s220 = sphi 0, %s220
      %s222 = sphi 0, %s220
      %s223 = sphi 0, %s222
      %s237 = sphi 0, %s223
      %s241 = sphi 0, %s241
      %s243 = sphi 0, %s241
      %s244 = sphi 0, %s243
      %s258 = sphi 0, %s244
      %s262 = sphi 0, %s262
      %s264 = sphi 0, %s262
      %s265 = sphi 0, %s264
      %s279 = sphi 0, %s265
      %s283 = sphi 0, %s283
      %s285 = sphi 0, %s283
      %s286 = sphi 0, %s285
      %s300 = sphi 0, %s286
      %s304 = sphi 0, %s304
      %s306 = sphi 0, %s304
      %s307 = sphi 0, %s306
      %s321 = sphi 0, %s307
    $region4: #{lstm_forward.1} parent=1 // loop_header_branch
      %32 = sbr.rel (%p30) target = $region8
    $region5: #{lstm_forward.1} parent=1 // loop_body
      %s34 = ssub.s32 %s29, 1
      %s35 = ssub.s32 %s29, 2
      %s36 = sadd.s32 %s29, 1
      %s38 = sadd.s32 %s37, 1
      %p41 = scmp.eq.s32.totalorder %s29, 4
      %p42 = scmp.ne.s32.totalorder %s37, %s39
      %p43 = scmp.eq.s32.totalorder %s29, 0
      %p44 = por %p42, %p43
      %p45 = scmp.ne.s32.totalorder %s37, %s39
      %p46 = scmp.eq.s32.totalorder %s34, 4
      %p47 = por %p45, %p46
      %p48 = scmp.ne.s32.totalorder %s39, %s40
      %p49 = scmp.eq.s32.totalorder %s34, 0
      %p50 = por %p48, %p49
      %p51 = scmp.ne.s32.totalorder %s39, %s40
      %p52 = scmp.eq.s32.totalorder %s35, 4
      %p53 = por %p51, %p52
      %p55 = scmp.ne.s32.totalorder %s40, %s54
      %p56 = scmp.eq.s32.totalorder %s35, 0
      %p57 = por %p55, %p56
      %s58 = ssub.s32 %s29, %s36
      %p59 = scmp.eq.s32.totalorder %s58, 0
      %s61 = sadd.s32 %s60, 1
      %s62 = scalar_select %p59, %s60, %s61
      %p65 = pneg %p59
      %p66 = scmp.eq.s32.totalorder %s29, 4
      %p67 = por %p65, %p66
      %p68 = scmp.ne.s32.totalorder %s60, %s63
      %p69 = scmp.eq.s32.totalorder %s29, 0
      %p70 = por %p68, %p69
      %p71 = scmp.ne.s32.totalorder %s60, %s63
      %p72 = scmp.eq.s32.totalorder %s34, 4
      %p73 = por %p71, %p72
      %p74 = scmp.ne.s32.totalorder %s63, %s64
      %p75 = scmp.eq.s32.totalorder %s34, 0
      %p76 = por %p74, %p75
      %p77 = scmp.ne.s32.totalorder %s63, %s64
      %p78 = scmp.eq.s32.totalorder %s35, 4
      %p79 = por %p77, %p78
      %p81 = scmp.ne.s32.totalorder %s64, %s80
      %p82 = scmp.eq.s32.totalorder %s35, 0
      %p83 = por %p81, %p82
      %s84 = ssub.s32 %s29, %s36
      %p85 = scmp.eq.s32.totalorder %s84, 0
      %s87 = sadd.s32 %s86, 1
      %s88 = scalar_select %p85, %s86, %s87
      %p91 = pneg %p85
      %p92 = scmp.eq.s32.totalorder %s29, 4
      %p93 = por %p91, %p92
      %p94 = scmp.ne.s32.totalorder %s86, %s89
      %p95 = scmp.eq.s32.totalorder %s29, 0
      %p96 = por %p94, %p95
      %p97 = scmp.ne.s32.totalorder %s86, %s89
      %p98 = scmp.eq.s32.totalorder %s34, 4
      %p99 = por %p97, %p98
      %p100 = scmp.ne.s32.totalorder %s89, %s90
      %p101 = scmp.eq.s32.totalorder %s34, 0
      %p102 = por %p100, %p101
      %p103 = scmp.ne.s32.totalorder %s89, %s90
      %p104 = scmp.eq.s32.totalorder %s35, 4
      %p105 = por %p103, %p104
      %p107 = scmp.ne.s32.totalorder %s90, %s106
      %p108 = scmp.eq.s32.totalorder %s35, 0
      %p109 = por %p107, %p108
      %s110 = ssub.s32 %s29, %s36
      %p111 = scmp.eq.s32.totalorder %s110, 0
      %s113 = sadd.s32 %s112, 1
      %s114 = scalar_select %p111, %s112, %s113
      %p117 = pneg %p111
      %p118 = scmp.eq.s32.totalorder %s29, 4
      %p119 = por %p117, %p118
      %p120 = scmp.ne.s32.totalorder %s112, %s115
      %p121 = scmp.eq.s32.totalorder %s29, 0
      %p122 = por %p120, %p121
      %p123 = scmp.ne.s32.totalorder %s112, %s115
      %p124 = scmp.eq.s32.totalorder %s34, 4
      %p125 = por %p123, %p124
      %p126 = scmp.ne.s32.totalorder %s115, %s116
      %p127 = scmp.eq.s32.totalorder %s34, 0
      %p128 = por %p126, %p127
      %p129 = scmp.ne.s32.totalorder %s115, %s116
      %p130 = scmp.eq.s32.totalorder %s35, 4
      %p131 = por %p129, %p130
      %p133 = scmp.ne.s32.totalorder %s116, %s132
      %p134 = scmp.eq.s32.totalorder %s35, 0
      %p135 = por %p133, %p134
      %s137 = sadd.s32 %s136, 1
      %p140 = scmp.eq.s32.totalorder %s29, 4
      %p141 = scmp.ne.s32.totalorder %s136, %s138
      %p142 = scmp.eq.s32.totalorder %s29, 0
      %p143 = por %p141, %p142
      %p144 = scmp.ne.s32.totalorder %s136, %s138
      %p145 = scmp.eq.s32.totalorder %s34, 4
      %p146 = por %p144, %p145
      %p147 = scmp.ne.s32.totalorder %s138, %s139
      %p148 = scmp.eq.s32.totalorder %s34, 0
      %p149 = por %p147, %p148
      %p150 = scmp.ne.s32.totalorder %s138, %s139
      %p151 = scmp.eq.s32.totalorder %s35, 4
      %p152 = por %p150, %p151
      %p154 = scmp.ne.s32.totalorder %s139, %s153
      %p155 = scmp.eq.s32.totalorder %s35, 0
      %p156 = por %p154, %p155
      %s158 = sadd.s32 %s157, 1
      %p161 = scmp.eq.s32.totalorder %s29, 4
      %p162 = scmp.ne.s32.totalorder %s157, %s159
      %p163 = scmp.eq.s32.totalorder %s29, 0
      %p164 = por %p162, %p163
      %p165 = scmp.ne.s32.totalorder %s157, %s159
      %p166 = scmp.eq.s32.totalorder %s34, 4
      %p167 = por %p165, %p166
      %p168 = scmp.ne.s32.totalorder %s159, %s160
      %p169 = scmp.eq.s32.totalorder %s34, 0
      %p170 = por %p168, %p169
      %p171 = scmp.ne.s32.totalorder %s159, %s160
      %p172 = scmp.eq.s32.totalorder %s35, 4
      %p173 = por %p171, %p172
      %p175 = scmp.ne.s32.totalorder %s160, %s174
      %p176 = scmp.eq.s32.totalorder %s35, 0
      %p177 = por %p175, %p176
      %s179 = sadd.s32 %s178, 1
      %p182 = scmp.eq.s32.totalorder %s29, 4
      %p183 = scmp.ne.s32.totalorder %s178, %s180
      %p184 = scmp.eq.s32.totalorder %s29, 0
      %p185 = por %p183, %p184
      %p186 = scmp.ne.s32.totalorder %s178, %s180
      %p187 = scmp.eq.s32.totalorder %s34, 4
      %p188 = por %p186, %p187
      %p189 = scmp.ne.s32.totalorder %s180, %s181
      %p190 = scmp.eq.s32.totalorder %s34, 0
      %p191 = por %p189, %p190
      %p192 = scmp.ne.s32.totalorder %s180, %s181
      %p193 = scmp.eq.s32.totalorder %s35, 4
      %p194 = por %p192, %p193
      %p196 = scmp.ne.s32.totalorder %s181, %s195
      %p197 = scmp.eq.s32.totalorder %s35, 0
      %p198 = por %p196, %p197
      %s200 = sadd.s32 %s199, 1
      %p203 = scmp.eq.s32.totalorder %s29, 4
      %p204 = scmp.ne.s32.totalorder %s199, %s201
      %p205 = scmp.eq.s32.totalorder %s29, 0
      %p206 = por %p204, %p205
      %p207 = scmp.ne.s32.totalorder %s199, %s201
      %p208 = scmp.eq.s32.totalorder %s34, 4
      %p209 = por %p207, %p208
      %p210 = scmp.ne.s32.totalorder %s201, %s202
      %p211 = scmp.eq.s32.totalorder %s34, 0
      %p212 = por %p210, %p211
      %p213 = scmp.ne.s32.totalorder %s201, %s202
      %p214 = scmp.eq.s32.totalorder %s35, 4
      %p215 = por %p213, %p214
      %p217 = scmp.ne.s32.totalorder %s202, %s216
      %p218 = scmp.eq.s32.totalorder %s35, 0
      %p219 = por %p217, %p218
      %s221 = sadd.s32 %s220, 1
      %p224 = scmp.eq.s32.totalorder %s29, 4
      %p225 = scmp.ne.s32.totalorder %s220, %s222
      %p226 = scmp.eq.s32.totalorder %s29, 0
      %p227 = por %p225, %p226
      %p228 = scmp.ne.s32.totalorder %s220, %s222
      %p229 = scmp.eq.s32.totalorder %s34, 4
      %p230 = por %p228, %p229
      %p231 = scmp.ne.s32.totalorder %s222, %s223
      %p232 = scmp.eq.s32.totalorder %s34, 0
      %p233 = por %p231, %p232
      %p234 = scmp.ne.s32.totalorder %s222, %s223
      %p235 = scmp.eq.s32.totalorder %s35, 4
      %p236 = por %p234, %p235
      %p238 = scmp.ne.s32.totalorder %s223, %s237
      %p239 = scmp.eq.s32.totalorder %s35, 0
      %p240 = por %p238, %p239
      %s242 = sadd.s32 %s241, 1
      %p245 = scmp.eq.s32.totalorder %s29, 4
      %p246 = scmp.ne.s32.totalorder %s241, %s243
      %p247 = scmp.eq.s32.totalorder %s29, 0
      %p248 = por %p246, %p247
      %p249 = scmp.ne.s32.totalorder %s241, %s243
      %p250 = scmp.eq.s32.totalorder %s34, 4
      %p251 = por %p249, %p250
      %p252 = scmp.ne.s32.totalorder %s243, %s244
      %p253 = scmp.eq.s32.totalorder %s34, 0
      %p254 = por %p252, %p253
      %p255 = scmp.ne.s32.totalorder %s243, %s244
      %p256 = scmp.eq.s32.totalorder %s35, 4
      %p257 = por %p255, %p256
      %p259 = scmp.ne.s32.totalorder %s244, %s258
      %p260 = scmp.eq.s32.totalorder %s35, 0
      %p261 = por %p259, %p260
      %s263 = sadd.s32 %s262, 1
      %p266 = scmp.eq.s32.totalorder %s29, 4
      %p267 = scmp.ne.s32.totalorder %s262, %s264
      %p268 = scmp.eq.s32.totalorder %s29, 0
      %p269 = por %p267, %p268
      %p270 = scmp.ne.s32.totalorder %s262, %s264
      %p271 = scmp.eq.s32.totalorder %s34, 4
      %p272 = por %p270, %p271
      %p273 = scmp.ne.s32.totalorder %s264, %s265
      %p274 = scmp.eq.s32.totalorder %s34, 0
      %p275 = por %p273, %p274
      %p276 = scmp.ne.s32.totalorder %s264, %s265
      %p277 = scmp.eq.s32.totalorder %s35, 4
      %p278 = por %p276, %p277
      %p280 = scmp.ne.s32.totalorder %s265, %s279
      %p281 = scmp.eq.s32.totalorder %s35, 0
      %p282 = por %p280, %p281
      %s284 = sadd.s32 %s283, 1
      %p287 = scmp.eq.s32.totalorder %s29, 4
      %p288 = scmp.ne.s32.totalorder %s283, %s285
      %p289 = scmp.eq.s32.totalorder %s29, 0
      %p290 = por %p288, %p289
      %p291 = scmp.ne.s32.totalorder %s283, %s285
      %p292 = scmp.eq.s32.totalorder %s34, 4
      %p293 = por %p291, %p292
      %p294 = scmp.ne.s32.totalorder %s285, %s286
      %p295 = scmp.eq.s32.totalorder %s34, 0
      %p296 = por %p294, %p295
      %p297 = scmp.ne.s32.totalorder %s285, %s286
      %p298 = scmp.eq.s32.totalorder %s35, 4
      %p299 = por %p297, %p298
      %p301 = scmp.ne.s32.totalorder %s286, %s300
      %p302 = scmp.eq.s32.totalorder %s35, 0
      %p303 = por %p301, %p302
      %s305 = sadd.s32 %s304, 1
      %p308 = scmp.eq.s32.totalorder %s29, 4
      %p309 = scmp.ne.s32.totalorder %s304, %s306
      %p310 = scmp.eq.s32.totalorder %s29, 0
      %p311 = por %p309, %p310
      %p312 = scmp.ne.s32.totalorder %s304, %s306
      %p313 = scmp.eq.s32.totalorder %s34, 4
      %p314 = por %p312, %p313
      %p315 = scmp.ne.s32.totalorder %s306, %s307
      %p316 = scmp.eq.s32.totalorder %s34, 0
      %p317 = por %p315, %p316
      %p318 = scmp.ne.s32.totalorder %s306, %s307
      %p319 = scmp.eq.s32.totalorder %s35, 4
      %p320 = por %p318, %p319
      %p322 = scmp.ne.s32.totalorder %s307, %s321
      %p323 = scmp.eq.s32.totalorder %s35, 0
      %p324 = por %p322, %p323
      %p325 = scmp.le.s32.totalorder 1, %s29
      %p326 = scmp.lt.s32.totalorder %s29, 6
      %p327 = pnand %p325, %p326
      %p328 = pneg %p327
      // Predicated region
      $region9: #{lstm_forward.1} parent=5 // pred_check
        _
      $region10: #{lstm_forward.1} parent=5 // pred_check_branch
        %330 = sbr.rel (%p327) target = $region12
      $region11: #{lstm_forward.1} parent=5 // pred_region
        %s331 = ssub.s32 %s29, 1
        // Predicated region
        $region13: #{lstm_forward.1} parent=11 // pred_check
          %p332 = pneg %p50
        $region14: #{lstm_forward.1} parent=11 // pred_check_branch
          %334 = sbr.rel (%p332) target = $region16
        $region15: #{lstm_forward.1} parent=11 // pred_region
          _
        $region16: #{lstm_forward.1} parent=11 // pred_fallthru
          _
        // Predicated region
        $region17: #{lstm_forward.1} parent=11 // pred_check
          %p335 = pneg %p149
        $region18: #{lstm_forward.1} parent=11 // pred_check_branch
          %337 = sbr.rel (%p335) target = $region20
        $region19: #{lstm_forward.1} parent=11 // pred_region
          %s339 = ssub.s32 20480, 20480
          %340 = vsyncadd [#allocation10], %s339
          %s341 = sshll.u32 [#allocation9], 4
          %s342 = int_to_ptr.vmem [resolvable:$true] %s341
          %347 = dma.hbm_to_vmem [thread:$0]  %s4, 20480, %s342, [#allocation10], 128, 128, 8
        $region20: #{lstm_forward.1} parent=11 // pred_fallthru
          _
        // Predicated region
        $region21: #{lstm_forward.1} parent=11 // pred_check
          %p348 = pneg %p170
        $region22: #{lstm_forward.1} parent=11 // pred_check_branch
          %350 = sbr.rel (%p348) target = $region24
        $region23: #{lstm_forward.1} parent=11 // pred_region
          %s352 = ssub.s32 32, 32
          %353 = vsyncadd [#allocation10], %s352
          %s355 = sshll.u32 [#allocation11], 4
          %s356 = int_to_ptr.vmem [resolvable:$true] %s355
          %358 = dma.hbm_to_vmem [thread:$0]  %s5, 32, %s356, [#allocation10]
        $region24: #{lstm_forward.1} parent=11 // pred_fallthru
          _
        // Predicated region
        $region25: #{lstm_forward.1} parent=11 // pred_check
          %p359 = pneg %p191
        $region26: #{lstm_forward.1} parent=11 // pred_check_branch
          %361 = sbr.rel (%p359) target = $region28
        $region27: #{lstm_forward.1} parent=11 // pred_region
          %s363 = ssub.s32 2048, 2048
          %364 = vsyncadd [#allocation13], %s363
          %s365 = sshll.u32 [#allocation12], 4
          %s366 = int_to_ptr.vmem [resolvable:$true] %s365
          %371 = dma.hbm_to_vmem [thread:$0]  %s6, 2048, %s366, [#allocation13], 64, 64, 4
        $region28: #{lstm_forward.1} parent=11 // pred_fallthru
          _
        // Predicated region
        $region29: #{lstm_forward.1} parent=11 // pred_check
          %p372 = pneg %p212
        $region30: #{lstm_forward.1} parent=11 // pred_check_branch
          %374 = sbr.rel (%p372) target = $region32
        $region31: #{lstm_forward.1} parent=11 // pred_region
          %s376 = ssub.s32 16, 16
          %377 = vsyncadd [#allocation13], %s376
          %s379 = sshll.u32 [#allocation14], 4
          %s380 = int_to_ptr.vmem [resolvable:$true] %s379
          %382 = dma.hbm_to_vmem [thread:$0]  %s7, 16, %s380, [#allocation13]
        $region32: #{lstm_forward.1} parent=11 // pred_fallthru
          _
        // Predicated region
        $region33: #{lstm_forward.1} parent=11 // pred_check
          %p383 = pneg %p233
        $region34: #{lstm_forward.1} parent=11 // pred_check_branch
          %385 = sbr.rel (%p383) target = $region36
        $region35: #{lstm_forward.1} parent=11 // pred_region
          _
        $region36: #{lstm_forward.1} parent=11 // pred_fallthru
          _
        // Predicated region
        $region37: #{lstm_forward.1} parent=11 // pred_check
          %p386 = pneg %p254
        $region38: #{lstm_forward.1} parent=11 // pred_check_branch
          %388 = sbr.rel (%p386) target = $region40
        $region39: #{lstm_forward.1} parent=11 // pred_region
          %s390 = ssub.s32 16, 16
          %391 = vsyncadd [#allocation16], %s390
          %s393 = sshll.u32 [#allocation15], 4
          %s394 = int_to_ptr.vmem [resolvable:$true] %s393
          %396 = dma.hbm_to_vmem [thread:$0]  %s9, 16, %s394, [#allocation16]
        $region40: #{lstm_forward.1} parent=11 // pred_fallthru
          _
        // Predicated region
        $region41: #{lstm_forward.1} parent=11 // pred_check
          %p397 = pneg %p275
        $region42: #{lstm_forward.1} parent=11 // pred_check_branch
          %399 = sbr.rel (%p397) target = $region44
        $region43: #{lstm_forward.1} parent=11 // pred_region
          _
        $region44: #{lstm_forward.1} parent=11 // pred_fallthru
          _
        // Predicated region
        $region45: #{lstm_forward.1} parent=11 // pred_check
          %p400 = pneg %p296
        $region46: #{lstm_forward.1} parent=11 // pred_check_branch
          %402 = sbr.rel (%p400) target = $region48
        $region47: #{lstm_forward.1} parent=11 // pred_region
          _
        $region48: #{lstm_forward.1} parent=11 // pred_fallthru
          _
      $region12: #{lstm_forward.1} parent=5 // pred_fallthru
        _
      %p403 = scmp.lt.s32.totalorder %s29, 5
      // Predicated region
      $region49: #{lstm_forward.1} parent=5 // pred_check
        %p404 = pneg %p403
      $region50: #{lstm_forward.1} parent=5 // pred_check_branch
        %406 = sbr.rel (%p404) target = $region52
      $region51: #{lstm_forward.1} parent=5 // pred_region
        // Predicated region
        $region53: #{lstm_forward.1} parent=51 // pred_check
          %p407 = pneg %p70
        $region54: #{lstm_forward.1} parent=51 // pred_check_branch
          %409 = sbr.rel (%p407) target = $region56
        $region55: #{lstm_forward.1} parent=51 // pred_region
          %s410 = sand.u32 %s60, 1
          %s411 = scalar_lea.sflag [#allocation5], %s410
          %s412 = sand.u32 %s60, 1
          %s413 = smul.addr %s412, 1024
          %s414 = scalar_lea.vmem [#allocation4], %s413
          %s416 = ssub.s32 16384, 16384
          %417 = vsyncadd %s411, %s416
          %s418 = smul.addr %s29, 256
          %s419 = smul.addr %s418, 64
          %s420 = scalar_lea.hbm %s1, %s419
          %s421 = sshll.u32 %s414, 4
          %s422 = int_to_ptr.vmem [resolvable:$true] %s421
          %427 = dma.hbm_to_vmem [thread:$0]  %s420, 16384, %s422, %s411, 512, 512, 32
        $region56: #{lstm_forward.1} parent=51 // pred_fallthru
          _
        // Predicated region
        $region57: #{lstm_forward.1} parent=51 // pred_check
          %p428 = pneg %p96
        $region58: #{lstm_forward.1} parent=51 // pred_check_branch
          %430 = sbr.rel (%p428) target = $region60
        $region59: #{lstm_forward.1} parent=51 // pred_region
          %s431 = sand.u32 %s29, 1
          %s432 = scalar_lea.sflag [#allocation7], %s431
          %s433 = sand.u32 %s86, 1
          %s434 = smul.addr %s433, 1024
          %s435 = scalar_lea.vmem [#allocation6], %s434
          %s437 = ssub.s32 16384, 16384
          %438 = vsyncadd %s432, %s437
          %s439 = smul.addr %s29, 256
          %s440 = smul.addr %s439, 64
          %s441 = scalar_lea.hbm %s2, %s440
          %s442 = sshll.u32 %s435, 4
          %s443 = int_to_ptr.vmem [resolvable:$true] %s442
          %448 = dma.hbm_to_vmem [thread:$0]  %s441, 16384, %s443, %s432, 512, 512, 32
        $region60: #{lstm_forward.1} parent=51 // pred_fallthru
          _
        // Predicated region
        $region61: #{lstm_forward.1} parent=51 // pred_check
          %p449 = pneg %p122
        $region62: #{lstm_forward.1} parent=51 // pred_check_branch
          %451 = sbr.rel (%p449) target = $region64
        $region63: #{lstm_forward.1} parent=51 // pred_region
          %s452 = sand.u32 %s29, 1
          %s453 = scalar_lea.sflag [#allocation7], %s452
          %s454 = sand.u32 %s112, 1
          %s455 = smul.addr %s454, 8
          %s456 = scalar_lea.vmem [#allocation8], %s455
          %s458 = ssub.s32 128, 128
          %459 = vsyncadd %s453, %s458
          %s460 = smul.addr %s29, 8
          %s461 = smul.addr %s460, 16
          %s462 = scalar_lea.hbm %s3, %s461
          %s464 = sshll.u32 %s456, 4
          %s465 = int_to_ptr.vmem [resolvable:$true] %s464
          %467 = dma.hbm_to_vmem [thread:$0]  %s462, 128, %s465, %s453
        $region64: #{lstm_forward.1} parent=51 // pred_fallthru
          _
      $region52: #{lstm_forward.1} parent=5 // pred_fallthru
        _
      %p468 = scmp.le.s32.totalorder 1, %s29
      %p469 = scmp.lt.s32.totalorder %s29, 6
      %p470 = pnand %p468, %p469
      %p471 = pneg %p470
      // Predicated region
      $region65: #{lstm_forward.1} parent=5 // pred_check
        _
      $region66: #{lstm_forward.1} parent=5 // pred_check_branch
        %473 = sbr.rel (%p470) target = $region68
      $region67: #{lstm_forward.1} parent=5 // pred_region
        %s474 = ssub.s32 %s29, 1
        %s475 = sand.u32 %s63, 1
        %s476 = scalar_lea.sflag [#allocation5], %s475
        %s477 = sand.u32 %s63, 1
        %s478 = smul.addr %s477, 1024
        %s479 = scalar_lea.vmem [#allocation4], %s478
        // Predicated region
        $region69: #{lstm_forward.1} parent=67 // pred_check
          %p480 = pneg %p76
        $region70: #{lstm_forward.1} parent=67 // pred_check_branch
          %482 = sbr.rel (%p480) target = $region72
        $region71: #{lstm_forward.1} parent=67 // pred_region
          %483 = dma.done %s476, 16384
        $region72: #{lstm_forward.1} parent=67 // pred_fallthru
          _
        %s484 = sand.u32 %s34, 1
        %s485 = scalar_lea.sflag [#allocation7], %s484
        %s486 = sand.u32 %s89, 1
        %s487 = smul.addr %s486, 1024
        %s488 = scalar_lea.vmem [#allocation6], %s487
        // Predicated region
        $region73: #{lstm_forward.1} parent=67 // pred_check
          %p489 = pneg %p102
        $region74: #{lstm_forward.1} parent=67 // pred_check_branch
          %491 = sbr.rel (%p489) target = $region76
        $region75: #{lstm_forward.1} parent=67 // pred_region
          %492 = dma.done %s485, 16384
        $region76: #{lstm_forward.1} parent=67 // pred_fallthru
          _
        %s493 = sand.u32 %s34, 1
        %s494 = scalar_lea.sflag [#allocation7], %s493
        %s495 = sand.u32 %s115, 1
        %s496 = smul.addr %s495, 8
        %s497 = scalar_lea.vmem [#allocation8], %s496
        // Predicated region
        $region77: #{lstm_forward.1} parent=67 // pred_check
          %p498 = pneg %p128
        $region78: #{lstm_forward.1} parent=67 // pred_check_branch
          %500 = sbr.rel (%p498) target = $region80
        $region79: #{lstm_forward.1} parent=67 // pred_region
          %501 = dma.done %s494, 128
        $region80: #{lstm_forward.1} parent=67 // pred_fallthru
          _
        // Predicated region
        $region81: #{lstm_forward.1} parent=67 // pred_check
          %p502 = pneg %p149
        $region82: #{lstm_forward.1} parent=67 // pred_check_branch
          %504 = sbr.rel (%p502) target = $region84
        $region83: #{lstm_forward.1} parent=67 // pred_region
          %505 = dma.done [#allocation10], 20480
        $region84: #{lstm_forward.1} parent=67 // pred_fallthru
          _
        // Predicated region
        $region85: #{lstm_forward.1} parent=67 // pred_check
          %p506 = pneg %p170
        $region86: #{lstm_forward.1} parent=67 // pred_check_branch
          %508 = sbr.rel (%p506) target = $region88
        $region87: #{lstm_forward.1} parent=67 // pred_region
          %509 = dma.done [#allocation10], 32
        $region88: #{lstm_forward.1} parent=67 // pred_fallthru
          _
        // Predicated region
        $region89: #{lstm_forward.1} parent=67 // pred_check
          %p510 = pneg %p191
        $region90: #{lstm_forward.1} parent=67 // pred_check_branch
          %512 = sbr.rel (%p510) target = $region92
        $region91: #{lstm_forward.1} parent=67 // pred_region
          %513 = dma.done [#allocation13], 2048
        $region92: #{lstm_forward.1} parent=67 // pred_fallthru
          _
        // Predicated region
        $region93: #{lstm_forward.1} parent=67 // pred_check
          %p514 = pneg %p212
        $region94: #{lstm_forward.1} parent=67 // pred_check_branch
          %516 = sbr.rel (%p514) target = $region96
        $region95: #{lstm_forward.1} parent=67 // pred_region
          %517 = dma.done [#allocation13], 16
        $region96: #{lstm_forward.1} parent=67 // pred_fallthru
          _
        // Predicated region
        $region97: #{lstm_forward.1} parent=67 // pred_check
          %p518 = pneg %p254
        $region98: #{lstm_forward.1} parent=67 // pred_check_branch
          %520 = sbr.rel (%p518) target = $region100
        $region99: #{lstm_forward.1} parent=67 // pred_region
          %521 = dma.done [#allocation16], 16
        $region100: #{lstm_forward.1} parent=67 // pred_fallthru
          _
        %p522 = pneg %p50
        %p523 = pneg %p47
        %s524 = sand.u32 %s63, 1
        %s525 = scalar_lea.sflag [#allocation5], %s524
        %s526 = sand.u32 %s63, 1
        %s527 = smul.addr %s526, 1024
        %s528 = scalar_lea.vmem [#allocation4], %s527
        %p529 = pneg %p76
        %p530 = pneg %p73
        %s531 = sand.u32 %s34, 1
        %s532 = scalar_lea.sflag [#allocation7], %s531
        %s533 = sand.u32 %s89, 1
        %s534 = smul.addr %s533, 1024
        %s535 = scalar_lea.vmem [#allocation6], %s534
        %p536 = pneg %p102
        %p537 = pneg %p99
        %s538 = sand.u32 %s34, 1
        %s539 = scalar_lea.sflag [#allocation7], %s538
        %s540 = sand.u32 %s115, 1
        %s541 = smul.addr %s540, 8
        %s542 = scalar_lea.vmem [#allocation8], %s541
        %p543 = pneg %p128
        %p544 = pneg %p125
        %p545 = pneg %p149
        %p546 = pneg %p146
        %p547 = pneg %p170
        %p548 = pneg %p167
        %p549 = pneg %p191
        %p550 = pneg %p188
        %p551 = pneg %p212
        %p552 = pneg %p209
        %p553 = pneg %p233
        %p554 = pneg %p230
        %p555 = pneg %p254
        %p556 = pneg %p251
        %p557 = pneg %p275
        %p558 = pneg %p272
        %p559 = pneg %p296
        %p560 = pneg %p293
        %p561 = pneg %p317
        %p562 = pneg %p314
        %p564 = scmp.eq.s32.totalorder %s34, 0
        // Predicated region
        $region101: #{lstm_forward.1} parent=67 // pred_check
          %p565 = pneg %p564
        $region102: #{lstm_forward.1} parent=67 // pred_check_branch
          %567 = sbr.rel (%p565) target = $region104
        $region103: #{lstm_forward.1} parent=67 // pred_region
          %v568 = vld [vmem:[%s0] sm:$0xff]
          %v569 = vld [vmem:[%s0 + $0x8] sm:$0xff]
          %v570 = vld [vmem:[%s0 + $0x10] sm:$0xff]
          %v571 = vld [vmem:[%s0 + $0x18] sm:$0xff]
          %v572 = vld [vmem:[%s0 + $0x20] sm:$0xff]
          %v573 = vld [vmem:[%s0 + $0x28] sm:$0xff]
          %v574 = vld [vmem:[%s0 + $0x30] sm:$0xff]
          %v575 = vld [vmem:[%s0 + $0x38] sm:$0xff]
          %v576 = vld [vmem:[%s0 + $0x40] sm:$0xff]
          %v577 = vld [vmem:[%s0 + $0x48] sm:$0xff]
          %578 = vst [vmem:[#allocation2] sm:$0xff] %v568
          %579 = vst [vmem:[#allocation2 + $0x8] sm:$0xff] %v569
          %580 = vst [vmem:[#allocation2 + $0x10] sm:$0xff] %v570
          %581 = vst [vmem:[#allocation2 + $0x18] sm:$0xff] %v571
          %582 = vst [vmem:[#allocation2 + $0x20] sm:$0xff] %v572
          %583 = vst [vmem:[#allocation2 + $0x28] sm:$0xff] %v573
          %584 = vst [vmem:[#allocation2 + $0x30] sm:$0xff] %v574
          %585 = vst [vmem:[#allocation2 + $0x38] sm:$0xff] %v575
          %586 = vst [vmem:[#allocation2 + $0x40] sm:$0xff] %v576
          %587 = vst [vmem:[#allocation2 + $0x48] sm:$0xff] %v577
        $region104: #{lstm_forward.1} parent=67 // pred_fallthru
          _
        %v588 = vld [vmem:[%s479] sm:$0xff]
        %v589 = vld [vmem:[%s479 + $0x8] sm:$0xff]
        %v590 = vld [vmem:[%s479 + $0x10] sm:$0xff]
        %v591 = vld [vmem:[%s479 + $0x18] sm:$0xff]
        %v592 = vld [vmem:[%s479 + $0x20] sm:$0xff]
        %v593 = vld [vmem:[%s479 + $0x28] sm:$0xff]
        %v594 = vld [vmem:[%s479 + $0x30] sm:$0xff]
        %v595 = vld [vmem:[%s479 + $0x38] sm:$0xff]
        %v596 = vld [vmem:[%s479 + $0x40] sm:$0xff]
        %v597 = vld [vmem:[%s479 + $0x48] sm:$0xff]
        %v598 = vld [vmem:[%s479 + $0x50] sm:$0xff]
        %v599 = vld [vmem:[%s479 + $0x58] sm:$0xff]
        %v600 = vld [vmem:[%s479 + $0x60] sm:$0xff]
        %v601 = vld [vmem:[%s479 + $0x68] sm:$0xff]
        %v602 = vld [vmem:[%s479 + $0x70] sm:$0xff]
        %v603 = vld [vmem:[%s479 + $0x78] sm:$0xff]
        %v604 = vld [vmem:[%s479 + $0x80] sm:$0xff]
        %v605 = vld [vmem:[%s479 + $0x88] sm:$0xff]
        %v606 = vld [vmem:[%s479 + $0x90] sm:$0xff]
        %v607 = vld [vmem:[%s479 + $0x98] sm:$0xff]
        %v608 = vld [vmem:[%s479 + $0xa0] sm:$0xff]
        %v609 = vld [vmem:[%s479 + $0xa8] sm:$0xff]
        %v610 = vld [vmem:[%s479 + $0xb0] sm:$0xff]
        %v611 = vld [vmem:[%s479 + $0xb8] sm:$0xff]
        %v612 = vld [vmem:[%s479 + $0xc0] sm:$0xff]
        %v613 = vld [vmem:[%s479 + $0xc8] sm:$0xff]
        %v614 = vld [vmem:[%s479 + $0xd0] sm:$0xff]
        %v615 = vld [vmem:[%s479 + $0xd8] sm:$0xff]
        %v616 = vld [vmem:[%s479 + $0xe0] sm:$0xff]
        %v617 = vld [vmem:[%s479 + $0xe8] sm:$0xff]
        %v618 = vld [vmem:[%s479 + $0xf0] sm:$0xff]
        %v619 = vld [vmem:[%s479 + $0xf8] sm:$0xff]
        %v620 = vld [vmem:[%s479 + $0x100] sm:$0xff]
        %v621 = vld [vmem:[%s479 + $0x108] sm:$0xff]
        %v622 = vld [vmem:[%s479 + $0x110] sm:$0xff]
        %v623 = vld [vmem:[%s479 + $0x118] sm:$0xff]
        %v624 = vld [vmem:[%s479 + $0x120] sm:$0xff]
        %v625 = vld [vmem:[%s479 + $0x128] sm:$0xff]
        %v626 = vld [vmem:[%s479 + $0x130] sm:$0xff]
        %v627 = vld [vmem:[%s479 + $0x138] sm:$0xff]
        %v628 = vld [vmem:[%s479 + $0x140] sm:$0xff]
        %v629 = vld [vmem:[%s479 + $0x148] sm:$0xff]
        %v630 = vld [vmem:[%s479 + $0x150] sm:$0xff]
        %v631 = vld [vmem:[%s479 + $0x158] sm:$0xff]
        %v632 = vld [vmem:[%s479 + $0x160] sm:$0xff]
        %v633 = vld [vmem:[%s479 + $0x168] sm:$0xff]
        %v634 = vld [vmem:[%s479 + $0x170] sm:$0xff]
        %v635 = vld [vmem:[%s479 + $0x178] sm:$0xff]
        %v636 = vld [vmem:[%s479 + $0x180] sm:$0xff]
        %v637 = vld [vmem:[%s479 + $0x188] sm:$0xff]
        %v638 = vld [vmem:[%s479 + $0x190] sm:$0xff]
        %v639 = vld [vmem:[%s479 + $0x198] sm:$0xff]
        %v640 = vld [vmem:[%s479 + $0x1a0] sm:$0xff]
        %v641 = vld [vmem:[%s479 + $0x1a8] sm:$0xff]
        %v642 = vld [vmem:[%s479 + $0x1b0] sm:$0xff]
        %v643 = vld [vmem:[%s479 + $0x1b8] sm:$0xff]
        %v644 = vld [vmem:[%s479 + $0x1c0] sm:$0xff]
        %v645 = vld [vmem:[%s479 + $0x1c8] sm:$0xff]
        %v646 = vld [vmem:[%s479 + $0x1d0] sm:$0xff]
        %v647 = vld [vmem:[%s479 + $0x1d8] sm:$0xff]
        %v648 = vld [vmem:[%s479 + $0x1e0] sm:$0xff]
        %v649 = vld [vmem:[%s479 + $0x1e8] sm:$0xff]
        %v650 = vld [vmem:[%s479 + $0x1f0] sm:$0xff]
        %v651 = vld [vmem:[%s479 + $0x1f8] sm:$0xff]
        %v652 = vld [vmem:[%s479 + $0x200] sm:$0xff]
        %v653 = vld [vmem:[%s479 + $0x208] sm:$0xff]
        %v654 = vld [vmem:[%s479 + $0x210] sm:$0xff]
        %v655 = vld [vmem:[%s479 + $0x218] sm:$0xff]
        %v656 = vld [vmem:[%s479 + $0x220] sm:$0xff]
        %v657 = vld [vmem:[%s479 + $0x228] sm:$0xff]
        %v658 = vld [vmem:[%s479 + $0x230] sm:$0xff]
        %v659 = vld [vmem:[%s479 + $0x238] sm:$0xff]
        %v660 = vld [vmem:[%s479 + $0x240] sm:$0xff]
        %v661 = vld [vmem:[%s479 + $0x248] sm:$0xff]
        %v662 = vld [vmem:[%s479 + $0x250] sm:$0xff]
        %v663 = vld [vmem:[%s479 + $0x258] sm:$0xff]
        %v664 = vld [vmem:[%s479 + $0x260] sm:$0xff]
        %v665 = vld [vmem:[%s479 + $0x268] sm:$0xff]
        %v666 = vld [vmem:[%s479 + $0x270] sm:$0xff]
        %v667 = vld [vmem:[%s479 + $0x278] sm:$0xff]
        %v668 = vld [vmem:[%s479 + $0x280] sm:$0xff]
        %v669 = vld [vmem:[%s479 + $0x288] sm:$0xff]
        %v670 = vld [vmem:[%s479 + $0x290] sm:$0xff]
        %v671 = vld [vmem:[%s479 + $0x298] sm:$0xff]
        %v672 = vld [vmem:[%s479 + $0x2a0] sm:$0xff]
        %v673 = vld [vmem:[%s479 + $0x2a8] sm:$0xff]
        %v674 = vld [vmem:[%s479 + $0x2b0] sm:$0xff]
        %v675 = vld [vmem:[%s479 + $0x2b8] sm:$0xff]
        %v676 = vld [vmem:[%s479 + $0x2c0] sm:$0xff]
        %v677 = vld [vmem:[%s479 + $0x2c8] sm:$0xff]
        %v678 = vld [vmem:[%s479 + $0x2d0] sm:$0xff]
        %v679 = vld [vmem:[%s479 + $0x2d8] sm:$0xff]
        %v680 = vld [vmem:[%s479 + $0x2e0] sm:$0xff]
        %v681 = vld [vmem:[%s479 + $0x2e8] sm:$0xff]
        %v682 = vld [vmem:[%s479 + $0x2f0] sm:$0xff]
        %v683 = vld [vmem:[%s479 + $0x2f8] sm:$0xff]
        %v684 = vld [vmem:[%s479 + $0x300] sm:$0xff]
        %v685 = vld [vmem:[%s479 + $0x308] sm:$0xff]
        %v686 = vld [vmem:[%s479 + $0x310] sm:$0xff]
        %v687 = vld [vmem:[%s479 + $0x318] sm:$0xff]
        %v688 = vld [vmem:[%s479 + $0x320] sm:$0xff]
        %v689 = vld [vmem:[%s479 + $0x328] sm:$0xff]
        %v690 = vld [vmem:[%s479 + $0x330] sm:$0xff]
        %v691 = vld [vmem:[%s479 + $0x338] sm:$0xff]
        %v692 = vld [vmem:[%s479 + $0x340] sm:$0xff]
        %v693 = vld [vmem:[%s479 + $0x348] sm:$0xff]
        %v694 = vld [vmem:[%s479 + $0x350] sm:$0xff]
        %v695 = vld [vmem:[%s479 + $0x358] sm:$0xff]
        %v696 = vld [vmem:[%s479 + $0x360] sm:$0xff]
        %v697 = vld [vmem:[%s479 + $0x368] sm:$0xff]
        %v698 = vld [vmem:[%s479 + $0x370] sm:$0xff]
        %v699 = vld [vmem:[%s479 + $0x378] sm:$0xff]
        %v700 = vld [vmem:[%s479 + $0x380] sm:$0xff]
        %v701 = vld [vmem:[%s479 + $0x388] sm:$0xff]
        %v702 = vld [vmem:[%s479 + $0x390] sm:$0xff]
        %v703 = vld [vmem:[%s479 + $0x398] sm:$0xff]
        %v704 = vld [vmem:[%s479 + $0x3a0] sm:$0xff]
        %v705 = vld [vmem:[%s479 + $0x3a8] sm:$0xff]
        %v706 = vld [vmem:[%s479 + $0x3b0] sm:$0xff]
        %v707 = vld [vmem:[%s479 + $0x3b8] sm:$0xff]
        %v708 = vld [vmem:[%s479 + $0x3c0] sm:$0xff]
        %v709 = vld [vmem:[%s479 + $0x3c8] sm:$0xff]
        %v710 = vld [vmem:[%s479 + $0x3d0] sm:$0xff]
        %v711 = vld [vmem:[%s479 + $0x3d8] sm:$0xff]
        %v712 = vld [vmem:[%s479 + $0x3e0] sm:$0xff]
        %v713 = vld [vmem:[%s479 + $0x3e8] sm:$0xff]
        %v714 = vld [vmem:[%s479 + $0x3f0] sm:$0xff]
        %v715 = vld [vmem:[%s479 + $0x3f8] sm:$0xff]
        %v716 = vld [vmem:[%s488] sm:$0xff]
        %v717 = vld [vmem:[%s488 + $0x8] sm:$0xff]
        %v718 = vld [vmem:[%s488 + $0x10] sm:$0xff]
        %v719 = vld [vmem:[%s488 + $0x18] sm:$0xff]
        %v720 = vld [vmem:[%s488 + $0x20] sm:$0xff]
        %v721 = vld [vmem:[%s488 + $0x28] sm:$0xff]
        %v722 = vld [vmem:[%s488 + $0x30] sm:$0xff]
        %v723 = vld [vmem:[%s488 + $0x38] sm:$0xff]
        %v724 = vld [vmem:[%s488 + $0x40] sm:$0xff]
        %v725 = vld [vmem:[%s488 + $0x48] sm:$0xff]
        %v726 = vld [vmem:[%s488 + $0x50] sm:$0xff]
        %v727 = vld [vmem:[%s488 + $0x58] sm:$0xff]
        %v728 = vld [vmem:[%s488 + $0x60] sm:$0xff]
        %v729 = vld [vmem:[%s488 + $0x68] sm:$0xff]
        %v730 = vld [vmem:[%s488 + $0x70] sm:$0xff]
        %v731 = vld [vmem:[%s488 + $0x78] sm:$0xff]
        %v732 = vld [vmem:[%s488 + $0x80] sm:$0xff]
        %v733 = vld [vmem:[%s488 + $0x88] sm:$0xff]
        %v734 = vld [vmem:[%s488 + $0x90] sm:$0xff]
        %v735 = vld [vmem:[%s488 + $0x98] sm:$0xff]
        %v736 = vld [vmem:[%s488 + $0xa0] sm:$0xff]
        %v737 = vld [vmem:[%s488 + $0xa8] sm:$0xff]
        %v738 = vld [vmem:[%s488 + $0xb0] sm:$0xff]
        %v739 = vld [vmem:[%s488 + $0xb8] sm:$0xff]
        %v740 = vld [vmem:[%s488 + $0xc0] sm:$0xff]
        %v741 = vld [vmem:[%s488 + $0xc8] sm:$0xff]
        %v742 = vld [vmem:[%s488 + $0xd0] sm:$0xff]
        %v743 = vld [vmem:[%s488 + $0xd8] sm:$0xff]
        %v744 = vld [vmem:[%s488 + $0xe0] sm:$0xff]
        %v745 = vld [vmem:[%s488 + $0xe8] sm:$0xff]
        %v746 = vld [vmem:[%s488 + $0xf0] sm:$0xff]
        %v747 = vld [vmem:[%s488 + $0xf8] sm:$0xff]
        %v748 = vld [vmem:[%s488 + $0x100] sm:$0xff]
        %v749 = vld [vmem:[%s488 + $0x108] sm:$0xff]
        %v750 = vld [vmem:[%s488 + $0x110] sm:$0xff]
        %v751 = vld [vmem:[%s488 + $0x118] sm:$0xff]
        %v752 = vld [vmem:[%s488 + $0x120] sm:$0xff]
        %v753 = vld [vmem:[%s488 + $0x128] sm:$0xff]
        %v754 = vld [vmem:[%s488 + $0x130] sm:$0xff]
        %v755 = vld [vmem:[%s488 + $0x138] sm:$0xff]
        %v756 = vld [vmem:[%s488 + $0x140] sm:$0xff]
        %v757 = vld [vmem:[%s488 + $0x148] sm:$0xff]
        %v758 = vld [vmem:[%s488 + $0x150] sm:$0xff]
        %v759 = vld [vmem:[%s488 + $0x158] sm:$0xff]
        %v760 = vld [vmem:[%s488 + $0x160] sm:$0xff]
        %v761 = vld [vmem:[%s488 + $0x168] sm:$0xff]
        %v762 = vld [vmem:[%s488 + $0x170] sm:$0xff]
        %v763 = vld [vmem:[%s488 + $0x178] sm:$0xff]
        %v764 = vld [vmem:[%s488 + $0x180] sm:$0xff]
        %v765 = vld [vmem:[%s488 + $0x188] sm:$0xff]
        %v766 = vld [vmem:[%s488 + $0x190] sm:$0xff]
        %v767 = vld [vmem:[%s488 + $0x198] sm:$0xff]
        %v768 = vld [vmem:[%s488 + $0x1a0] sm:$0xff]
        %v769 = vld [vmem:[%s488 + $0x1a8] sm:$0xff]
        %v770 = vld [vmem:[%s488 + $0x1b0] sm:$0xff]
        %v771 = vld [vmem:[%s488 + $0x1b8] sm:$0xff]
        %v772 = vld [vmem:[%s488 + $0x1c0] sm:$0xff]
        %v773 = vld [vmem:[%s488 + $0x1c8] sm:$0xff]
        %v774 = vld [vmem:[%s488 + $0x1d0] sm:$0xff]
        %v775 = vld [vmem:[%s488 + $0x1d8] sm:$0xff]
        %v776 = vld [vmem:[%s488 + $0x1e0] sm:$0xff]
        %v777 = vld [vmem:[%s488 + $0x1e8] sm:$0xff]
        %v778 = vld [vmem:[%s488 + $0x1f0] sm:$0xff]
        %v779 = vld [vmem:[%s488 + $0x1f8] sm:$0xff]
        %v780 = vld [vmem:[%s488 + $0x200] sm:$0xff]
        %v781 = vld [vmem:[%s488 + $0x208] sm:$0xff]
        %v782 = vld [vmem:[%s488 + $0x210] sm:$0xff]
        %v783 = vld [vmem:[%s488 + $0x218] sm:$0xff]
        %v784 = vld [vmem:[%s488 + $0x220] sm:$0xff]
        %v785 = vld [vmem:[%s488 + $0x228] sm:$0xff]
        %v786 = vld [vmem:[%s488 + $0x230] sm:$0xff]
        %v787 = vld [vmem:[%s488 + $0x238] sm:$0xff]
        %v788 = vld [vmem:[%s488 + $0x240] sm:$0xff]
        %v789 = vld [vmem:[%s488 + $0x248] sm:$0xff]
        %v790 = vld [vmem:[%s488 + $0x250] sm:$0xff]
        %v791 = vld [vmem:[%s488 + $0x258] sm:$0xff]
        %v792 = vld [vmem:[%s488 + $0x260] sm:$0xff]
        %v793 = vld [vmem:[%s488 + $0x268] sm:$0xff]
        %v794 = vld [vmem:[%s488 + $0x270] sm:$0xff]
        %v795 = vld [vmem:[%s488 + $0x278] sm:$0xff]
        %v796 = vld [vmem:[%s488 + $0x280] sm:$0xff]
        %v797 = vld [vmem:[%s488 + $0x288] sm:$0xff]
        %v798 = vld [vmem:[%s488 + $0x290] sm:$0xff]
        %v799 = vld [vmem:[%s488 + $0x298] sm:$0xff]
        %v800 = vld [vmem:[%s488 + $0x2a0] sm:$0xff]
        %v801 = vld [vmem:[%s488 + $0x2a8] sm:$0xff]
        %v802 = vld [vmem:[%s488 + $0x2b0] sm:$0xff]
        %v803 = vld [vmem:[%s488 + $0x2b8] sm:$0xff]
        %v804 = vld [vmem:[%s488 + $0x2c0] sm:$0xff]
        %v805 = vld [vmem:[%s488 + $0x2c8] sm:$0xff]
        %v806 = vld [vmem:[%s488 + $0x2d0] sm:$0xff]
        %v807 = vld [vmem:[%s488 + $0x2d8] sm:$0xff]
        %v808 = vld [vmem:[%s488 + $0x2e0] sm:$0xff]
        %v809 = vld [vmem:[%s488 + $0x2e8] sm:$0xff]
        %v810 = vld [vmem:[%s488 + $0x2f0] sm:$0xff]
        %v811 = vld [vmem:[%s488 + $0x2f8] sm:$0xff]
        %v812 = vld [vmem:[%s488 + $0x300] sm:$0xff]
        %v813 = vld [vmem:[%s488 + $0x308] sm:$0xff]
        %v814 = vld [vmem:[%s488 + $0x310] sm:$0xff]
        %v815 = vld [vmem:[%s488 + $0x318] sm:$0xff]
        %v816 = vld [vmem:[%s488 + $0x320] sm:$0xff]
        %v817 = vld [vmem:[%s488 + $0x328] sm:$0xff]
        %v818 = vld [vmem:[%s488 + $0x330] sm:$0xff]
        %v819 = vld [vmem:[%s488 + $0x338] sm:$0xff]
        %v820 = vld [vmem:[%s488 + $0x340] sm:$0xff]
        %v821 = vld [vmem:[%s488 + $0x348] sm:$0xff]
        %v822 = vld [vmem:[%s488 + $0x350] sm:$0xff]
        %v823 = vld [vmem:[%s488 + $0x358] sm:$0xff]
        %v824 = vld [vmem:[%s488 + $0x360] sm:$0xff]
        %v825 = vld [vmem:[%s488 + $0x368] sm:$0xff]
        %v826 = vld [vmem:[%s488 + $0x370] sm:$0xff]
        %v827 = vld [vmem:[%s488 + $0x378] sm:$0xff]
        %v828 = vld [vmem:[%s488 + $0x380] sm:$0xff]
        %v829 = vld [vmem:[%s488 + $0x388] sm:$0xff]
        %v830 = vld [vmem:[%s488 + $0x390] sm:$0xff]
        %v831 = vld [vmem:[%s488 + $0x398] sm:$0xff]
        %v832 = vld [vmem:[%s488 + $0x3a0] sm:$0xff]
        %v833 = vld [vmem:[%s488 + $0x3a8] sm:$0xff]
        %v834 = vld [vmem:[%s488 + $0x3b0] sm:$0xff]
        %v835 = vld [vmem:[%s488 + $0x3b8] sm:$0xff]
        %v836 = vld [vmem:[%s488 + $0x3c0] sm:$0xff]
        %v837 = vld [vmem:[%s488 + $0x3c8] sm:$0xff]
        %v838 = vld [vmem:[%s488 + $0x3d0] sm:$0xff]
        %v839 = vld [vmem:[%s488 + $0x3d8] sm:$0xff]
        %v840 = vld [vmem:[%s488 + $0x3e0] sm:$0xff]
        %v841 = vld [vmem:[%s488 + $0x3e8] sm:$0xff]
        %v842 = vld [vmem:[%s488 + $0x3f0] sm:$0xff]
        %v843 = vld [vmem:[%s488 + $0x3f8] sm:$0xff]
        %v844 = vld [vmem:[%s497] sm:$0xff]
        %v845 = vld [vmem:[#allocation2] sm:$0xff]
        %v846 = vld [vmem:[#allocation2 + $0x8] sm:$0xff]
        %v847 = vld [vmem:[#allocation2 + $0x10] sm:$0xff]
        %v848 = vld [vmem:[#allocation2 + $0x18] sm:$0xff]
        %v849 = vld [vmem:[#allocation2 + $0x20] sm:$0xff]
        %v850 = vld [vmem:[#allocation2 + $0x28] sm:$0xff]
        %v851 = vld [vmem:[#allocation2 + $0x30] sm:$0xff]
        %v852 = vld [vmem:[#allocation2 + $0x38] sm:$0xff]
        %v853 = vld [vmem:[#allocation2 + $0x40] sm:$0xff]
        %v854 = vld [vmem:[#allocation2 + $0x48] sm:$0xff]
        %v855 = vpack.c.bf16 %v847, %v845
        %v856 = vpack.c.bf16 %v848, %v846
        %v857 = vpack.c.bf16 %v851, %v849
        %v858 = vpack.c.bf16 %v852, %v850
        %v859 = vpack.c.bf16 %v853, %v853
        %v860 = vpack.c.bf16 %v854, %v854
        %v862 = vlaneseq
        %v863 = vshrl.u32 %v862, 7
        %v864 = vsub.s32 0, %v863
        %v865 = vrot.slane %v844, %v864
        %v866 = vlaneseq
        %v867 = vshrl.u32 %v866, 7
        %v868 = vsub.s32 1, %v867
        %v869 = vrot.slane %v844, %v868
        %v870 = vlaneseq
        %v871 = vshrl.u32 %v870, 7
        %v872 = vsub.s32 2, %v871
        %v873 = vrot.slane %v844, %v872
        %v874 = vlaneseq
        %v875 = vshrl.u32 %v874, 7
        %v876 = vsub.s32 3, %v875
        %v877 = vrot.slane %v844, %v876
        %v878 = vlaneseq
        %v879 = vshrl.u32 %v878, 7
        %v880 = vsub.s32 4, %v879
        %v881 = vrot.slane %v844, %v880
        %v882 = vlaneseq
        %v883 = vshrl.u32 %v882, 7
        %v884 = vsub.s32 5, %v883
        %v885 = vrot.slane %v844, %v884
        %v886 = vlaneseq
        %v887 = vshrl.u32 %v886, 7
        %v888 = vsub.s32 6, %v887
        %v889 = vrot.slane %v844, %v888
        %v890 = vlaneseq
        %v891 = vshrl.u32 %v890, 7
        %v892 = vsub.s32 7, %v891
        %v893 = vrot.slane %v844, %v892
        %v1030 = vunpack.c.l.b16 %v588
        %v1031 = vunpack.c.h.b16 %v588
        %v1032 = vunpack.c.l.b16 %v589
        %v1033 = vunpack.c.h.b16 %v589
        %v1034 = vunpack.c.l.b16 %v590
        %v1035 = vunpack.c.h.b16 %v590
        %v1036 = vunpack.c.l.b16 %v591
        %v1037 = vunpack.c.h.b16 %v591
        %v1038 = vunpack.c.l.b16 %v592
        %v1039 = vunpack.c.h.b16 %v592
        %v1040 = vunpack.c.l.b16 %v593
        %v1041 = vunpack.c.h.b16 %v593
        %v1042 = vunpack.c.l.b16 %v594
        %v1043 = vunpack.c.h.b16 %v594
        %v1044 = vunpack.c.l.b16 %v595
        %v1045 = vunpack.c.h.b16 %v595
        %v1046 = vunpack.c.l.b16 %v596
        %v1047 = vunpack.c.h.b16 %v596
        %v1048 = vunpack.c.l.b16 %v597
        %v1049 = vunpack.c.h.b16 %v597
        %v1050 = vunpack.c.l.b16 %v598
        %v1051 = vunpack.c.h.b16 %v598
        %v1052 = vunpack.c.l.b16 %v599
        %v1053 = vunpack.c.h.b16 %v599
        %v1054 = vunpack.c.l.b16 %v600
        %v1055 = vunpack.c.h.b16 %v600
        %v1056 = vunpack.c.l.b16 %v601
        %v1057 = vunpack.c.h.b16 %v601
        %v1058 = vunpack.c.l.b16 %v602
        %v1059 = vunpack.c.h.b16 %v602
        %v1060 = vunpack.c.l.b16 %v603
        %v1061 = vunpack.c.h.b16 %v603
        %v1062 = vunpack.c.l.b16 %v604
        %v1063 = vunpack.c.h.b16 %v604
        %v1064 = vunpack.c.l.b16 %v605
        %v1065 = vunpack.c.h.b16 %v605
        %v1066 = vunpack.c.l.b16 %v606
        %v1067 = vunpack.c.h.b16 %v606
        %v1068 = vunpack.c.l.b16 %v607
        %v1069 = vunpack.c.h.b16 %v607
        %v1070 = vunpack.c.l.b16 %v608
        %v1071 = vunpack.c.h.b16 %v608
        %v1072 = vunpack.c.l.b16 %v609
        %v1073 = vunpack.c.h.b16 %v609
        %v1074 = vunpack.c.l.b16 %v610
        %v1075 = vunpack.c.h.b16 %v610
        %v1076 = vunpack.c.l.b16 %v611
        %v1077 = vunpack.c.h.b16 %v611
        %v1078 = vunpack.c.l.b16 %v612
        %v1079 = vunpack.c.h.b16 %v612
        %v1080 = vunpack.c.l.b16 %v613
        %v1081 = vunpack.c.h.b16 %v613
        %v1082 = vunpack.c.l.b16 %v614
        %v1083 = vunpack.c.h.b16 %v614
        %v1084 = vunpack.c.l.b16 %v615
        %v1085 = vunpack.c.h.b16 %v615
        %v1086 = vunpack.c.l.b16 %v616
        %v1087 = vunpack.c.h.b16 %v616
        %v1088 = vunpack.c.l.b16 %v617
        %v1089 = vunpack.c.h.b16 %v617
        %v1090 = vunpack.c.l.b16 %v618
        %v1091 = vunpack.c.h.b16 %v618
        %v1092 = vunpack.c.l.b16 %v619
        %v1093 = vunpack.c.h.b16 %v619
        %v1094 = vunpack.c.l.b16 %v620
        %v1095 = vunpack.c.h.b16 %v620
        %v1096 = vunpack.c.l.b16 %v621
        %v1097 = vunpack.c.h.b16 %v621
        %v1098 = vunpack.c.l.b16 %v622
        %v1099 = vunpack.c.h.b16 %v622
        %v1100 = vunpack.c.l.b16 %v623
        %v1101 = vunpack.c.h.b16 %v623
        %v1102 = vunpack.c.l.b16 %v624
        %v1103 = vunpack.c.h.b16 %v624
        %v1104 = vunpack.c.l.b16 %v625
        %v1105 = vunpack.c.h.b16 %v625
        %v1106 = vunpack.c.l.b16 %v626
        %v1107 = vunpack.c.h.b16 %v626
        %v1108 = vunpack.c.l.b16 %v627
        %v1109 = vunpack.c.h.b16 %v627
        %v1110 = vunpack.c.l.b16 %v628
        %v1111 = vunpack.c.h.b16 %v628
        %v1112 = vunpack.c.l.b16 %v629
        %v1113 = vunpack.c.h.b16 %v629
        %v1114 = vunpack.c.l.b16 %v630
        %v1115 = vunpack.c.h.b16 %v630
        %v1116 = vunpack.c.l.b16 %v631
        %v1117 = vunpack.c.h.b16 %v631
        %v1118 = vunpack.c.l.b16 %v632
        %v1119 = vunpack.c.h.b16 %v632
        %v1120 = vunpack.c.l.b16 %v633
        %v1121 = vunpack.c.h.b16 %v633
        %v1122 = vunpack.c.l.b16 %v634
        %v1123 = vunpack.c.h.b16 %v634
        %v1124 = vunpack.c.l.b16 %v635
        %v1125 = vunpack.c.h.b16 %v635
        %v1126 = vunpack.c.l.b16 %v636
        %v1127 = vunpack.c.h.b16 %v636
        %v1128 = vunpack.c.l.b16 %v637
        %v1129 = vunpack.c.h.b16 %v637
        %v1130 = vunpack.c.l.b16 %v638
        %v1131 = vunpack.c.h.b16 %v638
        %v1132 = vunpack.c.l.b16 %v639
        %v1133 = vunpack.c.h.b16 %v639
        %v1134 = vunpack.c.l.b16 %v640
        %v1135 = vunpack.c.h.b16 %v640
        %v1136 = vunpack.c.l.b16 %v641
        %v1137 = vunpack.c.h.b16 %v641
        %v1138 = vunpack.c.l.b16 %v642
        %v1139 = vunpack.c.h.b16 %v642
        %v1140 = vunpack.c.l.b16 %v643
        %v1141 = vunpack.c.h.b16 %v643
        %v1142 = vunpack.c.l.b16 %v644
        %v1143 = vunpack.c.h.b16 %v644
        %v1144 = vunpack.c.l.b16 %v645
        %v1145 = vunpack.c.h.b16 %v645
        %v1146 = vunpack.c.l.b16 %v646
        %v1147 = vunpack.c.h.b16 %v646
        %v1148 = vunpack.c.l.b16 %v647
        %v1149 = vunpack.c.h.b16 %v647
        %v1150 = vunpack.c.l.b16 %v648
        %v1151 = vunpack.c.h.b16 %v648
        %v1152 = vunpack.c.l.b16 %v649
        %v1153 = vunpack.c.h.b16 %v649
        %v1154 = vunpack.c.l.b16 %v650
        %v1155 = vunpack.c.h.b16 %v650
        %v1156 = vunpack.c.l.b16 %v651
        %v1157 = vunpack.c.h.b16 %v651
        %v1158 = vunpack.c.l.b16 %v652
        %v1159 = vunpack.c.h.b16 %v652
        %v1160 = vunpack.c.l.b16 %v653
        %v1161 = vunpack.c.h.b16 %v653
        %v1162 = vunpack.c.l.b16 %v654
        %v1163 = vunpack.c.h.b16 %v654
        %v1164 = vunpack.c.l.b16 %v655
        %v1165 = vunpack.c.h.b16 %v655
        %v1166 = vunpack.c.l.b16 %v656
        %v1167 = vunpack.c.h.b16 %v656
        %v1168 = vunpack.c.l.b16 %v657
        %v1169 = vunpack.c.h.b16 %v657
        %v1170 = vunpack.c.l.b16 %v658
        %v1171 = vunpack.c.h.b16 %v658
        %v1172 = vunpack.c.l.b16 %v659
        %v1173 = vunpack.c.h.b16 %v659
        %v1174 = vunpack.c.l.b16 %v660
        %v1175 = vunpack.c.h.b16 %v660
        %v1176 = vunpack.c.l.b16 %v661
        %v1177 = vunpack.c.h.b16 %v661
        %v1178 = vunpack.c.l.b16 %v662
        %v1179 = vunpack.c.h.b16 %v662
        %v1180 = vunpack.c.l.b16 %v663
        %v1181 = vunpack.c.h.b16 %v663
        %v1182 = vunpack.c.l.b16 %v664
        %v1183 = vunpack.c.h.b16 %v664
        %v1184 = vunpack.c.l.b16 %v665
        %v1185 = vunpack.c.h.b16 %v665
        %v1186 = vunpack.c.l.b16 %v666
        %v1187 = vunpack.c.h.b16 %v666
        %v1188 = vunpack.c.l.b16 %v667
        %v1189 = vunpack.c.h.b16 %v667
        %v1190 = vunpack.c.l.b16 %v668
        %v1191 = vunpack.c.h.b16 %v668
        %v1192 = vunpack.c.l.b16 %v669
        %v1193 = vunpack.c.h.b16 %v669
        %v1194 = vunpack.c.l.b16 %v670
        %v1195 = vunpack.c.h.b16 %v670
        %v1196 = vunpack.c.l.b16 %v671
        %v1197 = vunpack.c.h.b16 %v671
        %v1198 = vunpack.c.l.b16 %v672
        %v1199 = vunpack.c.h.b16 %v672
        %v1200 = vunpack.c.l.b16 %v673
        %v1201 = vunpack.c.h.b16 %v673
        %v1202 = vunpack.c.l.b16 %v674
        %v1203 = vunpack.c.h.b16 %v674
        %v1204 = vunpack.c.l.b16 %v675
        %v1205 = vunpack.c.h.b16 %v675
        %v1206 = vunpack.c.l.b16 %v676
        %v1207 = vunpack.c.h.b16 %v676
        %v1208 = vunpack.c.l.b16 %v677
        %v1209 = vunpack.c.h.b16 %v677
        %v1210 = vunpack.c.l.b16 %v678
        %v1211 = vunpack.c.h.b16 %v678
        %v1212 = vunpack.c.l.b16 %v679
        %v1213 = vunpack.c.h.b16 %v679
        %v1214 = vunpack.c.l.b16 %v680
        %v1215 = vunpack.c.h.b16 %v680
        %v1216 = vunpack.c.l.b16 %v681
        %v1217 = vunpack.c.h.b16 %v681
        %v1218 = vunpack.c.l.b16 %v682
        %v1219 = vunpack.c.h.b16 %v682
        %v1220 = vunpack.c.l.b16 %v683
        %v1221 = vunpack.c.h.b16 %v683
        %v1222 = vunpack.c.l.b16 %v684
        %v1223 = vunpack.c.h.b16 %v684
        %v1224 = vunpack.c.l.b16 %v685
        %v1225 = vunpack.c.h.b16 %v685
        %v1226 = vunpack.c.l.b16 %v686
        %v1227 = vunpack.c.h.b16 %v686
        %v1228 = vunpack.c.l.b16 %v687
        %v1229 = vunpack.c.h.b16 %v687
        %v1230 = vunpack.c.l.b16 %v688
        %v1231 = vunpack.c.h.b16 %v688
        %v1232 = vunpack.c.l.b16 %v689
        %v1233 = vunpack.c.h.b16 %v689
        %v1234 = vunpack.c.l.b16 %v690
        %v1235 = vunpack.c.h.b16 %v690
        %v1236 = vunpack.c.l.b16 %v691
        %v1237 = vunpack.c.h.b16 %v691
        %v1238 = vunpack.c.l.b16 %v692
        %v1239 = vunpack.c.h.b16 %v692
        %v1240 = vunpack.c.l.b16 %v693
        %v1241 = vunpack.c.h.b16 %v693
        %v1242 = vunpack.c.l.b16 %v694
        %v1243 = vunpack.c.h.b16 %v694
        %v1244 = vunpack.c.l.b16 %v695
        %v1245 = vunpack.c.h.b16 %v695
        %v1246 = vunpack.c.l.b16 %v696
        %v1247 = vunpack.c.h.b16 %v696
        %v1248 = vunpack.c.l.b16 %v697
        %v1249 = vunpack.c.h.b16 %v697
        %v1250 = vunpack.c.l.b16 %v698
        %v1251 = vunpack.c.h.b16 %v698
        %v1252 = vunpack.c.l.b16 %v699
        %v1253 = vunpack.c.h.b16 %v699
        %v1254 = vunpack.c.l.b16 %v700
        %v1255 = vunpack.c.h.b16 %v700
        %v1256 = vunpack.c.l.b16 %v701
        %v1257 = vunpack.c.h.b16 %v701
        %v1258 = vunpack.c.l.b16 %v702
        %v1259 = vunpack.c.h.b16 %v702
        %v1260 = vunpack.c.l.b16 %v703
        %v1261 = vunpack.c.h.b16 %v703
        %v1262 = vunpack.c.l.b16 %v704
        %v1263 = vunpack.c.h.b16 %v704
        %v1264 = vunpack.c.l.b16 %v705
        %v1265 = vunpack.c.h.b16 %v705
        %v1266 = vunpack.c.l.b16 %v706
        %v1267 = vunpack.c.h.b16 %v706
        %v1268 = vunpack.c.l.b16 %v707
        %v1269 = vunpack.c.h.b16 %v707
        %v1270 = vunpack.c.l.b16 %v708
        %v1271 = vunpack.c.h.b16 %v708
        %v1272 = vunpack.c.l.b16 %v709
        %v1273 = vunpack.c.h.b16 %v709
        %v1274 = vunpack.c.l.b16 %v710
        %v1275 = vunpack.c.h.b16 %v710
        %v1276 = vunpack.c.l.b16 %v711
        %v1277 = vunpack.c.h.b16 %v711
        %v1278 = vunpack.c.l.b16 %v712
        %v1279 = vunpack.c.h.b16 %v712
        %v1280 = vunpack.c.l.b16 %v713
        %v1281 = vunpack.c.h.b16 %v713
        %v1282 = vunpack.c.l.b16 %v714
        %v1283 = vunpack.c.h.b16 %v714
        %v1284 = vunpack.c.l.b16 %v715
        %v1285 = vunpack.c.h.b16 %v715
        %v1286 = vpack.c.b16 %v1038, %v1030
        %v1287 = vpack.c.b16 %v1039, %v1031
        %v1288 = vpack.c.b16 %v1040, %v1032
        %v1289 = vpack.c.b16 %v1041, %v1033
        %v1290 = vpack.c.b16 %v1042, %v1034
        %v1291 = vpack.c.b16 %v1043, %v1035
        %v1292 = vpack.c.b16 %v1044, %v1036
        %v1293 = vpack.c.b16 %v1045, %v1037
        %v1294 = vpack.c.b16 %v1054, %v1046
        %v1295 = vpack.c.b16 %v1055, %v1047
        %v1296 = vpack.c.b16 %v1056, %v1048
        %v1297 = vpack.c.b16 %v1057, %v1049
        %v1298 = vpack.c.b16 %v1058, %v1050
        %v1299 = vpack.c.b16 %v1059, %v1051
        %v1300 = vpack.c.b16 %v1060, %v1052
        %v1301 = vpack.c.b16 %v1061, %v1053
        %v1302 = vpack.c.b16 %v1070, %v1062
        %v1303 = vpack.c.b16 %v1071, %v1063
        %v1304 = vpack.c.b16 %v1072, %v1064
        %v1305 = vpack.c.b16 %v1073, %v1065
        %v1306 = vpack.c.b16 %v1074, %v1066
        %v1307 = vpack.c.b16 %v1075, %v1067
        %v1308 = vpack.c.b16 %v1076, %v1068
        %v1309 = vpack.c.b16 %v1077, %v1069
        %v1310 = vpack.c.b16 %v1086, %v1078
        %v1311 = vpack.c.b16 %v1087, %v1079
        %v1312 = vpack.c.b16 %v1088, %v1080
        %v1313 = vpack.c.b16 %v1089, %v1081
        %v1314 = vpack.c.b16 %v1090, %v1082
        %v1315 = vpack.c.b16 %v1091, %v1083
        %v1316 = vpack.c.b16 %v1092, %v1084
        %v1317 = vpack.c.b16 %v1093, %v1085
        %v1318 = vpack.c.b16 %v1102, %v1094
        %v1319 = vpack.c.b16 %v1103, %v1095
        %v1320 = vpack.c.b16 %v1104, %v1096
        %v1321 = vpack.c.b16 %v1105, %v1097
        %v1322 = vpack.c.b16 %v1106, %v1098
        %v1323 = vpack.c.b16 %v1107, %v1099
        %v1324 = vpack.c.b16 %v1108, %v1100
        %v1325 = vpack.c.b16 %v1109, %v1101
        %v1326 = vpack.c.b16 %v1118, %v1110
        %v1327 = vpack.c.b16 %v1119, %v1111
        %v1328 = vpack.c.b16 %v1120, %v1112
        %v1329 = vpack.c.b16 %v1121, %v1113
        %v1330 = vpack.c.b16 %v1122, %v1114
        %v1331 = vpack.c.b16 %v1123, %v1115
        %v1332 = vpack.c.b16 %v1124, %v1116
        %v1333 = vpack.c.b16 %v1125, %v1117
        %v1334 = vpack.c.b16 %v1134, %v1126
        %v1335 = vpack.c.b16 %v1135, %v1127
        %v1336 = vpack.c.b16 %v1136, %v1128
        %v1337 = vpack.c.b16 %v1137, %v1129
        %v1338 = vpack.c.b16 %v1138, %v1130
        %v1339 = vpack.c.b16 %v1139, %v1131
        %v1340 = vpack.c.b16 %v1140, %v1132
        %v1341 = vpack.c.b16 %v1141, %v1133
        %v1342 = vpack.c.b16 %v1150, %v1142
        %v1343 = vpack.c.b16 %v1151, %v1143
        %v1344 = vpack.c.b16 %v1152, %v1144
        %v1345 = vpack.c.b16 %v1153, %v1145
        %v1346 = vpack.c.b16 %v1154, %v1146
        %v1347 = vpack.c.b16 %v1155, %v1147
        %v1348 = vpack.c.b16 %v1156, %v1148
        %v1349 = vpack.c.b16 %v1157, %v1149
        %v1350 = vpack.c.b16 %v1166, %v1158
        %v1351 = vpack.c.b16 %v1167, %v1159
        %v1352 = vpack.c.b16 %v1168, %v1160
        %v1353 = vpack.c.b16 %v1169, %v1161
        %v1354 = vpack.c.b16 %v1170, %v1162
        %v1355 = vpack.c.b16 %v1171, %v1163
        %v1356 = vpack.c.b16 %v1172, %v1164
        %v1357 = vpack.c.b16 %v1173, %v1165
        %v1358 = vpack.c.b16 %v1182, %v1174
        %v1359 = vpack.c.b16 %v1183, %v1175
        %v1360 = vpack.c.b16 %v1184, %v1176
        %v1361 = vpack.c.b16 %v1185, %v1177
        %v1362 = vpack.c.b16 %v1186, %v1178
        %v1363 = vpack.c.b16 %v1187, %v1179
        %v1364 = vpack.c.b16 %v1188, %v1180
        %v1365 = vpack.c.b16 %v1189, %v1181
        %v1366 = vpack.c.b16 %v1198, %v1190
        %v1367 = vpack.c.b16 %v1199, %v1191
        %v1368 = vpack.c.b16 %v1200, %v1192
        %v1369 = vpack.c.b16 %v1201, %v1193
        %v1370 = vpack.c.b16 %v1202, %v1194
        %v1371 = vpack.c.b16 %v1203, %v1195
        %v1372 = vpack.c.b16 %v1204, %v1196
        %v1373 = vpack.c.b16 %v1205, %v1197
        %v1374 = vpack.c.b16 %v1214, %v1206
        %v1375 = vpack.c.b16 %v1215, %v1207
        %v1376 = vpack.c.b16 %v1216, %v1208
        %v1377 = vpack.c.b16 %v1217, %v1209
        %v1378 = vpack.c.b16 %v1218, %v1210
        %v1379 = vpack.c.b16 %v1219, %v1211
        %v1380 = vpack.c.b16 %v1220, %v1212
        %v1381 = vpack.c.b16 %v1221, %v1213
        %v1382 = vpack.c.b16 %v1230, %v1222
        %v1383 = vpack.c.b16 %v1231, %v1223
        %v1384 = vpack.c.b16 %v1232, %v1224
        %v1385 = vpack.c.b16 %v1233, %v1225
        %v1386 = vpack.c.b16 %v1234, %v1226
        %v1387 = vpack.c.b16 %v1235, %v1227
        %v1388 = vpack.c.b16 %v1236, %v1228
        %v1389 = vpack.c.b16 %v1237, %v1229
        %v1390 = vpack.c.b16 %v1246, %v1238
        %v1391 = vpack.c.b16 %v1247, %v1239
        %v1392 = vpack.c.b16 %v1248, %v1240
        %v1393 = vpack.c.b16 %v1249, %v1241
        %v1394 = vpack.c.b16 %v1250, %v1242
        %v1395 = vpack.c.b16 %v1251, %v1243
        %v1396 = vpack.c.b16 %v1252, %v1244
        %v1397 = vpack.c.b16 %v1253, %v1245
        %v1398 = vpack.c.b16 %v1262, %v1254
        %v1399 = vpack.c.b16 %v1263, %v1255
        %v1400 = vpack.c.b16 %v1264, %v1256
        %v1401 = vpack.c.b16 %v1265, %v1257
        %v1402 = vpack.c.b16 %v1266, %v1258
        %v1403 = vpack.c.b16 %v1267, %v1259
        %v1404 = vpack.c.b16 %v1268, %v1260
        %v1405 = vpack.c.b16 %v1269, %v1261
        %v1406 = vpack.c.b16 %v1278, %v1270
        %v1407 = vpack.c.b16 %v1279, %v1271
        %v1408 = vpack.c.b16 %v1280, %v1272
        %v1409 = vpack.c.b16 %v1281, %v1273
        %v1410 = vpack.c.b16 %v1282, %v1274
        %v1411 = vpack.c.b16 %v1283, %v1275
        %v1412 = vpack.c.b16 %v1284, %v1276
        %v1413 = vpack.c.b16 %v1285, %v1277
        %1542 = vmatprep.subr.bf16.mxu0 %v1287
        %1543 = vmatpush1.bf16.msra.mxu0 %v1286
        %1544 = vmatprep.subr.bf16.mxu0 %v1295
        %1545 = vmatpush1.bf16.msra.mxu0 %v1294
        %1546 = vmatprep.subr.bf16.mxu0 %v1303
        %1547 = vmatpush1.bf16.msra.mxu0 %v1302
        %1548 = vmatprep.subr.bf16.mxu0 %v1311
        %1549 = vmatpush1.bf16.msra.mxu0 %v1310
        %1550 = vmatprep.subr.bf16.mxu0 %v1319
        %1551 = vmatpush1.bf16.msra.mxu0 %v1318
        %1552 = vmatprep.subr.bf16.mxu0 %v1327
        %1553 = vmatpush1.bf16.msra.mxu0 %v1326
        %1554 = vmatprep.subr.bf16.mxu0 %v1335
        %1555 = vmatpush1.bf16.msra.mxu0 %v1334
        %1556 = vmatprep.subr.bf16.mxu0 %v1343
        %1557 = vmatpush1.bf16.msra.mxu0 %v1342
        %1558 = vmatprep.subr.bf16.mxu0 %v1351
        %1559 = vmatpush1.bf16.msra.mxu0 %v1350
        %1560 = vmatprep.subr.bf16.mxu0 %v1359
        %1561 = vmatpush1.bf16.msra.mxu0 %v1358
        %1562 = vmatprep.subr.bf16.mxu0 %v1367
        %1563 = vmatpush1.bf16.msra.mxu0 %v1366
        %1564 = vmatprep.subr.bf16.mxu0 %v1375
        %1565 = vmatpush1.bf16.msra.mxu0 %v1374
        %1566 = vmatprep.subr.bf16.mxu0 %v1383
        %1567 = vmatpush1.bf16.msra.mxu0 %v1382
        %1568 = vmatprep.subr.bf16.mxu0 %v1391
        %1569 = vmatpush1.bf16.msra.mxu0 %v1390
        %1570 = vmatprep.subr.bf16.mxu0 %v1399
        %1571 = vmatpush1.bf16.msra.mxu0 %v1398
        %1572 = vmatprep.subr.bf16.mxu0 %v1407
        %1573 = vmatpush1.bf16.msra.mxu0 %v1406
        %1574 = vmatprep.mubr.bf16.mxu0 %v856
        %1575 = vmatmul.mubr.bf16.gmra.mrb[0].mxu0 %v855
        %v1576 = vpop.f32.mrb[0].mxu0
        %v1577 = vadd.f32 %v865, %v1576
        %v1578 = vpop.f32.mrb[0].mxu0
        %v1579 = vadd.f32 %v869, %v1578
        %v1580 = vpop.f32.mrb[0].mxu0
        %v1581 = vadd.f32 %v865, %v1580
        %v1582 = vpop.f32.mrb[0].mxu0
        %v1583 = vadd.f32 %v869, %v1582
        %1584 = vmatprep.mubr.bf16.mxu0 %v858
        %1585 = vmatmul.mubr.bf16.gmra.mrb[0].mxu0 %v857
        %v1586 = vpop.f32.mrb[0].mxu0
        %v1587 = vadd.f32 %v865, %v1586
        %v1588 = vpop.f32.mrb[0].mxu0
        %v1589 = vadd.f32 %v869, %v1588
        %v1590 = vpop.f32.mrb[0].mxu0
        %v1591 = vadd.f32 %v865, %v1590
        %v1592 = vpop.f32.mrb[0].mxu0
        %v1593 = vadd.f32 %v869, %v1592
        %1594 = vmatprep.mubr.bf16.mxu0 %v860
        %1595 = vmatmul.mubr.bf16.gmra.mrb[0].mxu0 %v859
        %v1596 = vpop.f32.mrb[0].mxu0
        %v1597 = vadd.f32 %v865, %v1596
        %v1598 = vpop.f32.mrb[0].mxu0
        %v1599 = vadd.f32 %v869, %v1598
        %v1600 = vpop.f32.mrb[0].mxu0
        %v1601 = vpop.f32.mrb[0].mxu0
        %1602 = vdwg.mxu0
        %1603 = vmatprep.subr.bf16.mxu0 %v1289
        %1604 = vmatpush1.bf16.msra.mxu0 %v1288
        %1605 = vmatprep.subr.bf16.mxu0 %v1297
        %1606 = vmatpush1.bf16.msra.mxu0 %v1296
        %1607 = vmatprep.subr.bf16.mxu0 %v1305
        %1608 = vmatpush1.bf16.msra.mxu0 %v1304
        %1609 = vmatprep.subr.bf16.mxu0 %v1313
        %1610 = vmatpush1.bf16.msra.mxu0 %v1312
        %1611 = vmatprep.subr.bf16.mxu0 %v1321
        %1612 = vmatpush1.bf16.msra.mxu0 %v1320
        %1613 = vmatprep.subr.bf16.mxu0 %v1329
        %1614 = vmatpush1.bf16.msra.mxu0 %v1328
        %1615 = vmatprep.subr.bf16.mxu0 %v1337
        %1616 = vmatpush1.bf16.msra.mxu0 %v1336
        %1617 = vmatprep.subr.bf16.mxu0 %v1345
        %1618 = vmatpush1.bf16.msra.mxu0 %v1344
        %1619 = vmatprep.subr.bf16.mxu0 %v1353
        %1620 = vmatpush1.bf16.msra.mxu0 %v1352
        %1621 = vmatprep.subr.bf16.mxu0 %v1361
        %1622 = vmatpush1.bf16.msra.mxu0 %v1360
        %1623 = vmatprep.subr.bf16.mxu0 %v1369
        %1624 = vmatpush1.bf16.msra.mxu0 %v1368
        %1625 = vmatprep.subr.bf16.mxu0 %v1377
        %1626 = vmatpush1.bf16.msra.mxu0 %v1376
        %1627 = vmatprep.subr.bf16.mxu0 %v1385
        %1628 = vmatpush1.bf16.msra.mxu0 %v1384
        %1629 = vmatprep.subr.bf16.mxu0 %v1393
        %1630 = vmatpush1.bf16.msra.mxu0 %v1392
        %1631 = vmatprep.subr.bf16.mxu0 %v1401
        %1632 = vmatpush1.bf16.msra.mxu0 %v1400
        %1633 = vmatprep.subr.bf16.mxu0 %v1409
        %1634 = vmatpush1.bf16.msra.mxu0 %v1408
        %1635 = vmatprep.mubr.bf16.mxu0 %v856
        %1636 = vmatmul.mubr.bf16.gmra.mrb[0].mxu0 %v855
        %v1637 = vpop.f32.mrb[0].mxu0
        %v1638 = vadd.f32 %v873, %v1637
        %v1639 = vpop.f32.mrb[0].mxu0
        %v1640 = vadd.f32 %v877, %v1639
        %v1641 = vpop.f32.mrb[0].mxu0
        %v1642 = vadd.f32 %v873, %v1641
        %v1643 = vpop.f32.mrb[0].mxu0
        %v1644 = vadd.f32 %v877, %v1643
        %1645 = vmatprep.mubr.bf16.mxu0 %v858
        %1646 = vmatmul.mubr.bf16.gmra.mrb[0].mxu0 %v857
        %v1647 = vpop.f32.mrb[0].mxu0
        %v1648 = vadd.f32 %v873, %v1647
        %v1649 = vpop.f32.mrb[0].mxu0
        %v1650 = vadd.f32 %v877, %v1649
        %v1651 = vpop.f32.mrb[0].mxu0
        %v1652 = vadd.f32 %v873, %v1651
        %v1653 = vpop.f32.mrb[0].mxu0
        %v1654 = vadd.f32 %v877, %v1653
        %1655 = vmatprep.mubr.bf16.mxu0 %v860
        %1656 = vmatmul.mubr.bf16.gmra.mrb[0].mxu0 %v859
        %v1657 = vpop.f32.mrb[0].mxu0
        %v1658 = vadd.f32 %v873, %v1657
        %v1659 = vpop.f32.mrb[0].mxu0
        %v1660 = vadd.f32 %v877, %v1659
        %v1661 = vpop.f32.mrb[0].mxu0
        %v1662 = vpop.f32.mrb[0].mxu0
        %1663 = vdwg.mxu0
        %1664 = vmatprep.subr.bf16.mxu0 %v1291
        %1665 = vmatpush1.bf16.msra.mxu0 %v1290
        %1666 = vmatprep.subr.bf16.mxu0 %v1299
        %1667 = vmatpush1.bf16.msra.mxu0 %v1298
        %1668 = vmatprep.subr.bf16.mxu0 %v1307
        %1669 = vmatpush1.bf16.msra.mxu0 %v1306
        %1670 = vmatprep.subr.bf16.mxu0 %v1315
        %1671 = vmatpush1.bf16.msra.mxu0 %v1314
        %1672 = vmatprep.subr.bf16.mxu0 %v1323
        %1673 = vmatpush1.bf16.msra.mxu0 %v1322
        %1674 = vmatprep.subr.bf16.mxu0 %v1331
        %1675 = vmatpush1.bf16.msra.mxu0 %v1330
        %1676 = vmatprep.subr.bf16.mxu0 %v1339
        %1677 = vmatpush1.bf16.msra.mxu0 %v1338
        %1678 = vmatprep.subr.bf16.mxu0 %v1347
        %1679 = vmatpush1.bf16.msra.mxu0 %v1346
        %1680 = vmatprep.subr.bf16.mxu0 %v1355
        %1681 = vmatpush1.bf16.msra.mxu0 %v1354
        %1682 = vmatprep.subr.bf16.mxu0 %v1363
        %1683 = vmatpush1.bf16.msra.mxu0 %v1362
        %1684 = vmatprep.subr.bf16.mxu0 %v1371
        %1685 = vmatpush1.bf16.msra.mxu0 %v1370
        %1686 = vmatprep.subr.bf16.mxu0 %v1379
        %1687 = vmatpush1.bf16.msra.mxu0 %v1378
        %1688 = vmatprep.subr.bf16.mxu0 %v1387
        %1689 = vmatpush1.bf16.msra.mxu0 %v1386
        %1690 = vmatprep.subr.bf16.mxu0 %v1395
        %1691 = vmatpush1.bf16.msra.mxu0 %v1394
        %1692 = vmatprep.subr.bf16.mxu0 %v1403
        %1693 = vmatpush1.bf16.msra.mxu0 %v1402
        %1694 = vmatprep.subr.bf16.mxu0 %v1411
        %1695 = vmatpush1.bf16.msra.mxu0 %v1410
        %1696 = vmatprep.mubr.bf16.mxu0 %v856
        %1697 = vmatmul.mubr.bf16.gmra.mrb[0].mxu0 %v855
        %v1698 = vpop.f32.mrb[0].mxu0
        %v1699 = vadd.f32 %v881, %v1698
        %v1700 = vpop.f32.mrb[0].mxu0
        %v1701 = vadd.f32 %v885, %v1700
        %v1702 = vpop.f32.mrb[0].mxu0
        %v1703 = vadd.f32 %v881, %v1702
        %v1704 = vpop.f32.mrb[0].mxu0
        %v1705 = vadd.f32 %v885, %v1704
        %1706 = vmatprep.mubr.bf16.mxu0 %v858
        %1707 = vmatmul.mubr.bf16.gmra.mrb[0].mxu0 %v857
        %v1708 = vpop.f32.mrb[0].mxu0
        %v1709 = vadd.f32 %v881, %v1708
        %v1710 = vpop.f32.mrb[0].mxu0
        %v1711 = vadd.f32 %v885, %v1710
        %v1712 = vpop.f32.mrb[0].mxu0
        %v1713 = vadd.f32 %v881, %v1712
        %v1714 = vpop.f32.mrb[0].mxu0
        %v1715 = vadd.f32 %v885, %v1714
        %1716 = vmatprep.mubr.bf16.mxu0 %v860
        %1717 = vmatmul.mubr.bf16.gmra.mrb[0].mxu0 %v859
        %v1718 = vpop.f32.mrb[0].mxu0
        %v1719 = vadd.f32 %v881, %v1718
        %v1720 = vpop.f32.mrb[0].mxu0
        %v1721 = vadd.f32 %v885, %v1720
        %v1722 = vpop.f32.mrb[0].mxu0
        %v1723 = vpop.f32.mrb[0].mxu0
        %1724 = vdwg.mxu0
        %1725 = vmatprep.subr.bf16.mxu0 %v1293
        %1726 = vmatpush1.bf16.msra.mxu0 %v1292
        %1727 = vmatprep.subr.bf16.mxu0 %v1301
        %1728 = vmatpush1.bf16.msra.mxu0 %v1300
        %1729 = vmatprep.subr.bf16.mxu0 %v1309
        %1730 = vmatpush1.bf16.msra.mxu0 %v1308
        %1731 = vmatprep.subr.bf16.mxu0 %v1317
        %1732 = vmatpush1.bf16.msra.mxu0 %v1316
        %1733 = vmatprep.subr.bf16.mxu0 %v1325
        %1734 = vmatpush1.bf16.msra.mxu0 %v1324
        %1735 = vmatprep.subr.bf16.mxu0 %v1333
        %1736 = vmatpush1.bf16.msra.mxu0 %v1332
        %1737 = vmatprep.subr.bf16.mxu0 %v1341
        %1738 = vmatpush1.bf16.msra.mxu0 %v1340
        %1739 = vmatprep.subr.bf16.mxu0 %v1349
        %1740 = vmatpush1.bf16.msra.mxu0 %v1348
        %1741 = vmatprep.subr.bf16.mxu0 %v1357
        %1742 = vmatpush1.bf16.msra.mxu0 %v1356
        %1743 = vmatprep.subr.bf16.mxu0 %v1365
        %1744 = vmatpush1.bf16.msra.mxu0 %v1364
        %1745 = vmatprep.subr.bf16.mxu0 %v1373
        %1746 = vmatpush1.bf16.msra.mxu0 %v1372
        %1747 = vmatprep.subr.bf16.mxu0 %v1381
        %1748 = vmatpush1.bf16.msra.mxu0 %v1380
        %1749 = vmatprep.subr.bf16.mxu0 %v1389
        %1750 = vmatpush1.bf16.msra.mxu0 %v1388
        %1751 = vmatprep.subr.bf16.mxu0 %v1397
        %1752 = vmatpush1.bf16.msra.mxu0 %v1396
        %1753 = vmatprep.subr.bf16.mxu0 %v1405
        %1754 = vmatpush1.bf16.msra.mxu0 %v1404
        %1755 = vmatprep.subr.bf16.mxu0 %v1413
        %1756 = vmatpush1.bf16.msra.mxu0 %v1412
        %1757 = vmatprep.mubr.bf16.mxu0 %v856
        %1758 = vmatmul.mubr.bf16.gmra.mrb[0].mxu0 %v855
        %v1759 = vpop.f32.mrb[0].mxu0
        %v1760 = vadd.f32 %v889, %v1759
        %v1761 = vpop.f32.mrb[0].mxu0
        %v1762 = vadd.f32 %v893, %v1761
        %v1763 = vpop.f32.mrb[0].mxu0
        %v1764 = vadd.f32 %v889, %v1763
        %v1765 = vpop.f32.mrb[0].mxu0
        %v1766 = vadd.f32 %v893, %v1765
        %1767 = vmatprep.mubr.bf16.mxu0 %v858
        %1768 = vmatmul.mubr.bf16.gmra.mrb[0].mxu0 %v857
        %v1769 = vpop.f32.mrb[0].mxu0
        %v1770 = vadd.f32 %v889, %v1769
        %v1771 = vpop.f32.mrb[0].mxu0
        %v1772 = vadd.f32 %v893, %v1771
        %v1773 = vpop.f32.mrb[0].mxu0
        %v1774 = vadd.f32 %v889, %v1773
        %v1775 = vpop.f32.mrb[0].mxu0
        %v1776 = vadd.f32 %v893, %v1775
        %1777 = vmatprep.mubr.bf16.mxu0 %v860
        %1778 = vmatmul.mubr.bf16.gmra.mrb[0].mxu0 %v859
        %v1779 = vpop.f32.mrb[0].mxu0
        %v1780 = vadd.f32 %v889, %v1779
        %v1781 = vpop.f32.mrb[0].mxu0
        %v1782 = vadd.f32 %v893, %v1781
        %v1783 = vpop.f32.mrb[0].mxu0
        %v1784 = vpop.f32.mrb[0].mxu0
        %1785 = vdwg.mxu0
        %v1786 = vxor.u32 %v1577, 2147483648
        %v1787 = vxor.u32 %v1579, 2147483648
        %v1788 = vxor.u32 %v1638, 2147483648
        %v1789 = vxor.u32 %v1640, 2147483648
        %v1790 = vxor.u32 %v1699, 2147483648
        %v1791 = vxor.u32 %v1701, 2147483648
        %v1792 = vmul.f32 %v1786, 1.442695
        %v1793 = vpow.pop %v1792
        %v1794 = vmul.f32 %v1787, 1.442695
        %v1795 = vpow.pop %v1794
        %v1796 = vmul.f32 %v1788, 1.442695
        %v1797 = vpow.pop %v1796
        %v1798 = vmul.f32 %v1789, 1.442695
        %v1799 = vpow.pop %v1798
        %v1800 = vmul.f32 %v1790, 1.442695
        %v1801 = vpow.pop %v1800
        %v1802 = vmul.f32 %v1791, 1.442695
        %v1803 = vpow.pop %v1802
        %v1804 = vadd.f32 %v1793, 1.0
        %v1805 = vadd.f32 %v1795, 1.0
        %v1806 = vadd.f32 %v1797, 1.0
        %v1807 = vadd.f32 %v1799, 1.0
        %v1808 = vadd.f32 %v1801, 1.0
        %v1809 = vadd.f32 %v1803, 1.0
        %v1810 = vrcp.pop %v1804
        %v1811 = vmul.f32 1.0, %v1810
        %v1812 = vrcp.pop %v1805
        %v1813 = vmul.f32 1.0, %v1812
        %v1814 = vrcp.pop %v1806
        %v1815 = vmul.f32 1.0, %v1814
        %v1816 = vrcp.pop %v1807
        %v1817 = vmul.f32 1.0, %v1816
        %v1818 = vrcp.pop %v1808
        %v1819 = vmul.f32 1.0, %v1818
        %v1820 = vrcp.pop %v1809
        %v1821 = vmul.f32 1.0, %v1820
        %v1822 = vtanh.pop %v1760
        %v1823 = vtanh.pop %v1762
        %v1824 = vmul.f32 %v1815, 0.0
        %v1825 = vmul.f32 %v1817, 0.0
        %v1826 = vmul.f32 %v1811, %v1822
        %v1827 = vmul.f32 %v1813, %v1823
        %v1828 = vadd.f32 %v1824, %v1826
        %v1829 = vadd.f32 %v1825, %v1827
        %v1830 = vtanh.pop %v1828
        %v1831 = vtanh.pop %v1829
        %v1832 = vmul.f32 %v1819, %v1830
        %v1833 = vmul.f32 %v1821, %v1831
        %1834 = vst [vmem:[#allocation2] sm:$0xff] %v1832
        %1835 = vst [vmem:[#allocation2 + $0x8] sm:$0xff] %v1833
        %v1836 = vpack.c.bf16 %v1832, %v1832
        %v1837 = vpack.c.bf16 %v1833, %v1833
        %v1966 = vunpack.c.l.b16 %v716
        %v1967 = vunpack.c.h.b16 %v716
        %v1968 = vunpack.c.l.b16 %v717
        %v1969 = vunpack.c.h.b16 %v717
        %v1970 = vunpack.c.l.b16 %v718
        %v1971 = vunpack.c.h.b16 %v718
        %v1972 = vunpack.c.l.b16 %v719
        %v1973 = vunpack.c.h.b16 %v719
        %v1974 = vunpack.c.l.b16 %v720
        %v1975 = vunpack.c.h.b16 %v720
        %v1976 = vunpack.c.l.b16 %v721
        %v1977 = vunpack.c.h.b16 %v721
        %v1978 = vunpack.c.l.b16 %v722
        %v1979 = vunpack.c.h.b16 %v722
        %v1980 = vunpack.c.l.b16 %v723
        %v1981 = vunpack.c.h.b16 %v723
        %v1982 = vunpack.c.l.b16 %v724
        %v1983 = vunpack.c.h.b16 %v724
        %v1984 = vunpack.c.l.b16 %v725
        %v1985 = vunpack.c.h.b16 %v725
        %v1986 = vunpack.c.l.b16 %v726
        %v1987 = vunpack.c.h.b16 %v726
        %v1988 = vunpack.c.l.b16 %v727
        %v1989 = vunpack.c.h.b16 %v727
        %v1990 = vunpack.c.l.b16 %v728
        %v1991 = vunpack.c.h.b16 %v728
        %v1992 = vunpack.c.l.b16 %v729
        %v1993 = vunpack.c.h.b16 %v729
        %v1994 = vunpack.c.l.b16 %v730
        %v1995 = vunpack.c.h.b16 %v730
        %v1996 = vunpack.c.l.b16 %v731
        %v1997 = vunpack.c.h.b16 %v731
        %v1998 = vunpack.c.l.b16 %v732
        %v1999 = vunpack.c.h.b16 %v732
        %v2000 = vunpack.c.l.b16 %v733
        %v2001 = vunpack.c.h.b16 %v733
        %v2002 = vunpack.c.l.b16 %v734
        %v2003 = vunpack.c.h.b16 %v734
        %v2004 = vunpack.c.l.b16 %v735
        %v2005 = vunpack.c.h.b16 %v735
        %v2006 = vunpack.c.l.b16 %v736
        %v2007 = vunpack.c.h.b16 %v736
        %v2008 = vunpack.c.l.b16 %v737
        %v2009 = vunpack.c.h.b16 %v737
        %v2010 = vunpack.c.l.b16 %v738
        %v2011 = vunpack.c.h.b16 %v738
        %v2012 = vunpack.c.l.b16 %v739
        %v2013 = vunpack.c.h.b16 %v739
        %v2014 = vunpack.c.l.b16 %v740
        %v2015 = vunpack.c.h.b16 %v740
        %v2016 = vunpack.c.l.b16 %v741
        %v2017 = vunpack.c.h.b16 %v741
        %v2018 = vunpack.c.l.b16 %v742
        %v2019 = vunpack.c.h.b16 %v742
        %v2020 = vunpack.c.l.b16 %v743
        %v2021 = vunpack.c.h.b16 %v743
        %v2022 = vunpack.c.l.b16 %v744
        %v2023 = vunpack.c.h.b16 %v744
        %v2024 = vunpack.c.l.b16 %v745
        %v2025 = vunpack.c.h.b16 %v745
        %v2026 = vunpack.c.l.b16 %v746
        %v2027 = vunpack.c.h.b16 %v746
        %v2028 = vunpack.c.l.b16 %v747
        %v2029 = vunpack.c.h.b16 %v747
        %v2030 = vunpack.c.l.b16 %v748
        %v2031 = vunpack.c.h.b16 %v748
        %v2032 = vunpack.c.l.b16 %v749
        %v2033 = vunpack.c.h.b16 %v749
        %v2034 = vunpack.c.l.b16 %v750
        %v2035 = vunpack.c.h.b16 %v750
        %v2036 = vunpack.c.l.b16 %v751
        %v2037 = vunpack.c.h.b16 %v751
        %v2038 = vunpack.c.l.b16 %v752
        %v2039 = vunpack.c.h.b16 %v752
        %v2040 = vunpack.c.l.b16 %v753
        %v2041 = vunpack.c.h.b16 %v753
        %v2042 = vunpack.c.l.b16 %v754
        %v2043 = vunpack.c.h.b16 %v754
        %v2044 = vunpack.c.l.b16 %v755
        %v2045 = vunpack.c.h.b16 %v755
        %v2046 = vunpack.c.l.b16 %v756
        %v2047 = vunpack.c.h.b16 %v756
        %v2048 = vunpack.c.l.b16 %v757
        %v2049 = vunpack.c.h.b16 %v757
        %v2050 = vunpack.c.l.b16 %v758
        %v2051 = vunpack.c.h.b16 %v758
        %v2052 = vunpack.c.l.b16 %v759
        %v2053 = vunpack.c.h.b16 %v759
        %v2054 = vunpack.c.l.b16 %v760
        %v2055 = vunpack.c.h.b16 %v760
        %v2056 = vunpack.c.l.b16 %v761
        %v2057 = vunpack.c.h.b16 %v761
        %v2058 = vunpack.c.l.b16 %v762
        %v2059 = vunpack.c.h.b16 %v762
        %v2060 = vunpack.c.l.b16 %v763
        %v2061 = vunpack.c.h.b16 %v763
        %v2062 = vunpack.c.l.b16 %v764
        %v2063 = vunpack.c.h.b16 %v764
        %v2064 = vunpack.c.l.b16 %v765
        %v2065 = vunpack.c.h.b16 %v765
        %v2066 = vunpack.c.l.b16 %v766
        %v2067 = vunpack.c.h.b16 %v766
        %v2068 = vunpack.c.l.b16 %v767
        %v2069 = vunpack.c.h.b16 %v767
        %v2070 = vunpack.c.l.b16 %v768
        %v2071 = vunpack.c.h.b16 %v768
        %v2072 = vunpack.c.l.b16 %v769
        %v2073 = vunpack.c.h.b16 %v769
        %v2074 = vunpack.c.l.b16 %v770
        %v2075 = vunpack.c.h.b16 %v770
        %v2076 = vunpack.c.l.b16 %v771
        %v2077 = vunpack.c.h.b16 %v771
        %v2078 = vunpack.c.l.b16 %v772
        %v2079 = vunpack.c.h.b16 %v772
        %v2080 = vunpack.c.l.b16 %v773
        %v2081 = vunpack.c.h.b16 %v773
        %v2082 = vunpack.c.l.b16 %v774
        %v2083 = vunpack.c.h.b16 %v774
        %v2084 = vunpack.c.l.b16 %v775
        %v2085 = vunpack.c.h.b16 %v775
        %v2086 = vunpack.c.l.b16 %v776
        %v2087 = vunpack.c.h.b16 %v776
        %v2088 = vunpack.c.l.b16 %v777
        %v2089 = vunpack.c.h.b16 %v777
        %v2090 = vunpack.c.l.b16 %v778
        %v2091 = vunpack.c.h.b16 %v778
        %v2092 = vunpack.c.l.b16 %v779
        %v2093 = vunpack.c.h.b16 %v779
        %v2094 = vunpack.c.l.b16 %v780
        %v2095 = vunpack.c.h.b16 %v780
        %v2096 = vunpack.c.l.b16 %v781
        %v2097 = vunpack.c.h.b16 %v781
        %v2098 = vunpack.c.l.b16 %v782
        %v2099 = vunpack.c.h.b16 %v782
        %v2100 = vunpack.c.l.b16 %v783
        %v2101 = vunpack.c.h.b16 %v783
        %v2102 = vunpack.c.l.b16 %v784
        %v2103 = vunpack.c.h.b16 %v784
        %v2104 = vunpack.c.l.b16 %v785
        %v2105 = vunpack.c.h.b16 %v785
        %v2106 = vunpack.c.l.b16 %v786
        %v2107 = vunpack.c.h.b16 %v786
        %v2108 = vunpack.c.l.b16 %v787
        %v2109 = vunpack.c.h.b16 %v787
        %v2110 = vunpack.c.l.b16 %v788
        %v2111 = vunpack.c.h.b16 %v788
        %v2112 = vunpack.c.l.b16 %v789
        %v2113 = vunpack.c.h.b16 %v789
        %v2114 = vunpack.c.l.b16 %v790
        %v2115 = vunpack.c.h.b16 %v790
        %v2116 = vunpack.c.l.b16 %v791
        %v2117 = vunpack.c.h.b16 %v791
        %v2118 = vunpack.c.l.b16 %v792
        %v2119 = vunpack.c.h.b16 %v792
        %v2120 = vunpack.c.l.b16 %v793
        %v2121 = vunpack.c.h.b16 %v793
        %v2122 = vunpack.c.l.b16 %v794
        %v2123 = vunpack.c.h.b16 %v794
        %v2124 = vunpack.c.l.b16 %v795
        %v2125 = vunpack.c.h.b16 %v795
        %v2126 = vunpack.c.l.b16 %v796
        %v2127 = vunpack.c.h.b16 %v796
        %v2128 = vunpack.c.l.b16 %v797
        %v2129 = vunpack.c.h.b16 %v797
        %v2130 = vunpack.c.l.b16 %v798
        %v2131 = vunpack.c.h.b16 %v798
        %v2132 = vunpack.c.l.b16 %v799
        %v2133 = vunpack.c.h.b16 %v799
        %v2134 = vunpack.c.l.b16 %v800
        %v2135 = vunpack.c.h.b16 %v800
        %v2136 = vunpack.c.l.b16 %v801
        %v2137 = vunpack.c.h.b16 %v801
        %v2138 = vunpack.c.l.b16 %v802
        %v2139 = vunpack.c.h.b16 %v802
        %v2140 = vunpack.c.l.b16 %v803
        %v2141 = vunpack.c.h.b16 %v803
        %v2142 = vunpack.c.l.b16 %v804
        %v2143 = vunpack.c.h.b16 %v804
        %v2144 = vunpack.c.l.b16 %v805
        %v2145 = vunpack.c.h.b16 %v805
        %v2146 = vunpack.c.l.b16 %v806
        %v2147 = vunpack.c.h.b16 %v806
        %v2148 = vunpack.c.l.b16 %v807
        %v2149 = vunpack.c.h.b16 %v807
        %v2150 = vunpack.c.l.b16 %v808
        %v2151 = vunpack.c.h.b16 %v808
        %v2152 = vunpack.c.l.b16 %v809
        %v2153 = vunpack.c.h.b16 %v809
        %v2154 = vunpack.c.l.b16 %v810
        %v2155 = vunpack.c.h.b16 %v810
        %v2156 = vunpack.c.l.b16 %v811
        %v2157 = vunpack.c.h.b16 %v811
        %v2158 = vunpack.c.l.b16 %v812
        %v2159 = vunpack.c.h.b16 %v812
        %v2160 = vunpack.c.l.b16 %v813
        %v2161 = vunpack.c.h.b16 %v813
        %v2162 = vunpack.c.l.b16 %v814
        %v2163 = vunpack.c.h.b16 %v814
        %v2164 = vunpack.c.l.b16 %v815
        %v2165 = vunpack.c.h.b16 %v815
        %v2166 = vunpack.c.l.b16 %v816
        %v2167 = vunpack.c.h.b16 %v816
        %v2168 = vunpack.c.l.b16 %v817
        %v2169 = vunpack.c.h.b16 %v817
        %v2170 = vunpack.c.l.b16 %v818
        %v2171 = vunpack.c.h.b16 %v818
        %v2172 = vunpack.c.l.b16 %v819
        %v2173 = vunpack.c.h.b16 %v819
        %v2174 = vunpack.c.l.b16 %v820
        %v2175 = vunpack.c.h.b16 %v820
        %v2176 = vunpack.c.l.b16 %v821
        %v2177 = vunpack.c.h.b16 %v821
        %v2178 = vunpack.c.l.b16 %v822
        %v2179 = vunpack.c.h.b16 %v822
        %v2180 = vunpack.c.l.b16 %v823
        %v2181 = vunpack.c.h.b16 %v823
        %v2182 = vunpack.c.l.b16 %v824
        %v2183 = vunpack.c.h.b16 %v824
        %v2184 = vunpack.c.l.b16 %v825
        %v2185 = vunpack.c.h.b16 %v825
        %v2186 = vunpack.c.l.b16 %v826
        %v2187 = vunpack.c.h.b16 %v826
        %v2188 = vunpack.c.l.b16 %v827
        %v2189 = vunpack.c.h.b16 %v827
        %v2190 = vunpack.c.l.b16 %v828
        %v2191 = vunpack.c.h.b16 %v828
        %v2192 = vunpack.c.l.b16 %v829
        %v2193 = vunpack.c.h.b16 %v829
        %v2194 = vunpack.c.l.b16 %v830
        %v2195 = vunpack.c.h.b16 %v830
        %v2196 = vunpack.c.l.b16 %v831
        %v2197 = vunpack.c.h.b16 %v831
        %v2198 = vunpack.c.l.b16 %v832
        %v2199 = vunpack.c.h.b16 %v832
        %v2200 = vunpack.c.l.b16 %v833
        %v2201 = vunpack.c.h.b16 %v833
        %v2202 = vunpack.c.l.b16 %v834
        %v2203 = vunpack.c.h.b16 %v834
        %v2204 = vunpack.c.l.b16 %v835
        %v2205 = vunpack.c.h.b16 %v835
        %v2206 = vunpack.c.l.b16 %v836
        %v2207 = vunpack.c.h.b16 %v836
        %v2208 = vunpack.c.l.b16 %v837
        %v2209 = vunpack.c.h.b16 %v837
        %v2210 = vunpack.c.l.b16 %v838
        %v2211 = vunpack.c.h.b16 %v838
        %v2212 = vunpack.c.l.b16 %v839
        %v2213 = vunpack.c.h.b16 %v839
        %v2214 = vunpack.c.l.b16 %v840
        %v2215 = vunpack.c.h.b16 %v840
        %v2216 = vunpack.c.l.b16 %v841
        %v2217 = vunpack.c.h.b16 %v841
        %v2218 = vunpack.c.l.b16 %v842
        %v2219 = vunpack.c.h.b16 %v842
        %v2220 = vunpack.c.l.b16 %v843
        %v2221 = vunpack.c.h.b16 %v843
        %v2222 = vpack.c.b16 %v1974, %v1966
        %v2223 = vpack.c.b16 %v1975, %v1967
        %v2224 = vpack.c.b16 %v1976, %v1968
        %v2225 = vpack.c.b16 %v1977, %v1969
        %v2226 = vpack.c.b16 %v1978, %v1970
        %v2227 = vpack.c.b16 %v1979, %v1971
        %v2228 = vpack.c.b16 %v1980, %v1972
        %v2229 = vpack.c.b16 %v1981, %v1973
        %v2230 = vpack.c.b16 %v1990, %v1982
        %v2231 = vpack.c.b16 %v1991, %v1983
        %v2232 = vpack.c.b16 %v1992, %v1984
        %v2233 = vpack.c.b16 %v1993, %v1985
        %v2234 = vpack.c.b16 %v1994, %v1986
        %v2235 = vpack.c.b16 %v1995, %v1987
        %v2236 = vpack.c.b16 %v1996, %v1988
        %v2237 = vpack.c.b16 %v1997, %v1989
        %v2238 = vpack.c.b16 %v2006, %v1998
        %v2239 = vpack.c.b16 %v2007, %v1999
        %v2240 = vpack.c.b16 %v2008, %v2000
        %v2241 = vpack.c.b16 %v2009, %v2001
        %v2242 = vpack.c.b16 %v2010, %v2002
        %v2243 = vpack.c.b16 %v2011, %v2003
        %v2244 = vpack.c.b16 %v2012, %v2004
        %v2245 = vpack.c.b16 %v2013, %v2005
        %v2246 = vpack.c.b16 %v2022, %v2014
        %v2247 = vpack.c.b16 %v2023, %v2015
        %v2248 = vpack.c.b16 %v2024, %v2016
        %v2249 = vpack.c.b16 %v2025, %v2017
        %v2250 = vpack.c.b16 %v2026, %v2018
        %v2251 = vpack.c.b16 %v2027, %v2019
        %v2252 = vpack.c.b16 %v2028, %v2020
        %v2253 = vpack.c.b16 %v2029, %v2021
        %v2254 = vpack.c.b16 %v2038, %v2030
        %v2255 = vpack.c.b16 %v2039, %v2031
        %v2256 = vpack.c.b16 %v2040, %v2032
        %v2257 = vpack.c.b16 %v2041, %v2033
        %v2258 = vpack.c.b16 %v2042, %v2034
        %v2259 = vpack.c.b16 %v2043, %v2035
        %v2260 = vpack.c.b16 %v2044, %v2036
        %v2261 = vpack.c.b16 %v2045, %v2037
        %v2262 = vpack.c.b16 %v2054, %v2046
        %v2263 = vpack.c.b16 %v2055, %v2047
        %v2264 = vpack.c.b16 %v2056, %v2048
        %v2265 = vpack.c.b16 %v2057, %v2049
        %v2266 = vpack.c.b16 %v2058, %v2050
        %v2267 = vpack.c.b16 %v2059, %v2051
        %v2268 = vpack.c.b16 %v2060, %v2052
        %v2269 = vpack.c.b16 %v2061, %v2053
        %v2270 = vpack.c.b16 %v2070, %v2062
        %v2271 = vpack.c.b16 %v2071, %v2063
        %v2272 = vpack.c.b16 %v2072, %v2064
        %v2273 = vpack.c.b16 %v2073, %v2065
        %v2274 = vpack.c.b16 %v2074, %v2066
        %v2275 = vpack.c.b16 %v2075, %v2067
        %v2276 = vpack.c.b16 %v2076, %v2068
        %v2277 = vpack.c.b16 %v2077, %v2069
        %v2278 = vpack.c.b16 %v2086, %v2078
        %v2279 = vpack.c.b16 %v2087, %v2079
        %v2280 = vpack.c.b16 %v2088, %v2080
        %v2281 = vpack.c.b16 %v2089, %v2081
        %v2282 = vpack.c.b16 %v2090, %v2082
        %v2283 = vpack.c.b16 %v2091, %v2083
        %v2284 = vpack.c.b16 %v2092, %v2084
        %v2285 = vpack.c.b16 %v2093, %v2085
        %v2286 = vpack.c.b16 %v2102, %v2094
        %v2287 = vpack.c.b16 %v2103, %v2095
        %v2288 = vpack.c.b16 %v2104, %v2096
        %v2289 = vpack.c.b16 %v2105, %v2097
        %v2290 = vpack.c.b16 %v2106, %v2098
        %v2291 = vpack.c.b16 %v2107, %v2099
        %v2292 = vpack.c.b16 %v2108, %v2100
        %v2293 = vpack.c.b16 %v2109, %v2101
        %v2294 = vpack.c.b16 %v2118, %v2110
        %v2295 = vpack.c.b16 %v2119, %v2111
        %v2296 = vpack.c.b16 %v2120, %v2112
        %v2297 = vpack.c.b16 %v2121, %v2113
        %v2298 = vpack.c.b16 %v2122, %v2114
        %v2299 = vpack.c.b16 %v2123, %v2115
        %v2300 = vpack.c.b16 %v2124, %v2116
        %v2301 = vpack.c.b16 %v2125, %v2117
        %v2302 = vpack.c.b16 %v2134, %v2126
        %v2303 = vpack.c.b16 %v2135, %v2127
        %v2304 = vpack.c.b16 %v2136, %v2128
        %v2305 = vpack.c.b16 %v2137, %v2129
        %v2306 = vpack.c.b16 %v2138, %v2130
        %v2307 = vpack.c.b16 %v2139, %v2131
        %v2308 = vpack.c.b16 %v2140, %v2132
        %v2309 = vpack.c.b16 %v2141, %v2133
        %v2310 = vpack.c.b16 %v2150, %v2142
        %v2311 = vpack.c.b16 %v2151, %v2143
        %v2312 = vpack.c.b16 %v2152, %v2144
        %v2313 = vpack.c.b16 %v2153, %v2145
        %v2314 = vpack.c.b16 %v2154, %v2146
        %v2315 = vpack.c.b16 %v2155, %v2147
        %v2316 = vpack.c.b16 %v2156, %v2148
        %v2317 = vpack.c.b16 %v2157, %v2149
        %v2318 = vpack.c.b16 %v2166, %v2158
        %v2319 = vpack.c.b16 %v2167, %v2159
        %v2320 = vpack.c.b16 %v2168, %v2160
        %v2321 = vpack.c.b16 %v2169, %v2161
        %v2322 = vpack.c.b16 %v2170, %v2162
        %v2323 = vpack.c.b16 %v2171, %v2163
        %v2324 = vpack.c.b16 %v2172, %v2164
        %v2325 = vpack.c.b16 %v2173, %v2165
        %v2326 = vpack.c.b16 %v2182, %v2174
        %v2327 = vpack.c.b16 %v2183, %v2175
        %v2328 = vpack.c.b16 %v2184, %v2176
        %v2329 = vpack.c.b16 %v2185, %v2177
        %v2330 = vpack.c.b16 %v2186, %v2178
        %v2331 = vpack.c.b16 %v2187, %v2179
        %v2332 = vpack.c.b16 %v2188, %v2180
        %v2333 = vpack.c.b16 %v2189, %v2181
        %v2334 = vpack.c.b16 %v2198, %v2190
        %v2335 = vpack.c.b16 %v2199, %v2191
        %v2336 = vpack.c.b16 %v2200, %v2192
        %v2337 = vpack.c.b16 %v2201, %v2193
        %v2338 = vpack.c.b16 %v2202, %v2194
        %v2339 = vpack.c.b16 %v2203, %v2195
        %v2340 = vpack.c.b16 %v2204, %v2196
        %v2341 = vpack.c.b16 %v2205, %v2197
        %v2342 = vpack.c.b16 %v2214, %v2206
        %v2343 = vpack.c.b16 %v2215, %v2207
        %v2344 = vpack.c.b16 %v2216, %v2208
        %v2345 = vpack.c.b16 %v2217, %v2209
        %v2346 = vpack.c.b16 %v2218, %v2210
        %v2347 = vpack.c.b16 %v2219, %v2211
        %v2348 = vpack.c.b16 %v2220, %v2212
        %v2349 = vpack.c.b16 %v2221, %v2213
        %2478 = vmatprep.subr.bf16.mxu0 %v2223
        %2479 = vmatpush1.bf16.msra.mxu0 %v2222
        %2480 = vmatprep.subr.bf16.mxu0 %v2231
        %2481 = vmatpush1.bf16.msra.mxu0 %v2230
        %2482 = vmatprep.subr.bf16.mxu0 %v2239
        %2483 = vmatpush1.bf16.msra.mxu0 %v2238
        %2484 = vmatprep.subr.bf16.mxu0 %v2247
        %2485 = vmatpush1.bf16.msra.mxu0 %v2246
        %2486 = vmatprep.subr.bf16.mxu0 %v2255
        %2487 = vmatpush1.bf16.msra.mxu0 %v2254
        %2488 = vmatprep.subr.bf16.mxu0 %v2263
        %2489 = vmatpush1.bf16.msra.mxu0 %v2262
        %2490 = vmatprep.subr.bf16.mxu0 %v2271
        %2491 = vmatpush1.bf16.msra.mxu0 %v2270
        %2492 = vmatprep.subr.bf16.mxu0 %v2279
        %2493 = vmatpush1.bf16.msra.mxu0 %v2278
        %2494 = vmatprep.subr.bf16.mxu0 %v2287
        %2495 = vmatpush1.bf16.msra.mxu0 %v2286
        %2496 = vmatprep.subr.bf16.mxu0 %v2295
        %2497 = vmatpush1.bf16.msra.mxu0 %v2294
        %2498 = vmatprep.subr.bf16.mxu0 %v2303
        %2499 = vmatpush1.bf16.msra.mxu0 %v2302
        %2500 = vmatprep.subr.bf16.mxu0 %v2311
        %2501 = vmatpush1.bf16.msra.mxu0 %v2310
        %2502 = vmatprep.subr.bf16.mxu0 %v2319
        %2503 = vmatpush1.bf16.msra.mxu0 %v2318
        %2504 = vmatprep.subr.bf16.mxu0 %v2327
        %2505 = vmatpush1.bf16.msra.mxu0 %v2326
        %2506 = vmatprep.subr.bf16.mxu0 %v2335
        %2507 = vmatpush1.bf16.msra.mxu0 %v2334
        %2508 = vmatprep.subr.bf16.mxu0 %v2343
        %2509 = vmatpush1.bf16.msra.mxu0 %v2342
        %2510 = vmatprep.mubr.bf16.mxu0 %v1837
        %2511 = vmatmul.mubr.bf16.gmra.mrb[0].mxu0 %v1836
        %v2512 = vpop.f32.mrb[0].mxu0
        %v2513 = vadd.f32 0.0, %v2512
        %v2514 = vpop.f32.mrb[0].mxu0
        %v2515 = vadd.f32 0.0, %v2514
        %v2516 = vpop.f32.mrb[0].mxu0
        %v2517 = vpop.f32.mrb[0].mxu0
        %2518 = vdwg.mxu0
        %2519 = vmatprep.subr.bf16.mxu0 %v2225
        %2520 = vmatpush1.bf16.msra.mxu0 %v2224
        %2521 = vmatprep.subr.bf16.mxu0 %v2233
        %2522 = vmatpush1.bf16.msra.mxu0 %v2232
        %2523 = vmatprep.subr.bf16.mxu0 %v2241
        %2524 = vmatpush1.bf16.msra.mxu0 %v2240
        %2525 = vmatprep.subr.bf16.mxu0 %v2249
        %2526 = vmatpush1.bf16.msra.mxu0 %v2248
        %2527 = vmatprep.subr.bf16.mxu0 %v2257
        %2528 = vmatpush1.bf16.msra.mxu0 %v2256
        %2529 = vmatprep.subr.bf16.mxu0 %v2265
        %2530 = vmatpush1.bf16.msra.mxu0 %v2264
        %2531 = vmatprep.subr.bf16.mxu0 %v2273
        %2532 = vmatpush1.bf16.msra.mxu0 %v2272
        %2533 = vmatprep.subr.bf16.mxu0 %v2281
        %2534 = vmatpush1.bf16.msra.mxu0 %v2280
        %2535 = vmatprep.subr.bf16.mxu0 %v2289
        %2536 = vmatpush1.bf16.msra.mxu0 %v2288
        %2537 = vmatprep.subr.bf16.mxu0 %v2297
        %2538 = vmatpush1.bf16.msra.mxu0 %v2296
        %2539 = vmatprep.subr.bf16.mxu0 %v2305
        %2540 = vmatpush1.bf16.msra.mxu0 %v2304
        %2541 = vmatprep.subr.bf16.mxu0 %v2313
        %2542 = vmatpush1.bf16.msra.mxu0 %v2312
        %2543 = vmatprep.subr.bf16.mxu0 %v2321
        %2544 = vmatpush1.bf16.msra.mxu0 %v2320
        %2545 = vmatprep.subr.bf16.mxu0 %v2329
        %2546 = vmatpush1.bf16.msra.mxu0 %v2328
        %2547 = vmatprep.subr.bf16.mxu0 %v2337
        %2548 = vmatpush1.bf16.msra.mxu0 %v2336
        %2549 = vmatprep.subr.bf16.mxu0 %v2345
        %2550 = vmatpush1.bf16.msra.mxu0 %v2344
        %2551 = vmatprep.mubr.bf16.mxu0 %v1837
        %2552 = vmatmul.mubr.bf16.gmra.mrb[0].mxu0 %v1836
        %v2553 = vpop.f32.mrb[0].mxu0
        %v2554 = vadd.f32 0.0, %v2553
        %v2555 = vpop.f32.mrb[0].mxu0
        %v2556 = vadd.f32 0.0, %v2555
        %v2557 = vpop.f32.mrb[0].mxu0
        %v2558 = vpop.f32.mrb[0].mxu0
        %2559 = vdwg.mxu0
        %2560 = vmatprep.subr.bf16.mxu0 %v2227
        %2561 = vmatpush1.bf16.msra.mxu0 %v2226
        %2562 = vmatprep.subr.bf16.mxu0 %v2235
        %2563 = vmatpush1.bf16.msra.mxu0 %v2234
        %2564 = vmatprep.subr.bf16.mxu0 %v2243
        %2565 = vmatpush1.bf16.msra.mxu0 %v2242
        %2566 = vmatprep.subr.bf16.mxu0 %v2251
        %2567 = vmatpush1.bf16.msra.mxu0 %v2250
        %2568 = vmatprep.subr.bf16.mxu0 %v2259
        %2569 = vmatpush1.bf16.msra.mxu0 %v2258
        %2570 = vmatprep.subr.bf16.mxu0 %v2267
        %2571 = vmatpush1.bf16.msra.mxu0 %v2266
        %2572 = vmatprep.subr.bf16.mxu0 %v2275
        %2573 = vmatpush1.bf16.msra.mxu0 %v2274
        %2574 = vmatprep.subr.bf16.mxu0 %v2283
        %2575 = vmatpush1.bf16.msra.mxu0 %v2282
        %2576 = vmatprep.subr.bf16.mxu0 %v2291
        %2577 = vmatpush1.bf16.msra.mxu0 %v2290
        %2578 = vmatprep.subr.bf16.mxu0 %v2299
        %2579 = vmatpush1.bf16.msra.mxu0 %v2298
        %2580 = vmatprep.subr.bf16.mxu0 %v2307
        %2581 = vmatpush1.bf16.msra.mxu0 %v2306
        %2582 = vmatprep.subr.bf16.mxu0 %v2315
        %2583 = vmatpush1.bf16.msra.mxu0 %v2314
        %2584 = vmatprep.subr.bf16.mxu0 %v2323
        %2585 = vmatpush1.bf16.msra.mxu0 %v2322
        %2586 = vmatprep.subr.bf16.mxu0 %v2331
        %2587 = vmatpush1.bf16.msra.mxu0 %v2330
        %2588 = vmatprep.subr.bf16.mxu0 %v2339
        %2589 = vmatpush1.bf16.msra.mxu0 %v2338
        %2590 = vmatprep.subr.bf16.mxu0 %v2347
        %2591 = vmatpush1.bf16.msra.mxu0 %v2346
        %2592 = vmatprep.mubr.bf16.mxu0 %v1837
        %2593 = vmatmul.mubr.bf16.gmra.mrb[0].mxu0 %v1836
        %v2594 = vpop.f32.mrb[0].mxu0
        %v2595 = vadd.f32 0.0, %v2594
        %v2596 = vpop.f32.mrb[0].mxu0
        %v2597 = vadd.f32 0.0, %v2596
        %v2598 = vpop.f32.mrb[0].mxu0
        %v2599 = vpop.f32.mrb[0].mxu0
        %2600 = vdwg.mxu0
        %2601 = vmatprep.subr.bf16.mxu0 %v2229
        %2602 = vmatpush1.bf16.msra.mxu0 %v2228
        %2603 = vmatprep.subr.bf16.mxu0 %v2237
        %2604 = vmatpush1.bf16.msra.mxu0 %v2236
        %2605 = vmatprep.subr.bf16.mxu0 %v2245
        %2606 = vmatpush1.bf16.msra.mxu0 %v2244
        %2607 = vmatprep.subr.bf16.mxu0 %v2253
        %2608 = vmatpush1.bf16.msra.mxu0 %v2252
        %2609 = vmatprep.subr.bf16.mxu0 %v2261
        %2610 = vmatpush1.bf16.msra.mxu0 %v2260
        %2611 = vmatprep.subr.bf16.mxu0 %v2269
        %2612 = vmatpush1.bf16.msra.mxu0 %v2268
        %2613 = vmatprep.subr.bf16.mxu0 %v2277
        %2614 = vmatpush1.bf16.msra.mxu0 %v2276
        %2615 = vmatprep.subr.bf16.mxu0 %v2285
        %2616 = vmatpush1.bf16.msra.mxu0 %v2284
        %2617 = vmatprep.subr.bf16.mxu0 %v2293
        %2618 = vmatpush1.bf16.msra.mxu0 %v2292
        %2619 = vmatprep.subr.bf16.mxu0 %v2301
        %2620 = vmatpush1.bf16.msra.mxu0 %v2300
        %2621 = vmatprep.subr.bf16.mxu0 %v2309
        %2622 = vmatpush1.bf16.msra.mxu0 %v2308
        %2623 = vmatprep.subr.bf16.mxu0 %v2317
        %2624 = vmatpush1.bf16.msra.mxu0 %v2316
        %2625 = vmatprep.subr.bf16.mxu0 %v2325
        %2626 = vmatpush1.bf16.msra.mxu0 %v2324
        %2627 = vmatprep.subr.bf16.mxu0 %v2333
        %2628 = vmatpush1.bf16.msra.mxu0 %v2332
        %2629 = vmatprep.subr.bf16.mxu0 %v2341
        %2630 = vmatpush1.bf16.msra.mxu0 %v2340
        %2631 = vmatprep.subr.bf16.mxu0 %v2349
        %2632 = vmatpush1.bf16.msra.mxu0 %v2348
        %2633 = vmatprep.mubr.bf16.mxu0 %v1837
        %2634 = vmatmul.mubr.bf16.gmra.mrb[0].mxu0 %v1836
        %v2635 = vpop.f32.mrb[0].mxu0
        %v2636 = vadd.f32 0.0, %v2635
        %v2637 = vpop.f32.mrb[0].mxu0
        %v2638 = vadd.f32 0.0, %v2637
        %v2639 = vpop.f32.mrb[0].mxu0
        %v2640 = vpop.f32.mrb[0].mxu0
        %2641 = vdwg.mxu0
        %v2642 = vadd.f32 %v1581, %v2513
        %v2643 = vadd.f32 %v1583, %v2515
        %v2644 = vadd.f32 %v1642, %v2554
        %v2645 = vadd.f32 %v1644, %v2556
        %v2646 = vadd.f32 %v1703, %v2595
        %v2647 = vadd.f32 %v1705, %v2597
        %v2648 = vadd.f32 %v1764, %v2636
        %v2649 = vadd.f32 %v1766, %v2638
        %v2650 = vxor.u32 %v2642, 2147483648
        %v2651 = vxor.u32 %v2643, 2147483648
        %v2652 = vxor.u32 %v2644, 2147483648
        %v2653 = vxor.u32 %v2645, 2147483648
        %v2654 = vxor.u32 %v2646, 2147483648
        %v2655 = vxor.u32 %v2647, 2147483648
        %v2656 = vmul.f32 %v2650, 1.442695
        %v2657 = vpow.pop %v2656
        %v2658 = vmul.f32 %v2651, 1.442695
        %v2659 = vpow.pop %v2658
        %v2660 = vmul.f32 %v2652, 1.442695
        %v2661 = vpow.pop %v2660
        %v2662 = vmul.f32 %v2653, 1.442695
        %v2663 = vpow.pop %v2662
        %v2664 = vmul.f32 %v2654, 1.442695
        %v2665 = vpow.pop %v2664
        %v2666 = vmul.f32 %v2655, 1.442695
        %v2667 = vpow.pop %v2666
        %v2668 = vadd.f32 %v2657, 1.0
        %v2669 = vadd.f32 %v2659, 1.0
        %v2670 = vadd.f32 %v2661, 1.0
        %v2671 = vadd.f32 %v2663, 1.0
        %v2672 = vadd.f32 %v2665, 1.0
        %v2673 = vadd.f32 %v2667, 1.0
        %v2674 = vrcp.pop %v2668
        %v2675 = vmul.f32 1.0, %v2674
        %v2676 = vrcp.pop %v2669
        %v2677 = vmul.f32 1.0, %v2676
        %v2678 = vrcp.pop %v2670
        %v2679 = vmul.f32 1.0, %v2678
        %v2680 = vrcp.pop %v2671
        %v2681 = vmul.f32 1.0, %v2680
        %v2682 = vrcp.pop %v2672
        %v2683 = vmul.f32 1.0, %v2682
        %v2684 = vrcp.pop %v2673
        %v2685 = vmul.f32 1.0, %v2684
        %v2686 = vtanh.pop %v2648
        %v2687 = vtanh.pop %v2649
        %v2688 = vmul.f32 %v2679, %v1828
        %v2689 = vmul.f32 %v2681, %v1829
        %v2690 = vmul.f32 %v2675, %v2686
        %v2691 = vmul.f32 %v2677, %v2687
        %v2692 = vadd.f32 %v2688, %v2690
        %v2693 = vadd.f32 %v2689, %v2691
        %v2694 = vtanh.pop %v2692
        %v2695 = vtanh.pop %v2693
        %v2696 = vmul.f32 %v2683, %v2694
        %v2697 = vmul.f32 %v2685, %v2695
        %s2698 = scalar_lea.vmem [#allocation2], 16
        %2699 = vst [vmem:[%s2698] sm:$0xff] %v2696
        %2700 = vst [vmem:[%s2698 + $0x8] sm:$0xff] %v2697
        %v2701 = vpack.c.bf16 %v2696, %v2696
        %v2702 = vpack.c.bf16 %v2697, %v2697
        %2703 = vmatprep.subr.bf16.mxu0 %v2223
        %2704 = vmatpush1.bf16.msra.mxu0 %v2222
        %2705 = vmatprep.subr.bf16.mxu0 %v2231
        %2706 = vmatpush1.bf16.msra.mxu0 %v2230
        %2707 = vmatprep.subr.bf16.mxu0 %v2239
        %2708 = vmatpush1.bf16.msra.mxu0 %v2238
        %2709 = vmatprep.subr.bf16.mxu0 %v2247
        %2710 = vmatpush1.bf16.msra.mxu0 %v2246
        %2711 = vmatprep.subr.bf16.mxu0 %v2255
        %2712 = vmatpush1.bf16.msra.mxu0 %v2254
        %2713 = vmatprep.subr.bf16.mxu0 %v2263
        %2714 = vmatpush1.bf16.msra.mxu0 %v2262
        %2715 = vmatprep.subr.bf16.mxu0 %v2271
        %2716 = vmatpush1.bf16.msra.mxu0 %v2270
        %2717 = vmatprep.subr.bf16.mxu0 %v2279
        %2718 = vmatpush1.bf16.msra.mxu0 %v2278
        %2719 = vmatprep.subr.bf16.mxu0 %v2287
        %2720 = vmatpush1.bf16.msra.mxu0 %v2286
        %2721 = vmatprep.subr.bf16.mxu0 %v2295
        %2722 = vmatpush1.bf16.msra.mxu0 %v2294
        %2723 = vmatprep.subr.bf16.mxu0 %v2303
        %2724 = vmatpush1.bf16.msra.mxu0 %v2302
        %2725 = vmatprep.subr.bf16.mxu0 %v2311
        %2726 = vmatpush1.bf16.msra.mxu0 %v2310
        %2727 = vmatprep.subr.bf16.mxu0 %v2319
        %2728 = vmatpush1.bf16.msra.mxu0 %v2318
        %2729 = vmatprep.subr.bf16.mxu0 %v2327
        %2730 = vmatpush1.bf16.msra.mxu0 %v2326
        %2731 = vmatprep.subr.bf16.mxu0 %v2335
        %2732 = vmatpush1.bf16.msra.mxu0 %v2334
        %2733 = vmatprep.subr.bf16.mxu0 %v2343
        %2734 = vmatpush1.bf16.msra.mxu0 %v2342
        %2735 = vmatprep.mubr.bf16.mxu0 %v2702
        %2736 = vmatmul.mubr.bf16.gmra.mrb[0].mxu0 %v2701
        %v2737 = vpop.f32.mrb[0].mxu0
        %v2738 = vadd.f32 0.0, %v2737
        %v2739 = vpop.f32.mrb[0].mxu0
        %v2740 = vadd.f32 0.0, %v2739
        %v2741 = vpop.f32.mrb[0].mxu0
        %v2742 = vpop.f32.mrb[0].mxu0
        %2743 = vdwg.mxu0
        %2744 = vmatprep.subr.bf16.mxu0 %v2225
        %2745 = vmatpush1.bf16.msra.mxu0 %v2224
        %2746 = vmatprep.subr.bf16.mxu0 %v2233
        %2747 = vmatpush1.bf16.msra.mxu0 %v2232
        %2748 = vmatprep.subr.bf16.mxu0 %v2241
        %2749 = vmatpush1.bf16.msra.mxu0 %v2240
        %2750 = vmatprep.subr.bf16.mxu0 %v2249
        %2751 = vmatpush1.bf16.msra.mxu0 %v2248
        %2752 = vmatprep.subr.bf16.mxu0 %v2257
        %2753 = vmatpush1.bf16.msra.mxu0 %v2256
        %2754 = vmatprep.subr.bf16.mxu0 %v2265
        %2755 = vmatpush1.bf16.msra.mxu0 %v2264
        %2756 = vmatprep.subr.bf16.mxu0 %v2273
        %2757 = vmatpush1.bf16.msra.mxu0 %v2272
        %2758 = vmatprep.subr.bf16.mxu0 %v2281
        %2759 = vmatpush1.bf16.msra.mxu0 %v2280
        %2760 = vmatprep.subr.bf16.mxu0 %v2289
        %2761 = vmatpush1.bf16.msra.mxu0 %v2288
        %2762 = vmatprep.subr.bf16.mxu0 %v2297
        %2763 = vmatpush1.bf16.msra.mxu0 %v2296
        %2764 = vmatprep.subr.bf16.mxu0 %v2305
        %2765 = vmatpush1.bf16.msra.mxu0 %v2304
        %2766 = vmatprep.subr.bf16.mxu0 %v2313
        %2767 = vmatpush1.bf16.msra.mxu0 %v2312
        %2768 = vmatprep.subr.bf16.mxu0 %v2321
        %2769 = vmatpush1.bf16.msra.mxu0 %v2320
        %2770 = vmatprep.subr.bf16.mxu0 %v2329
        %2771 = vmatpush1.bf16.msra.mxu0 %v2328
        %2772 = vmatprep.subr.bf16.mxu0 %v2337
        %2773 = vmatpush1.bf16.msra.mxu0 %v2336
        %2774 = vmatprep.subr.bf16.mxu0 %v2345
        %2775 = vmatpush1.bf16.msra.mxu0 %v2344
        %2776 = vmatprep.mubr.bf16.mxu0 %v2702
        %2777 = vmatmul.mubr.bf16.gmra.mrb[0].mxu0 %v2701
        %v2778 = vpop.f32.mrb[0].mxu0
        %v2779 = vadd.f32 0.0, %v2778
        %v2780 = vpop.f32.mrb[0].mxu0
        %v2781 = vadd.f32 0.0, %v2780
        %v2782 = vpop.f32.mrb[0].mxu0
        %v2783 = vpop.f32.mrb[0].mxu0
        %2784 = vdwg.mxu0
        %2785 = vmatprep.subr.bf16.mxu0 %v2227
        %2786 = vmatpush1.bf16.msra.mxu0 %v2226
        %2787 = vmatprep.subr.bf16.mxu0 %v2235
        %2788 = vmatpush1.bf16.msra.mxu0 %v2234
        %2789 = vmatprep.subr.bf16.mxu0 %v2243
        %2790 = vmatpush1.bf16.msra.mxu0 %v2242
        %2791 = vmatprep.subr.bf16.mxu0 %v2251
        %2792 = vmatpush1.bf16.msra.mxu0 %v2250
        %2793 = vmatprep.subr.bf16.mxu0 %v2259
        %2794 = vmatpush1.bf16.msra.mxu0 %v2258
        %2795 = vmatprep.subr.bf16.mxu0 %v2267
        %2796 = vmatpush1.bf16.msra.mxu0 %v2266
        %2797 = vmatprep.subr.bf16.mxu0 %v2275
        %2798 = vmatpush1.bf16.msra.mxu0 %v2274
        %2799 = vmatprep.subr.bf16.mxu0 %v2283
        %2800 = vmatpush1.bf16.msra.mxu0 %v2282
        %2801 = vmatprep.subr.bf16.mxu0 %v2291
        %2802 = vmatpush1.bf16.msra.mxu0 %v2290
        %2803 = vmatprep.subr.bf16.mxu0 %v2299
        %2804 = vmatpush1.bf16.msra.mxu0 %v2298
        %2805 = vmatprep.subr.bf16.mxu0 %v2307
        %2806 = vmatpush1.bf16.msra.mxu0 %v2306
        %2807 = vmatprep.subr.bf16.mxu0 %v2315
        %2808 = vmatpush1.bf16.msra.mxu0 %v2314
        %2809 = vmatprep.subr.bf16.mxu0 %v2323
        %2810 = vmatpush1.bf16.msra.mxu0 %v2322
        %2811 = vmatprep.subr.bf16.mxu0 %v2331
        %2812 = vmatpush1.bf16.msra.mxu0 %v2330
        %2813 = vmatprep.subr.bf16.mxu0 %v2339
        %2814 = vmatpush1.bf16.msra.mxu0 %v2338
        %2815 = vmatprep.subr.bf16.mxu0 %v2347
        %2816 = vmatpush1.bf16.msra.mxu0 %v2346
        %2817 = vmatprep.mubr.bf16.mxu0 %v2702
        %2818 = vmatmul.mubr.bf16.gmra.mrb[0].mxu0 %v2701
        %v2819 = vpop.f32.mrb[0].mxu0
        %v2820 = vadd.f32 0.0, %v2819
        %v2821 = vpop.f32.mrb[0].mxu0
        %v2822 = vadd.f32 0.0, %v2821
        %v2823 = vpop.f32.mrb[0].mxu0
        %v2824 = vpop.f32.mrb[0].mxu0
        %2825 = vdwg.mxu0
        %2826 = vmatprep.subr.bf16.mxu0 %v2229
        %2827 = vmatpush1.bf16.msra.mxu0 %v2228
        %2828 = vmatprep.subr.bf16.mxu0 %v2237
        %2829 = vmatpush1.bf16.msra.mxu0 %v2236
        %2830 = vmatprep.subr.bf16.mxu0 %v2245
        %2831 = vmatpush1.bf16.msra.mxu0 %v2244
        %2832 = vmatprep.subr.bf16.mxu0 %v2253
        %2833 = vmatpush1.bf16.msra.mxu0 %v2252
        %2834 = vmatprep.subr.bf16.mxu0 %v2261
        %2835 = vmatpush1.bf16.msra.mxu0 %v2260
        %2836 = vmatprep.subr.bf16.mxu0 %v2269
        %2837 = vmatpush1.bf16.msra.mxu0 %v2268
        %2838 = vmatprep.subr.bf16.mxu0 %v2277
        %2839 = vmatpush1.bf16.msra.mxu0 %v2276
        %2840 = vmatprep.subr.bf16.mxu0 %v2285
        %2841 = vmatpush1.bf16.msra.mxu0 %v2284
        %2842 = vmatprep.subr.bf16.mxu0 %v2293
        %2843 = vmatpush1.bf16.msra.mxu0 %v2292
        %2844 = vmatprep.subr.bf16.mxu0 %v2301
        %2845 = vmatpush1.bf16.msra.mxu0 %v2300
        %2846 = vmatprep.subr.bf16.mxu0 %v2309
        %2847 = vmatpush1.bf16.msra.mxu0 %v2308
        %2848 = vmatprep.subr.bf16.mxu0 %v2317
        %2849 = vmatpush1.bf16.msra.mxu0 %v2316
        %2850 = vmatprep.subr.bf16.mxu0 %v2325
        %2851 = vmatpush1.bf16.msra.mxu0 %v2324
        %2852 = vmatprep.subr.bf16.mxu0 %v2333
        %2853 = vmatpush1.bf16.msra.mxu0 %v2332
        %2854 = vmatprep.subr.bf16.mxu0 %v2341
        %2855 = vmatpush1.bf16.msra.mxu0 %v2340
        %2856 = vmatprep.subr.bf16.mxu0 %v2349
        %2857 = vmatpush1.bf16.msra.mxu0 %v2348
        %2858 = vmatprep.mubr.bf16.mxu0 %v2702
        %2859 = vmatmul.mubr.bf16.gmra.mrb[0].mxu0 %v2701
        %v2860 = vpop.f32.mrb[0].mxu0
        %v2861 = vadd.f32 0.0, %v2860
        %v2862 = vpop.f32.mrb[0].mxu0
        %v2863 = vadd.f32 0.0, %v2862
        %v2864 = vpop.f32.mrb[0].mxu0
        %v2865 = vpop.f32.mrb[0].mxu0
        %2866 = vdwg.mxu0
        %v2867 = vadd.f32 %v1587, %v2738
        %v2868 = vadd.f32 %v1589, %v2740
        %v2869 = vadd.f32 %v1648, %v2779
        %v2870 = vadd.f32 %v1650, %v2781
        %v2871 = vadd.f32 %v1709, %v2820
        %v2872 = vadd.f32 %v1711, %v2822
        %v2873 = vadd.f32 %v1770, %v2861
        %v2874 = vadd.f32 %v1772, %v2863
        %v2875 = vxor.u32 %v2867, 2147483648
        %v2876 = vxor.u32 %v2868, 2147483648
        %v2877 = vxor.u32 %v2869, 2147483648
        %v2878 = vxor.u32 %v2870, 2147483648
        %v2879 = vxor.u32 %v2871, 2147483648
        %v2880 = vxor.u32 %v2872, 2147483648
        %v2881 = vmul.f32 %v2875, 1.442695
        %v2882 = vpow.pop %v2881
        %v2883 = vmul.f32 %v2876, 1.442695
        %v2884 = vpow.pop %v2883
        %v2885 = vmul.f32 %v2877, 1.442695
        %v2886 = vpow.pop %v2885
        %v2887 = vmul.f32 %v2878, 1.442695
        %v2888 = vpow.pop %v2887
        %v2889 = vmul.f32 %v2879, 1.442695
        %v2890 = vpow.pop %v2889
        %v2891 = vmul.f32 %v2880, 1.442695
        %v2892 = vpow.pop %v2891
        %v2893 = vadd.f32 %v2882, 1.0
        %v2894 = vadd.f32 %v2884, 1.0
        %v2895 = vadd.f32 %v2886, 1.0
        %v2896 = vadd.f32 %v2888, 1.0
        %v2897 = vadd.f32 %v2890, 1.0
        %v2898 = vadd.f32 %v2892, 1.0
        %v2899 = vrcp.pop %v2893
        %v2900 = vmul.f32 1.0, %v2899
        %v2901 = vrcp.pop %v2894
        %v2902 = vmul.f32 1.0, %v2901
        %v2903 = vrcp.pop %v2895
        %v2904 = vmul.f32 1.0, %v2903
        %v2905 = vrcp.pop %v2896
        %v2906 = vmul.f32 1.0, %v2905
        %v2907 = vrcp.pop %v2897
        %v2908 = vmul.f32 1.0, %v2907
        %v2909 = vrcp.pop %v2898
        %v2910 = vmul.f32 1.0, %v2909
        %v2911 = vtanh.pop %v2873
        %v2912 = vtanh.pop %v2874
        %v2913 = vmul.f32 %v2904, %v2692
        %v2914 = vmul.f32 %v2906, %v2693
        %v2915 = vmul.f32 %v2900, %v2911
        %v2916 = vmul.f32 %v2902, %v2912
        %v2917 = vadd.f32 %v2913, %v2915
        %v2918 = vadd.f32 %v2914, %v2916
        %v2919 = vtanh.pop %v2917
        %v2920 = vtanh.pop %v2918
        %v2921 = vmul.f32 %v2908, %v2919
        %v2922 = vmul.f32 %v2910, %v2920
        %s2923 = scalar_lea.vmem [#allocation2], 32
        %2924 = vst [vmem:[%s2923] sm:$0xff] %v2921
        %2925 = vst [vmem:[%s2923 + $0x8] sm:$0xff] %v2922
        %v2926 = vpack.c.bf16 %v2921, %v2921
        %v2927 = vpack.c.bf16 %v2922, %v2922
        %2928 = vmatprep.subr.bf16.mxu0 %v2223
        %2929 = vmatpush1.bf16.msra.mxu0 %v2222
        %2930 = vmatprep.subr.bf16.mxu0 %v2231
        %2931 = vmatpush1.bf16.msra.mxu0 %v2230
        %2932 = vmatprep.subr.bf16.mxu0 %v2239
        %2933 = vmatpush1.bf16.msra.mxu0 %v2238
        %2934 = vmatprep.subr.bf16.mxu0 %v2247
        %2935 = vmatpush1.bf16.msra.mxu0 %v2246
        %2936 = vmatprep.subr.bf16.mxu0 %v2255
        %2937 = vmatpush1.bf16.msra.mxu0 %v2254
        %2938 = vmatprep.subr.bf16.mxu0 %v2263
        %2939 = vmatpush1.bf16.msra.mxu0 %v2262
        %2940 = vmatprep.subr.bf16.mxu0 %v2271
        %2941 = vmatpush1.bf16.msra.mxu0 %v2270
        %2942 = vmatprep.subr.bf16.mxu0 %v2279
        %2943 = vmatpush1.bf16.msra.mxu0 %v2278
        %2944 = vmatprep.subr.bf16.mxu0 %v2287
        %2945 = vmatpush1.bf16.msra.mxu0 %v2286
        %2946 = vmatprep.subr.bf16.mxu0 %v2295
        %2947 = vmatpush1.bf16.msra.mxu0 %v2294
        %2948 = vmatprep.subr.bf16.mxu0 %v2303
        %2949 = vmatpush1.bf16.msra.mxu0 %v2302
        %2950 = vmatprep.subr.bf16.mxu0 %v2311
        %2951 = vmatpush1.bf16.msra.mxu0 %v2310
        %2952 = vmatprep.subr.bf16.mxu0 %v2319
        %2953 = vmatpush1.bf16.msra.mxu0 %v2318
        %2954 = vmatprep.subr.bf16.mxu0 %v2327
        %2955 = vmatpush1.bf16.msra.mxu0 %v2326
        %2956 = vmatprep.subr.bf16.mxu0 %v2335
        %2957 = vmatpush1.bf16.msra.mxu0 %v2334
        %2958 = vmatprep.subr.bf16.mxu0 %v2343
        %2959 = vmatpush1.bf16.msra.mxu0 %v2342
        %2960 = vmatprep.mubr.bf16.mxu0 %v2927
        %2961 = vmatmul.mubr.bf16.gmra.mrb[0].mxu0 %v2926
        %v2962 = vpop.f32.mrb[0].mxu0
        %v2963 = vadd.f32 0.0, %v2962
        %v2964 = vpop.f32.mrb[0].mxu0
        %v2965 = vadd.f32 0.0, %v2964
        %v2966 = vpop.f32.mrb[0].mxu0
        %v2967 = vpop.f32.mrb[0].mxu0
        %2968 = vdwg.mxu0
        %2969 = vmatprep.subr.bf16.mxu0 %v2225
        %2970 = vmatpush1.bf16.msra.mxu0 %v2224
        %2971 = vmatprep.subr.bf16.mxu0 %v2233
        %2972 = vmatpush1.bf16.msra.mxu0 %v2232
        %2973 = vmatprep.subr.bf16.mxu0 %v2241
        %2974 = vmatpush1.bf16.msra.mxu0 %v2240
        %2975 = vmatprep.subr.bf16.mxu0 %v2249
        %2976 = vmatpush1.bf16.msra.mxu0 %v2248
        %2977 = vmatprep.subr.bf16.mxu0 %v2257
        %2978 = vmatpush1.bf16.msra.mxu0 %v2256
        %2979 = vmatprep.subr.bf16.mxu0 %v2265
        %2980 = vmatpush1.bf16.msra.mxu0 %v2264
        %2981 = vmatprep.subr.bf16.mxu0 %v2273
        %2982 = vmatpush1.bf16.msra.mxu0 %v2272
        %2983 = vmatprep.subr.bf16.mxu0 %v2281
        %2984 = vmatpush1.bf16.msra.mxu0 %v2280
        %2985 = vmatprep.subr.bf16.mxu0 %v2289
        %2986 = vmatpush1.bf16.msra.mxu0 %v2288
        %2987 = vmatprep.subr.bf16.mxu0 %v2297
        %2988 = vmatpush1.bf16.msra.mxu0 %v2296
        %2989 = vmatprep.subr.bf16.mxu0 %v2305
        %2990 = vmatpush1.bf16.msra.mxu0 %v2304
        %2991 = vmatprep.subr.bf16.mxu0 %v2313
        %2992 = vmatpush1.bf16.msra.mxu0 %v2312
        %2993 = vmatprep.subr.bf16.mxu0 %v2321
        %2994 = vmatpush1.bf16.msra.mxu0 %v2320
        %2995 = vmatprep.subr.bf16.mxu0 %v2329
        %2996 = vmatpush1.bf16.msra.mxu0 %v2328
        %2997 = vmatprep.subr.bf16.mxu0 %v2337
        %2998 = vmatpush1.bf16.msra.mxu0 %v2336
        %2999 = vmatprep.subr.bf16.mxu0 %v2345
        %3000 = vmatpush1.bf16.msra.mxu0 %v2344
        %3001 = vmatprep.mubr.bf16.mxu0 %v2927
        %3002 = vmatmul.mubr.bf16.gmra.mrb[0].mxu0 %v2926
        %v3003 = vpop.f32.mrb[0].mxu0
        %v3004 = vadd.f32 0.0, %v3003
        %v3005 = vpop.f32.mrb[0].mxu0
        %v3006 = vadd.f32 0.0, %v3005
        %v3007 = vpop.f32.mrb[0].mxu0
        %v3008 = vpop.f32.mrb[0].mxu0
        %3009 = vdwg.mxu0
        %3010 = vmatprep.subr.bf16.mxu0 %v2227
        %3011 = vmatpush1.bf16.msra.mxu0 %v2226
        %3012 = vmatprep.subr.bf16.mxu0 %v2235
        %3013 = vmatpush1.bf16.msra.mxu0 %v2234
        %3014 = vmatprep.subr.bf16.mxu0 %v2243
        %3015 = vmatpush1.bf16.msra.mxu0 %v2242
        %3016 = vmatprep.subr.bf16.mxu0 %v2251
        %3017 = vmatpush1.bf16.msra.mxu0 %v2250
        %3018 = vmatprep.subr.bf16.mxu0 %v2259
        %3019 = vmatpush1.bf16.msra.mxu0 %v2258
        %3020 = vmatprep.subr.bf16.mxu0 %v2267
        %3021 = vmatpush1.bf16.msra.mxu0 %v2266
        %3022 = vmatprep.subr.bf16.mxu0 %v2275
        %3023 = vmatpush1.bf16.msra.mxu0 %v2274
        %3024 = vmatprep.subr.bf16.mxu0 %v2283
        %3025 = vmatpush1.bf16.msra.mxu0 %v2282
        %3026 = vmatprep.subr.bf16.mxu0 %v2291
        %3027 = vmatpush1.bf16.msra.mxu0 %v2290
        %3028 = vmatprep.subr.bf16.mxu0 %v2299
        %3029 = vmatpush1.bf16.msra.mxu0 %v2298
        %3030 = vmatprep.subr.bf16.mxu0 %v2307
        %3031 = vmatpush1.bf16.msra.mxu0 %v2306
        %3032 = vmatprep.subr.bf16.mxu0 %v2315
        %3033 = vmatpush1.bf16.msra.mxu0 %v2314
        %3034 = vmatprep.subr.bf16.mxu0 %v2323
        %3035 = vmatpush1.bf16.msra.mxu0 %v2322
        %3036 = vmatprep.subr.bf16.mxu0 %v2331
        %3037 = vmatpush1.bf16.msra.mxu0 %v2330
        %3038 = vmatprep.subr.bf16.mxu0 %v2339
        %3039 = vmatpush1.bf16.msra.mxu0 %v2338
        %3040 = vmatprep.subr.bf16.mxu0 %v2347
        %3041 = vmatpush1.bf16.msra.mxu0 %v2346
        %3042 = vmatprep.mubr.bf16.mxu0 %v2927
        %3043 = vmatmul.mubr.bf16.gmra.mrb[0].mxu0 %v2926
        %v3044 = vpop.f32.mrb[0].mxu0
        %v3045 = vadd.f32 0.0, %v3044
        %v3046 = vpop.f32.mrb[0].mxu0
        %v3047 = vadd.f32 0.0, %v3046
        %v3048 = vpop.f32.mrb[0].mxu0
        %v3049 = vpop.f32.mrb[0].mxu0
        %3050 = vdwg.mxu0
        %3051 = vmatprep.subr.bf16.mxu0 %v2229
        %3052 = vmatpush1.bf16.msra.mxu0 %v2228
        %3053 = vmatprep.subr.bf16.mxu0 %v2237
        %3054 = vmatpush1.bf16.msra.mxu0 %v2236
        %3055 = vmatprep.subr.bf16.mxu0 %v2245
        %3056 = vmatpush1.bf16.msra.mxu0 %v2244
        %3057 = vmatprep.subr.bf16.mxu0 %v2253
        %3058 = vmatpush1.bf16.msra.mxu0 %v2252
        %3059 = vmatprep.subr.bf16.mxu0 %v2261
        %3060 = vmatpush1.bf16.msra.mxu0 %v2260
        %3061 = vmatprep.subr.bf16.mxu0 %v2269
        %3062 = vmatpush1.bf16.msra.mxu0 %v2268
        %3063 = vmatprep.subr.bf16.mxu0 %v2277
        %3064 = vmatpush1.bf16.msra.mxu0 %v2276
        %3065 = vmatprep.subr.bf16.mxu0 %v2285
        %3066 = vmatpush1.bf16.msra.mxu0 %v2284
        %3067 = vmatprep.subr.bf16.mxu0 %v2293
        %3068 = vmatpush1.bf16.msra.mxu0 %v2292
        %3069 = vmatprep.subr.bf16.mxu0 %v2301
        %3070 = vmatpush1.bf16.msra.mxu0 %v2300
        %3071 = vmatprep.subr.bf16.mxu0 %v2309
        %3072 = vmatpush1.bf16.msra.mxu0 %v2308
        %3073 = vmatprep.subr.bf16.mxu0 %v2317
        %3074 = vmatpush1.bf16.msra.mxu0 %v2316
        %3075 = vmatprep.subr.bf16.mxu0 %v2325
        %3076 = vmatpush1.bf16.msra.mxu0 %v2324
        %3077 = vmatprep.subr.bf16.mxu0 %v2333
        %3078 = vmatpush1.bf16.msra.mxu0 %v2332
        %3079 = vmatprep.subr.bf16.mxu0 %v2341
        %3080 = vmatpush1.bf16.msra.mxu0 %v2340
        %3081 = vmatprep.subr.bf16.mxu0 %v2349
        %3082 = vmatpush1.bf16.msra.mxu0 %v2348
        %3083 = vmatprep.mubr.bf16.mxu0 %v2927
        %3084 = vmatmul.mubr.bf16.gmra.mrb[0].mxu0 %v2926
        %v3085 = vpop.f32.mrb[0].mxu0
        %v3086 = vadd.f32 0.0, %v3085
        %v3087 = vpop.f32.mrb[0].mxu0
        %v3088 = vadd.f32 0.0, %v3087
        %v3089 = vpop.f32.mrb[0].mxu0
        %v3090 = vpop.f32.mrb[0].mxu0
        %3091 = vdwg.mxu0
        %v3092 = vadd.f32 %v1591, %v2963
        %v3093 = vadd.f32 %v1593, %v2965
        %v3094 = vadd.f32 %v1652, %v3004
        %v3095 = vadd.f32 %v1654, %v3006
        %v3096 = vadd.f32 %v1713, %v3045
        %v3097 = vadd.f32 %v1715, %v3047
        %v3098 = vadd.f32 %v1774, %v3086
        %v3099 = vadd.f32 %v1776, %v3088
        %v3100 = vxor.u32 %v3092, 2147483648
        %v3101 = vxor.u32 %v3093, 2147483648
        %v3102 = vxor.u32 %v3094, 2147483648
        %v3103 = vxor.u32 %v3095, 2147483648
        %v3104 = vxor.u32 %v3096, 2147483648
        %v3105 = vxor.u32 %v3097, 2147483648
        %v3106 = vmul.f32 %v3100, 1.442695
        %v3107 = vpow.pop %v3106
        %v3108 = vmul.f32 %v3101, 1.442695
        %v3109 = vpow.pop %v3108
        %v3110 = vmul.f32 %v3102, 1.442695
        %v3111 = vpow.pop %v3110
        %v3112 = vmul.f32 %v3103, 1.442695
        %v3113 = vpow.pop %v3112
        %v3114 = vmul.f32 %v3104, 1.442695
        %v3115 = vpow.pop %v3114
        %v3116 = vmul.f32 %v3105, 1.442695
        %v3117 = vpow.pop %v3116
        %v3118 = vadd.f32 %v3107, 1.0
        %v3119 = vadd.f32 %v3109, 1.0
        %v3120 = vadd.f32 %v3111, 1.0
        %v3121 = vadd.f32 %v3113, 1.0
        %v3122 = vadd.f32 %v3115, 1.0
        %v3123 = vadd.f32 %v3117, 1.0
        %v3124 = vrcp.pop %v3118
        %v3125 = vmul.f32 1.0, %v3124
        %v3126 = vrcp.pop %v3119
        %v3127 = vmul.f32 1.0, %v3126
        %v3128 = vrcp.pop %v3120
        %v3129 = vmul.f32 1.0, %v3128
        %v3130 = vrcp.pop %v3121
        %v3131 = vmul.f32 1.0, %v3130
        %v3132 = vrcp.pop %v3122
        %v3133 = vmul.f32 1.0, %v3132
        %v3134 = vrcp.pop %v3123
        %v3135 = vmul.f32 1.0, %v3134
        %v3136 = vtanh.pop %v3098
        %v3137 = vtanh.pop %v3099
        %v3138 = vmul.f32 %v3129, %v2917
        %v3139 = vmul.f32 %v3131, %v2918
        %v3140 = vmul.f32 %v3125, %v3136
        %v3141 = vmul.f32 %v3127, %v3137
        %v3142 = vadd.f32 %v3138, %v3140
        %v3143 = vadd.f32 %v3139, %v3141
        %v3144 = vtanh.pop %v3142
        %v3145 = vtanh.pop %v3143
        %v3146 = vmul.f32 %v3133, %v3144
        %v3147 = vmul.f32 %v3135, %v3145
        %s3148 = scalar_lea.vmem [#allocation2], 48
        %3149 = vst [vmem:[%s3148] sm:$0xff] %v3146
        %3150 = vst [vmem:[%s3148 + $0x8] sm:$0xff] %v3147
        %v3151 = vpack.c.bf16 %v3146, %v3146
        %v3152 = vpack.c.bf16 %v3147, %v3147
        %3153 = vmatprep.subr.bf16.mxu0 %v2223
        %3154 = vmatpush1.bf16.msra.mxu0 %v2222
        %3155 = vmatprep.subr.bf16.mxu0 %v2231
        %3156 = vmatpush1.bf16.msra.mxu0 %v2230
        %3157 = vmatprep.subr.bf16.mxu0 %v2239
        %3158 = vmatpush1.bf16.msra.mxu0 %v2238
        %3159 = vmatprep.subr.bf16.mxu0 %v2247
        %3160 = vmatpush1.bf16.msra.mxu0 %v2246
        %3161 = vmatprep.subr.bf16.mxu0 %v2255
        %3162 = vmatpush1.bf16.msra.mxu0 %v2254
        %3163 = vmatprep.subr.bf16.mxu0 %v2263
        %3164 = vmatpush1.bf16.msra.mxu0 %v2262
        %3165 = vmatprep.subr.bf16.mxu0 %v2271
        %3166 = vmatpush1.bf16.msra.mxu0 %v2270
        %3167 = vmatprep.subr.bf16.mxu0 %v2279
        %3168 = vmatpush1.bf16.msra.mxu0 %v2278
        %3169 = vmatprep.subr.bf16.mxu0 %v2287
        %3170 = vmatpush1.bf16.msra.mxu0 %v2286
        %3171 = vmatprep.subr.bf16.mxu0 %v2295
        %3172 = vmatpush1.bf16.msra.mxu0 %v2294
        %3173 = vmatprep.subr.bf16.mxu0 %v2303
        %3174 = vmatpush1.bf16.msra.mxu0 %v2302
        %3175 = vmatprep.subr.bf16.mxu0 %v2311
        %3176 = vmatpush1.bf16.msra.mxu0 %v2310
        %3177 = vmatprep.subr.bf16.mxu0 %v2319
        %3178 = vmatpush1.bf16.msra.mxu0 %v2318
        %3179 = vmatprep.subr.bf16.mxu0 %v2327
        %3180 = vmatpush1.bf16.msra.mxu0 %v2326
        %3181 = vmatprep.subr.bf16.mxu0 %v2335
        %3182 = vmatpush1.bf16.msra.mxu0 %v2334
        %3183 = vmatprep.subr.bf16.mxu0 %v2343
        %3184 = vmatpush1.bf16.msra.mxu0 %v2342
        %3185 = vmatprep.mubr.bf16.mxu0 %v3152
        %3186 = vmatmul.mubr.bf16.gmra.mrb[0].mxu0 %v3151
        %v3187 = vpop.f32.mrb[0].mxu0
        %v3188 = vadd.f32 0.0, %v3187
        %v3189 = vpop.f32.mrb[0].mxu0
        %v3190 = vadd.f32 0.0, %v3189
        %v3191 = vpop.f32.mrb[0].mxu0
        %v3192 = vpop.f32.mrb[0].mxu0
        %3193 = vdwg.mxu0
        %3194 = vmatprep.subr.bf16.mxu0 %v2225
        %3195 = vmatpush1.bf16.msra.mxu0 %v2224
        %3196 = vmatprep.subr.bf16.mxu0 %v2233
        %3197 = vmatpush1.bf16.msra.mxu0 %v2232
        %3198 = vmatprep.subr.bf16.mxu0 %v2241
        %3199 = vmatpush1.bf16.msra.mxu0 %v2240
        %3200 = vmatprep.subr.bf16.mxu0 %v2249
        %3201 = vmatpush1.bf16.msra.mxu0 %v2248
        %3202 = vmatprep.subr.bf16.mxu0 %v2257
        %3203 = vmatpush1.bf16.msra.mxu0 %v2256
        %3204 = vmatprep.subr.bf16.mxu0 %v2265
        %3205 = vmatpush1.bf16.msra.mxu0 %v2264
        %3206 = vmatprep.subr.bf16.mxu0 %v2273
        %3207 = vmatpush1.bf16.msra.mxu0 %v2272
        %3208 = vmatprep.subr.bf16.mxu0 %v2281
        %3209 = vmatpush1.bf16.msra.mxu0 %v2280
        %3210 = vmatprep.subr.bf16.mxu0 %v2289
        %3211 = vmatpush1.bf16.msra.mxu0 %v2288
        %3212 = vmatprep.subr.bf16.mxu0 %v2297
        %3213 = vmatpush1.bf16.msra.mxu0 %v2296
        %3214 = vmatprep.subr.bf16.mxu0 %v2305
        %3215 = vmatpush1.bf16.msra.mxu0 %v2304
        %3216 = vmatprep.subr.bf16.mxu0 %v2313
        %3217 = vmatpush1.bf16.msra.mxu0 %v2312
        %3218 = vmatprep.subr.bf16.mxu0 %v2321
        %3219 = vmatpush1.bf16.msra.mxu0 %v2320
        %3220 = vmatprep.subr.bf16.mxu0 %v2329
        %3221 = vmatpush1.bf16.msra.mxu0 %v2328
        %3222 = vmatprep.subr.bf16.mxu0 %v2337
        %3223 = vmatpush1.bf16.msra.mxu0 %v2336
        %3224 = vmatprep.subr.bf16.mxu0 %v2345
        %3225 = vmatpush1.bf16.msra.mxu0 %v2344
        %3226 = vmatprep.mubr.bf16.mxu0 %v3152
        %3227 = vmatmul.mubr.bf16.gmra.mrb[0].mxu0 %v3151
        %v3228 = vpop.f32.mrb[0].mxu0
        %v3229 = vadd.f32 0.0, %v3228
        %v3230 = vpop.f32.mrb[0].mxu0
        %v3231 = vadd.f32 0.0, %v3230
        %v3232 = vpop.f32.mrb[0].mxu0
        %v3233 = vpop.f32.mrb[0].mxu0
        %3234 = vdwg.mxu0
        %3235 = vmatprep.subr.bf16.mxu0 %v2227
        %3236 = vmatpush1.bf16.msra.mxu0 %v2226
        %3237 = vmatprep.subr.bf16.mxu0 %v2235
        %3238 = vmatpush1.bf16.msra.mxu0 %v2234
        %3239 = vmatprep.subr.bf16.mxu0 %v2243
        %3240 = vmatpush1.bf16.msra.mxu0 %v2242
        %3241 = vmatprep.subr.bf16.mxu0 %v2251
        %3242 = vmatpush1.bf16.msra.mxu0 %v2250
        %3243 = vmatprep.subr.bf16.mxu0 %v2259
        %3244 = vmatpush1.bf16.msra.mxu0 %v2258
        %3245 = vmatprep.subr.bf16.mxu0 %v2267
        %3246 = vmatpush1.bf16.msra.mxu0 %v2266
        %3247 = vmatprep.subr.bf16.mxu0 %v2275
        %3248 = vmatpush1.bf16.msra.mxu0 %v2274
        %3249 = vmatprep.subr.bf16.mxu0 %v2283
        %3250 = vmatpush1.bf16.msra.mxu0 %v2282
        %3251 = vmatprep.subr.bf16.mxu0 %v2291
        %3252 = vmatpush1.bf16.msra.mxu0 %v2290
        %3253 = vmatprep.subr.bf16.mxu0 %v2299
        %3254 = vmatpush1.bf16.msra.mxu0 %v2298
        %3255 = vmatprep.subr.bf16.mxu0 %v2307
        %3256 = vmatpush1.bf16.msra.mxu0 %v2306
        %3257 = vmatprep.subr.bf16.mxu0 %v2315
        %3258 = vmatpush1.bf16.msra.mxu0 %v2314
        %3259 = vmatprep.subr.bf16.mxu0 %v2323
        %3260 = vmatpush1.bf16.msra.mxu0 %v2322
        %3261 = vmatprep.subr.bf16.mxu0 %v2331
        %3262 = vmatpush1.bf16.msra.mxu0 %v2330
        %3263 = vmatprep.subr.bf16.mxu0 %v2339
        %3264 = vmatpush1.bf16.msra.mxu0 %v2338
        %3265 = vmatprep.subr.bf16.mxu0 %v2347
        %3266 = vmatpush1.bf16.msra.mxu0 %v2346
        %3267 = vmatprep.mubr.bf16.mxu0 %v3152
        %3268 = vmatmul.mubr.bf16.gmra.mrb[0].mxu0 %v3151
        %v3269 = vpop.f32.mrb[0].mxu0
        %v3270 = vadd.f32 0.0, %v3269
        %v3271 = vpop.f32.mrb[0].mxu0
        %v3272 = vadd.f32 0.0, %v3271
        %v3273 = vpop.f32.mrb[0].mxu0
        %v3274 = vpop.f32.mrb[0].mxu0
        %3275 = vdwg.mxu0
        %3276 = vmatprep.subr.bf16.mxu0 %v2229
        %3277 = vmatpush1.bf16.msra.mxu0 %v2228
        %3278 = vmatprep.subr.bf16.mxu0 %v2237
        %3279 = vmatpush1.bf16.msra.mxu0 %v2236
        %3280 = vmatprep.subr.bf16.mxu0 %v2245
        %3281 = vmatpush1.bf16.msra.mxu0 %v2244
        %3282 = vmatprep.subr.bf16.mxu0 %v2253
        %3283 = vmatpush1.bf16.msra.mxu0 %v2252
        %3284 = vmatprep.subr.bf16.mxu0 %v2261
        %3285 = vmatpush1.bf16.msra.mxu0 %v2260
        %3286 = vmatprep.subr.bf16.mxu0 %v2269
        %3287 = vmatpush1.bf16.msra.mxu0 %v2268
        %3288 = vmatprep.subr.bf16.mxu0 %v2277
        %3289 = vmatpush1.bf16.msra.mxu0 %v2276
        %3290 = vmatprep.subr.bf16.mxu0 %v2285
        %3291 = vmatpush1.bf16.msra.mxu0 %v2284
        %3292 = vmatprep.subr.bf16.mxu0 %v2293
        %3293 = vmatpush1.bf16.msra.mxu0 %v2292
        %3294 = vmatprep.subr.bf16.mxu0 %v2301
        %3295 = vmatpush1.bf16.msra.mxu0 %v2300
        %3296 = vmatprep.subr.bf16.mxu0 %v2309
        %3297 = vmatpush1.bf16.msra.mxu0 %v2308
        %3298 = vmatprep.subr.bf16.mxu0 %v2317
        %3299 = vmatpush1.bf16.msra.mxu0 %v2316
        %3300 = vmatprep.subr.bf16.mxu0 %v2325
        %3301 = vmatpush1.bf16.msra.mxu0 %v2324
        %3302 = vmatprep.subr.bf16.mxu0 %v2333
        %3303 = vmatpush1.bf16.msra.mxu0 %v2332
        %3304 = vmatprep.subr.bf16.mxu0 %v2341
        %3305 = vmatpush1.bf16.msra.mxu0 %v2340
        %3306 = vmatprep.subr.bf16.mxu0 %v2349
        %3307 = vmatpush1.bf16.msra.mxu0 %v2348
        %3308 = vmatprep.mubr.bf16.mxu0 %v3152
        %3309 = vmatmul.mubr.bf16.gmra.mrb[0].mxu0 %v3151
        %v3310 = vpop.f32.mrb[0].mxu0
        %v3311 = vadd.f32 0.0, %v3310
        %v3312 = vpop.f32.mrb[0].mxu0
        %v3313 = vadd.f32 0.0, %v3312
        %v3314 = vpop.f32.mrb[0].mxu0
        %v3315 = vpop.f32.mrb[0].mxu0
        %3316 = vdwg.mxu0
        %v3317 = vadd.f32 %v1597, %v3188
        %v3318 = vadd.f32 %v1599, %v3190
        %v3319 = vadd.f32 %v1658, %v3229
        %v3320 = vadd.f32 %v1660, %v3231
        %v3321 = vadd.f32 %v1719, %v3270
        %v3322 = vadd.f32 %v1721, %v3272
        %v3323 = vadd.f32 %v1780, %v3311
        %v3324 = vadd.f32 %v1782, %v3313
        %v3325 = vxor.u32 %v3317, 2147483648
        %v3326 = vxor.u32 %v3318, 2147483648
        %v3327 = vxor.u32 %v3319, 2147483648
        %v3328 = vxor.u32 %v3320, 2147483648
        %v3329 = vxor.u32 %v3321, 2147483648
        %v3330 = vxor.u32 %v3322, 2147483648
        %v3331 = vmul.f32 %v3325, 1.442695
        %v3332 = vpow.pop %v3331
        %v3333 = vmul.f32 %v3326, 1.442695
        %v3334 = vpow.pop %v3333
        %v3335 = vmul.f32 %v3327, 1.442695
        %v3336 = vpow.pop %v3335
        %v3337 = vmul.f32 %v3328, 1.442695
        %v3338 = vpow.pop %v3337
        %v3339 = vmul.f32 %v3329, 1.442695
        %v3340 = vpow.pop %v3339
        %v3341 = vmul.f32 %v3330, 1.442695
        %v3342 = vpow.pop %v3341
        %v3343 = vadd.f32 %v3332, 1.0
        %v3344 = vadd.f32 %v3334, 1.0
        %v3345 = vadd.f32 %v3336, 1.0
        %v3346 = vadd.f32 %v3338, 1.0
        %v3347 = vadd.f32 %v3340, 1.0
        %v3348 = vadd.f32 %v3342, 1.0
        %v3349 = vrcp.pop %v3343
        %v3350 = vmul.f32 1.0, %v3349
        %v3351 = vrcp.pop %v3344
        %v3352 = vmul.f32 1.0, %v3351
        %v3353 = vrcp.pop %v3345
        %v3354 = vmul.f32 1.0, %v3353
        %v3355 = vrcp.pop %v3346
        %v3356 = vmul.f32 1.0, %v3355
        %v3357 = vrcp.pop %v3347
        %v3358 = vmul.f32 1.0, %v3357
        %v3359 = vrcp.pop %v3348
        %v3360 = vmul.f32 1.0, %v3359
        %v3361 = vtanh.pop %v3323
        %v3362 = vtanh.pop %v3324
        %v3363 = vmul.f32 %v3354, %v3142
        %v3364 = vmul.f32 %v3356, %v3143
        %v3365 = vmul.f32 %v3350, %v3361
        %v3366 = vmul.f32 %v3352, %v3362
        %v3367 = vadd.f32 %v3363, %v3365
        %v3368 = vadd.f32 %v3364, %v3366
        %v3369 = vtanh.pop %v3367
        %v3370 = vtanh.pop %v3368
        %v3371 = vmul.f32 %v3358, %v3369
        %v3372 = vmul.f32 %v3360, %v3370
        %s3373 = scalar_lea.vmem [#allocation2], 64
        %3374 = vst [vmem:[%s3373] sm:$0xff] %v3371
        %3375 = vst [vmem:[%s3373 + $0x8] sm:$0xff] %v3372
        %p3376 = scmp.eq.s32.totalorder %s34, 4
        // Predicated region
        $region105: #{lstm_forward.1} parent=67 // pred_check
          %p3377 = pneg %p3376
        $region106: #{lstm_forward.1} parent=67 // pred_check_branch
          %3379 = sbr.rel (%p3377) target = $region108
        $region107: #{lstm_forward.1} parent=67 // pred_region
          %v3380 = vld [vmem:[#allocation11] sm:$0x3]
          %v3381 = vld [vmem:[#allocation9] sm:$0xff]
          %v3382 = vld [vmem:[#allocation9 + $0x8] sm:$0xff]
          %v3383 = vld [vmem:[#allocation9 + $0x10] sm:$0xff]
          %v3384 = vld [vmem:[#allocation9 + $0x18] sm:$0xff]
          %v3385 = vld [vmem:[#allocation9 + $0x20] sm:$0xff]
          %v3386 = vld [vmem:[#allocation9 + $0x28] sm:$0xff]
          %v3387 = vld [vmem:[#allocation9 + $0x30] sm:$0xff]
          %v3388 = vld [vmem:[#allocation9 + $0x38] sm:$0xff]
          %v3389 = vld [vmem:[#allocation9 + $0x40] sm:$0xff]
          %v3390 = vld [vmem:[#allocation9 + $0x48] sm:$0xff]
          %v3391 = vld [vmem:[#allocation9 + $0x50] sm:$0xff]
          %v3392 = vld [vmem:[#allocation9 + $0x58] sm:$0xff]
          %v3393 = vld [vmem:[#allocation9 + $0x60] sm:$0xff]
          %v3394 = vld [vmem:[#allocation9 + $0x68] sm:$0xff]
          %v3395 = vld [vmem:[#allocation9 + $0x70] sm:$0xff]
          %v3396 = vld [vmem:[#allocation9 + $0x78] sm:$0xff]
          %v3397 = vld [vmem:[#allocation9 + $0x80] sm:$0xff]
          %v3398 = vld [vmem:[#allocation9 + $0x88] sm:$0xff]
          %v3399 = vld [vmem:[#allocation9 + $0x90] sm:$0xff]
          %v3400 = vld [vmem:[#allocation9 + $0x98] sm:$0xff]
          %v3401 = vld [vmem:[#allocation9 + $0xa0] sm:$0xff]
          %v3402 = vld [vmem:[#allocation9 + $0xa8] sm:$0xff]
          %v3403 = vld [vmem:[#allocation9 + $0xb0] sm:$0xff]
          %v3404 = vld [vmem:[#allocation9 + $0xb8] sm:$0xff]
          %v3405 = vld [vmem:[#allocation9 + $0xc0] sm:$0xff]
          %v3406 = vld [vmem:[#allocation9 + $0xc8] sm:$0xff]
          %v3407 = vld [vmem:[#allocation9 + $0xd0] sm:$0xff]
          %v3408 = vld [vmem:[#allocation9 + $0xd8] sm:$0xff]
          %v3409 = vld [vmem:[#allocation9 + $0xe0] sm:$0xff]
          %v3410 = vld [vmem:[#allocation9 + $0xe8] sm:$0xff]
          %v3411 = vld [vmem:[#allocation9 + $0xf0] sm:$0xff]
          %v3412 = vld [vmem:[#allocation9 + $0xf8] sm:$0xff]
          %v3445 = vunpack.c.l.b16 %v3381
          %v3446 = vunpack.c.h.b16 %v3381
          %v3447 = vunpack.c.l.b16 %v3382
          %v3448 = vunpack.c.h.b16 %v3382
          %v3449 = vunpack.c.l.b16 %v3383
          %v3450 = vunpack.c.h.b16 %v3383
          %v3451 = vunpack.c.l.b16 %v3384
          %v3452 = vunpack.c.h.b16 %v3384
          %v3453 = vunpack.c.l.b16 %v3385
          %v3454 = vunpack.c.h.b16 %v3385
          %v3455 = vunpack.c.l.b16 %v3386
          %v3456 = vunpack.c.h.b16 %v3386
          %v3457 = vunpack.c.l.b16 %v3387
          %v3458 = vunpack.c.h.b16 %v3387
          %v3459 = vunpack.c.l.b16 %v3388
          %v3460 = vunpack.c.h.b16 %v3388
          %v3461 = vunpack.c.l.b16 %v3389
          %v3462 = vunpack.c.h.b16 %v3389
          %v3463 = vunpack.c.l.b16 %v3390
          %v3464 = vunpack.c.h.b16 %v3390
          %v3465 = vunpack.c.l.b16 %v3391
          %v3466 = vunpack.c.h.b16 %v3391
          %v3467 = vunpack.c.l.b16 %v3392
          %v3468 = vunpack.c.h.b16 %v3392
          %v3469 = vunpack.c.l.b16 %v3393
          %v3470 = vunpack.c.h.b16 %v3393
          %v3471 = vunpack.c.l.b16 %v3394
          %v3472 = vunpack.c.h.b16 %v3394
          %v3473 = vunpack.c.l.b16 %v3395
          %v3474 = vunpack.c.h.b16 %v3395
          %v3475 = vunpack.c.l.b16 %v3396
          %v3476 = vunpack.c.h.b16 %v3396
          %v3477 = vunpack.c.l.b16 %v3397
          %v3478 = vunpack.c.h.b16 %v3397
          %v3479 = vunpack.c.l.b16 %v3398
          %v3480 = vunpack.c.h.b16 %v3398
          %v3481 = vunpack.c.l.b16 %v3399
          %v3482 = vunpack.c.h.b16 %v3399
          %v3483 = vunpack.c.l.b16 %v3400
          %v3484 = vunpack.c.h.b16 %v3400
          %v3485 = vunpack.c.l.b16 %v3401
          %v3486 = vunpack.c.h.b16 %v3401
          %v3487 = vunpack.c.l.b16 %v3402
          %v3488 = vunpack.c.h.b16 %v3402
          %v3489 = vunpack.c.l.b16 %v3403
          %v3490 = vunpack.c.h.b16 %v3403
          %v3491 = vunpack.c.l.b16 %v3404
          %v3492 = vunpack.c.h.b16 %v3404
          %v3493 = vunpack.c.l.b16 %v3405
          %v3494 = vunpack.c.h.b16 %v3405
          %v3495 = vunpack.c.l.b16 %v3406
          %v3496 = vunpack.c.h.b16 %v3406
          %v3497 = vunpack.c.l.b16 %v3407
          %v3498 = vunpack.c.h.b16 %v3407
          %v3499 = vunpack.c.l.b16 %v3408
          %v3500 = vunpack.c.h.b16 %v3408
          %v3501 = vunpack.c.l.b16 %v3409
          %v3502 = vunpack.c.h.b16 %v3409
          %v3503 = vunpack.c.l.b16 %v3410
          %v3504 = vunpack.c.h.b16 %v3410
          %v3505 = vunpack.c.l.b16 %v3411
          %v3506 = vunpack.c.h.b16 %v3411
          %v3507 = vunpack.c.l.b16 %v3412
          %v3508 = vunpack.c.h.b16 %v3412
          %v3509 = vpack.c.b16 %v3447, %v3445
          %v3510 = vpack.c.b16 %v3448, %v3446
          %v3511 = vpack.c.b16 %v3451, %v3449
          %v3512 = vpack.c.b16 %v3452, %v3450
          %v3513 = vpack.c.b16 %v3455, %v3453
          %v3514 = vpack.c.b16 %v3456, %v3454
          %v3515 = vpack.c.b16 %v3459, %v3457
          %v3516 = vpack.c.b16 %v3460, %v3458
          %v3517 = vpack.c.b16 %v3463, %v3461
          %v3518 = vpack.c.b16 %v3464, %v3462
          %v3519 = vpack.c.b16 %v3467, %v3465
          %v3520 = vpack.c.b16 %v3468, %v3466
          %v3521 = vpack.c.b16 %v3471, %v3469
          %v3522 = vpack.c.b16 %v3472, %v3470
          %v3523 = vpack.c.b16 %v3475, %v3473
          %v3524 = vpack.c.b16 %v3476, %v3474
          %v3525 = vpack.c.b16 %v3479, %v3477
          %v3526 = vpack.c.b16 %v3480, %v3478
          %v3527 = vpack.c.b16 %v3483, %v3481
          %v3528 = vpack.c.b16 %v3484, %v3482
          %v3529 = vpack.c.b16 %v3487, %v3485
          %v3530 = vpack.c.b16 %v3488, %v3486
          %v3531 = vpack.c.b16 %v3491, %v3489
          %v3532 = vpack.c.b16 %v3492, %v3490
          %v3533 = vpack.c.b16 %v3495, %v3493
          %v3534 = vpack.c.b16 %v3496, %v3494
          %v3535 = vpack.c.b16 %v3499, %v3497
          %v3536 = vpack.c.b16 %v3500, %v3498
          %v3537 = vpack.c.b16 %v3503, %v3501
          %v3538 = vpack.c.b16 %v3504, %v3502
          %v3539 = vpack.c.b16 %v3507, %v3505
          %v3540 = vpack.c.b16 %v3508, %v3506
          %3573 = vmatprep.subr.bf16.mxu0 %v3510
          %3574 = vmatpush1.bf16.msra.mxu0 %v3509
          %3575 = vmatprep.subr.bf16.mxu0 %v3512
          %3576 = vmatpush1.bf16.msra.mxu0 %v3511
          %3577 = vmatprep.subr.bf16.mxu0 %v3514
          %3578 = vmatpush1.bf16.msra.mxu0 %v3513
          %3579 = vmatprep.subr.bf16.mxu0 %v3516
          %3580 = vmatpush1.bf16.msra.mxu0 %v3515
          %3581 = vmatprep.subr.bf16.mxu0 %v3518
          %3582 = vmatpush1.bf16.msra.mxu0 %v3517
          %3583 = vmatprep.subr.bf16.mxu0 %v3520
          %3584 = vmatpush1.bf16.msra.mxu0 %v3519
          %3585 = vmatprep.subr.bf16.mxu0 %v3522
          %3586 = vmatpush1.bf16.msra.mxu0 %v3521
          %3587 = vmatprep.subr.bf16.mxu0 %v3524
          %3588 = vmatpush1.bf16.msra.mxu0 %v3523
          %3589 = vmatprep.subr.bf16.mxu0 %v3526
          %3590 = vmatpush1.bf16.msra.mxu0 %v3525
          %3591 = vmatprep.subr.bf16.mxu0 %v3528
          %3592 = vmatpush1.bf16.msra.mxu0 %v3527
          %3593 = vmatprep.subr.bf16.mxu0 %v3530
          %3594 = vmatpush1.bf16.msra.mxu0 %v3529
          %3595 = vmatprep.subr.bf16.mxu0 %v3532
          %3596 = vmatpush1.bf16.msra.mxu0 %v3531
          %3597 = vmatprep.subr.bf16.mxu0 %v3534
          %3598 = vmatpush1.bf16.msra.mxu0 %v3533
          %3599 = vmatprep.subr.bf16.mxu0 %v3536
          %3600 = vmatpush1.bf16.msra.mxu0 %v3535
          %3601 = vmatprep.subr.bf16.mxu0 %v3538
          %3602 = vmatpush1.bf16.msra.mxu0 %v3537
          %3603 = vmatprep.subr.bf16.mxu0 %v3540
          %3604 = vmatpush1.bf16.msra.mxu0 %v3539
          %3605 = vmatprep.mubr.bf16.mxu0 %v1837
          %3606 = vmatmul.mubr.bf16.gmra.mrb[0].mxu0 %v1836
          %v3607 = vpop.f32.mrb[0].mxu0
          %v3608 = vadd.f32 0.0, %v3607
          %v3609 = vpop.f32.mrb[0].mxu0
          %v3610 = vadd.f32 0.0, %v3609
          %v3611 = vpop.f32.mrb[0].mxu0
          %v3612 = vpop.f32.mrb[0].mxu0
          %3613 = vdwg.mxu0
          %v3615 = vlaneseq
          %v3616 = vshrl.u32 %v3615, 7
          %v3617 = vsub.s32 0, %v3616
          %v3618 = vrot.slane %v3380, %v3617
          %v3619 = vlaneseq
          %v3620 = vshrl.u32 %v3619, 7
          %v3621 = vsub.s32 1, %v3620
          %v3622 = vrot.slane %v3380, %v3621
          %v3625 = vadd.f32 %v3618, %v3608
          %v3626 = vadd.f32 %v3622, %v3610
          %v3627 = vld [vmem:[#allocation9 + $0x100] sm:$0xff]
          %v3628 = vld [vmem:[#allocation9 + $0x108] sm:$0xff]
          %v3629 = vld [vmem:[#allocation9 + $0x110] sm:$0xff]
          %v3630 = vld [vmem:[#allocation9 + $0x118] sm:$0xff]
          %v3631 = vld [vmem:[#allocation9 + $0x120] sm:$0xff]
          %v3632 = vld [vmem:[#allocation9 + $0x128] sm:$0xff]
          %v3633 = vld [vmem:[#allocation9 + $0x130] sm:$0xff]
          %v3634 = vld [vmem:[#allocation9 + $0x138] sm:$0xff]
          %v3635 = vld [vmem:[#allocation9 + $0x140] sm:$0xff]
          %v3636 = vld [vmem:[#allocation9 + $0x148] sm:$0xff]
          %v3637 = vld [vmem:[#allocation9 + $0x150] sm:$0xff]
          %v3638 = vld [vmem:[#allocation9 + $0x158] sm:$0xff]
          %v3639 = vld [vmem:[#allocation9 + $0x160] sm:$0xff]
          %v3640 = vld [vmem:[#allocation9 + $0x168] sm:$0xff]
          %v3641 = vld [vmem:[#allocation9 + $0x170] sm:$0xff]
          %v3642 = vld [vmem:[#allocation9 + $0x178] sm:$0xff]
          %v3643 = vld [vmem:[#allocation9 + $0x180] sm:$0xff]
          %v3644 = vld [vmem:[#allocation9 + $0x188] sm:$0xff]
          %v3645 = vld [vmem:[#allocation9 + $0x190] sm:$0xff]
          %v3646 = vld [vmem:[#allocation9 + $0x198] sm:$0xff]
          %v3647 = vld [vmem:[#allocation9 + $0x1a0] sm:$0xff]
          %v3648 = vld [vmem:[#allocation9 + $0x1a8] sm:$0xff]
          %v3649 = vld [vmem:[#allocation9 + $0x1b0] sm:$0xff]
          %v3650 = vld [vmem:[#allocation9 + $0x1b8] sm:$0xff]
          %v3651 = vld [vmem:[#allocation9 + $0x1c0] sm:$0xff]
          %v3652 = vld [vmem:[#allocation9 + $0x1c8] sm:$0xff]
          %v3653 = vld [vmem:[#allocation9 + $0x1d0] sm:$0xff]
          %v3654 = vld [vmem:[#allocation9 + $0x1d8] sm:$0xff]
          %v3655 = vld [vmem:[#allocation9 + $0x1e0] sm:$0xff]
          %v3656 = vld [vmem:[#allocation9 + $0x1e8] sm:$0xff]
          %v3657 = vld [vmem:[#allocation9 + $0x1f0] sm:$0xff]
          %v3658 = vld [vmem:[#allocation9 + $0x1f8] sm:$0xff]
          %v3691 = vunpack.c.l.b16 %v3627
          %v3692 = vunpack.c.h.b16 %v3627
          %v3693 = vunpack.c.l.b16 %v3628
          %v3694 = vunpack.c.h.b16 %v3628
          %v3695 = vunpack.c.l.b16 %v3629
          %v3696 = vunpack.c.h.b16 %v3629
          %v3697 = vunpack.c.l.b16 %v3630
          %v3698 = vunpack.c.h.b16 %v3630
          %v3699 = vunpack.c.l.b16 %v3631
          %v3700 = vunpack.c.h.b16 %v3631
          %v3701 = vunpack.c.l.b16 %v3632
          %v3702 = vunpack.c.h.b16 %v3632
          %v3703 = vunpack.c.l.b16 %v3633
          %v3704 = vunpack.c.h.b16 %v3633
          %v3705 = vunpack.c.l.b16 %v3634
          %v3706 = vunpack.c.h.b16 %v3634
          %v3707 = vunpack.c.l.b16 %v3635
          %v3708 = vunpack.c.h.b16 %v3635
          %v3709 = vunpack.c.l.b16 %v3636
          %v3710 = vunpack.c.h.b16 %v3636
          %v3711 = vunpack.c.l.b16 %v3637
          %v3712 = vunpack.c.h.b16 %v3637
          %v3713 = vunpack.c.l.b16 %v3638
          %v3714 = vunpack.c.h.b16 %v3638
          %v3715 = vunpack.c.l.b16 %v3639
          %v3716 = vunpack.c.h.b16 %v3639
          %v3717 = vunpack.c.l.b16 %v3640
          %v3718 = vunpack.c.h.b16 %v3640
          %v3719 = vunpack.c.l.b16 %v3641
          %v3720 = vunpack.c.h.b16 %v3641
          %v3721 = vunpack.c.l.b16 %v3642
          %v3722 = vunpack.c.h.b16 %v3642
          %v3723 = vunpack.c.l.b16 %v3643
          %v3724 = vunpack.c.h.b16 %v3643
          %v3725 = vunpack.c.l.b16 %v3644
          %v3726 = vunpack.c.h.b16 %v3644
          %v3727 = vunpack.c.l.b16 %v3645
          %v3728 = vunpack.c.h.b16 %v3645
          %v3729 = vunpack.c.l.b16 %v3646
          %v3730 = vunpack.c.h.b16 %v3646
          %v3731 = vunpack.c.l.b16 %v3647
          %v3732 = vunpack.c.h.b16 %v3647
          %v3733 = vunpack.c.l.b16 %v3648
          %v3734 = vunpack.c.h.b16 %v3648
          %v3735 = vunpack.c.l.b16 %v3649
          %v3736 = vunpack.c.h.b16 %v3649
          %v3737 = vunpack.c.l.b16 %v3650
          %v3738 = vunpack.c.h.b16 %v3650
          %v3739 = vunpack.c.l.b16 %v3651
          %v3740 = vunpack.c.h.b16 %v3651
          %v3741 = vunpack.c.l.b16 %v3652
          %v3742 = vunpack.c.h.b16 %v3652
          %v3743 = vunpack.c.l.b16 %v3653
          %v3744 = vunpack.c.h.b16 %v3653
          %v3745 = vunpack.c.l.b16 %v3654
          %v3746 = vunpack.c.h.b16 %v3654
          %v3747 = vunpack.c.l.b16 %v3655
          %v3748 = vunpack.c.h.b16 %v3655
          %v3749 = vunpack.c.l.b16 %v3656
          %v3750 = vunpack.c.h.b16 %v3656
          %v3751 = vunpack.c.l.b16 %v3657
          %v3752 = vunpack.c.h.b16 %v3657
          %v3753 = vunpack.c.l.b16 %v3658
          %v3754 = vunpack.c.h.b16 %v3658
          %v3755 = vpack.c.b16 %v3693, %v3691
          %v3756 = vpack.c.b16 %v3694, %v3692
          %v3757 = vpack.c.b16 %v3697, %v3695
          %v3758 = vpack.c.b16 %v3698, %v3696
          %v3759 = vpack.c.b16 %v3701, %v3699
          %v3760 = vpack.c.b16 %v3702, %v3700
          %v3761 = vpack.c.b16 %v3705, %v3703
          %v3762 = vpack.c.b16 %v3706, %v3704
          %v3763 = vpack.c.b16 %v3709, %v3707
          %v3764 = vpack.c.b16 %v3710, %v3708
          %v3765 = vpack.c.b16 %v3713, %v3711
          %v3766 = vpack.c.b16 %v3714, %v3712
          %v3767 = vpack.c.b16 %v3717, %v3715
          %v3768 = vpack.c.b16 %v3718, %v3716
          %v3769 = vpack.c.b16 %v3721, %v3719
          %v3770 = vpack.c.b16 %v3722, %v3720
          %v3771 = vpack.c.b16 %v3725, %v3723
          %v3772 = vpack.c.b16 %v3726, %v3724
          %v3773 = vpack.c.b16 %v3729, %v3727
          %v3774 = vpack.c.b16 %v3730, %v3728
          %v3775 = vpack.c.b16 %v3733, %v3731
          %v3776 = vpack.c.b16 %v3734, %v3732
          %v3777 = vpack.c.b16 %v3737, %v3735
          %v3778 = vpack.c.b16 %v3738, %v3736
          %v3779 = vpack.c.b16 %v3741, %v3739
          %v3780 = vpack.c.b16 %v3742, %v3740
          %v3781 = vpack.c.b16 %v3745, %v3743
          %v3782 = vpack.c.b16 %v3746, %v3744
          %v3783 = vpack.c.b16 %v3749, %v3747
          %v3784 = vpack.c.b16 %v3750, %v3748
          %v3785 = vpack.c.b16 %v3753, %v3751
          %v3786 = vpack.c.b16 %v3754, %v3752
          %3819 = vmatprep.subr.bf16.mxu0 %v3756
          %3820 = vmatpush1.bf16.msra.mxu0 %v3755
          %3821 = vmatprep.subr.bf16.mxu0 %v3758
          %3822 = vmatpush1.bf16.msra.mxu0 %v3757
          %3823 = vmatprep.subr.bf16.mxu0 %v3760
          %3824 = vmatpush1.bf16.msra.mxu0 %v3759
          %3825 = vmatprep.subr.bf16.mxu0 %v3762
          %3826 = vmatpush1.bf16.msra.mxu0 %v3761
          %3827 = vmatprep.subr.bf16.mxu0 %v3764
          %3828 = vmatpush1.bf16.msra.mxu0 %v3763
          %3829 = vmatprep.subr.bf16.mxu0 %v3766
          %3830 = vmatpush1.bf16.msra.mxu0 %v3765
          %3831 = vmatprep.subr.bf16.mxu0 %v3768
          %3832 = vmatpush1.bf16.msra.mxu0 %v3767
          %3833 = vmatprep.subr.bf16.mxu0 %v3770
          %3834 = vmatpush1.bf16.msra.mxu0 %v3769
          %3835 = vmatprep.subr.bf16.mxu0 %v3772
          %3836 = vmatpush1.bf16.msra.mxu0 %v3771
          %3837 = vmatprep.subr.bf16.mxu0 %v3774
          %3838 = vmatpush1.bf16.msra.mxu0 %v3773
          %3839 = vmatprep.subr.bf16.mxu0 %v3776
          %3840 = vmatpush1.bf16.msra.mxu0 %v3775
          %3841 = vmatprep.subr.bf16.mxu0 %v3778
          %3842 = vmatpush1.bf16.msra.mxu0 %v3777
          %3843 = vmatprep.subr.bf16.mxu0 %v3780
          %3844 = vmatpush1.bf16.msra.mxu0 %v3779
          %3845 = vmatprep.subr.bf16.mxu0 %v3782
          %3846 = vmatpush1.bf16.msra.mxu0 %v3781
          %3847 = vmatprep.subr.bf16.mxu0 %v3784
          %3848 = vmatpush1.bf16.msra.mxu0 %v3783
          %3849 = vmatprep.subr.bf16.mxu0 %v3786
          %3850 = vmatpush1.bf16.msra.mxu0 %v3785
          %3851 = vmatprep.mubr.bf16.mxu0 %v2702
          %3852 = vmatmul.mubr.bf16.gmra.mrb[0].mxu0 %v2701
          %v3853 = vpop.f32.mrb[0].mxu0
          %v3854 = vadd.f32 0.0, %v3853
          %v3855 = vpop.f32.mrb[0].mxu0
          %v3856 = vadd.f32 0.0, %v3855
          %v3857 = vpop.f32.mrb[0].mxu0
          %v3858 = vpop.f32.mrb[0].mxu0
          %3859 = vdwg.mxu0
          %v3860 = vadd.f32 %v3625, %v3854
          %v3861 = vadd.f32 %v3626, %v3856
          %v3862 = vld [vmem:[#allocation9 + $0x200] sm:$0xff]
          %v3863 = vld [vmem:[#allocation9 + $0x208] sm:$0xff]
          %v3864 = vld [vmem:[#allocation9 + $0x210] sm:$0xff]
          %v3865 = vld [vmem:[#allocation9 + $0x218] sm:$0xff]
          %v3866 = vld [vmem:[#allocation9 + $0x220] sm:$0xff]
          %v3867 = vld [vmem:[#allocation9 + $0x228] sm:$0xff]
          %v3868 = vld [vmem:[#allocation9 + $0x230] sm:$0xff]
          %v3869 = vld [vmem:[#allocation9 + $0x238] sm:$0xff]
          %v3870 = vld [vmem:[#allocation9 + $0x240] sm:$0xff]
          %v3871 = vld [vmem:[#allocation9 + $0x248] sm:$0xff]
          %v3872 = vld [vmem:[#allocation9 + $0x250] sm:$0xff]
          %v3873 = vld [vmem:[#allocation9 + $0x258] sm:$0xff]
          %v3874 = vld [vmem:[#allocation9 + $0x260] sm:$0xff]
          %v3875 = vld [vmem:[#allocation9 + $0x268] sm:$0xff]
          %v3876 = vld [vmem:[#allocation9 + $0x270] sm:$0xff]
          %v3877 = vld [vmem:[#allocation9 + $0x278] sm:$0xff]
          %v3878 = vld [vmem:[#allocation9 + $0x280] sm:$0xff]
          %v3879 = vld [vmem:[#allocation9 + $0x288] sm:$0xff]
          %v3880 = vld [vmem:[#allocation9 + $0x290] sm:$0xff]
          %v3881 = vld [vmem:[#allocation9 + $0x298] sm:$0xff]
          %v3882 = vld [vmem:[#allocation9 + $0x2a0] sm:$0xff]
          %v3883 = vld [vmem:[#allocation9 + $0x2a8] sm:$0xff]
          %v3884 = vld [vmem:[#allocation9 + $0x2b0] sm:$0xff]
          %v3885 = vld [vmem:[#allocation9 + $0x2b8] sm:$0xff]
          %v3886 = vld [vmem:[#allocation9 + $0x2c0] sm:$0xff]
          %v3887 = vld [vmem:[#allocation9 + $0x2c8] sm:$0xff]
          %v3888 = vld [vmem:[#allocation9 + $0x2d0] sm:$0xff]
          %v3889 = vld [vmem:[#allocation9 + $0x2d8] sm:$0xff]
          %v3890 = vld [vmem:[#allocation9 + $0x2e0] sm:$0xff]
          %v3891 = vld [vmem:[#allocation9 + $0x2e8] sm:$0xff]
          %v3892 = vld [vmem:[#allocation9 + $0x2f0] sm:$0xff]
          %v3893 = vld [vmem:[#allocation9 + $0x2f8] sm:$0xff]
          %v3926 = vunpack.c.l.b16 %v3862
          %v3927 = vunpack.c.h.b16 %v3862
          %v3928 = vunpack.c.l.b16 %v3863
          %v3929 = vunpack.c.h.b16 %v3863
          %v3930 = vunpack.c.l.b16 %v3864
          %v3931 = vunpack.c.h.b16 %v3864
          %v3932 = vunpack.c.l.b16 %v3865
          %v3933 = vunpack.c.h.b16 %v3865
          %v3934 = vunpack.c.l.b16 %v3866
          %v3935 = vunpack.c.h.b16 %v3866
          %v3936 = vunpack.c.l.b16 %v3867
          %v3937 = vunpack.c.h.b16 %v3867
          %v3938 = vunpack.c.l.b16 %v3868
          %v3939 = vunpack.c.h.b16 %v3868
          %v3940 = vunpack.c.l.b16 %v3869
          %v3941 = vunpack.c.h.b16 %v3869
          %v3942 = vunpack.c.l.b16 %v3870
          %v3943 = vunpack.c.h.b16 %v3870
          %v3944 = vunpack.c.l.b16 %v3871
          %v3945 = vunpack.c.h.b16 %v3871
          %v3946 = vunpack.c.l.b16 %v3872
          %v3947 = vunpack.c.h.b16 %v3872
          %v3948 = vunpack.c.l.b16 %v3873
          %v3949 = vunpack.c.h.b16 %v3873
          %v3950 = vunpack.c.l.b16 %v3874
          %v3951 = vunpack.c.h.b16 %v3874
          %v3952 = vunpack.c.l.b16 %v3875
          %v3953 = vunpack.c.h.b16 %v3875
          %v3954 = vunpack.c.l.b16 %v3876
          %v3955 = vunpack.c.h.b16 %v3876
          %v3956 = vunpack.c.l.b16 %v3877
          %v3957 = vunpack.c.h.b16 %v3877
          %v3958 = vunpack.c.l.b16 %v3878
          %v3959 = vunpack.c.h.b16 %v3878
          %v3960 = vunpack.c.l.b16 %v3879
          %v3961 = vunpack.c.h.b16 %v3879
          %v3962 = vunpack.c.l.b16 %v3880
          %v3963 = vunpack.c.h.b16 %v3880
          %v3964 = vunpack.c.l.b16 %v3881
          %v3965 = vunpack.c.h.b16 %v3881
          %v3966 = vunpack.c.l.b16 %v3882
          %v3967 = vunpack.c.h.b16 %v3882
          %v3968 = vunpack.c.l.b16 %v3883
          %v3969 = vunpack.c.h.b16 %v3883
          %v3970 = vunpack.c.l.b16 %v3884
          %v3971 = vunpack.c.h.b16 %v3884
          %v3972 = vunpack.c.l.b16 %v3885
          %v3973 = vunpack.c.h.b16 %v3885
          %v3974 = vunpack.c.l.b16 %v3886
          %v3975 = vunpack.c.h.b16 %v3886
          %v3976 = vunpack.c.l.b16 %v3887
          %v3977 = vunpack.c.h.b16 %v3887
          %v3978 = vunpack.c.l.b16 %v3888
          %v3979 = vunpack.c.h.b16 %v3888
          %v3980 = vunpack.c.l.b16 %v3889
          %v3981 = vunpack.c.h.b16 %v3889
          %v3982 = vunpack.c.l.b16 %v3890
          %v3983 = vunpack.c.h.b16 %v3890
          %v3984 = vunpack.c.l.b16 %v3891
          %v3985 = vunpack.c.h.b16 %v3891
          %v3986 = vunpack.c.l.b16 %v3892
          %v3987 = vunpack.c.h.b16 %v3892
          %v3988 = vunpack.c.l.b16 %v3893
          %v3989 = vunpack.c.h.b16 %v3893
          %v3990 = vpack.c.b16 %v3928, %v3926
          %v3991 = vpack.c.b16 %v3929, %v3927
          %v3992 = vpack.c.b16 %v3932, %v3930
          %v3993 = vpack.c.b16 %v3933, %v3931
          %v3994 = vpack.c.b16 %v3936, %v3934
          %v3995 = vpack.c.b16 %v3937, %v3935
          %v3996 = vpack.c.b16 %v3940, %v3938
          %v3997 = vpack.c.b16 %v3941, %v3939
          %v3998 = vpack.c.b16 %v3944, %v3942
          %v3999 = vpack.c.b16 %v3945, %v3943
          %v4000 = vpack.c.b16 %v3948, %v3946
          %v4001 = vpack.c.b16 %v3949, %v3947
          %v4002 = vpack.c.b16 %v3952, %v3950
          %v4003 = vpack.c.b16 %v3953, %v3951
          %v4004 = vpack.c.b16 %v3956, %v3954
          %v4005 = vpack.c.b16 %v3957, %v3955
          %v4006 = vpack.c.b16 %v3960, %v3958
          %v4007 = vpack.c.b16 %v3961, %v3959
          %v4008 = vpack.c.b16 %v3964, %v3962
          %v4009 = vpack.c.b16 %v3965, %v3963
          %v4010 = vpack.c.b16 %v3968, %v3966
          %v4011 = vpack.c.b16 %v3969, %v3967
          %v4012 = vpack.c.b16 %v3972, %v3970
          %v4013 = vpack.c.b16 %v3973, %v3971
          %v4014 = vpack.c.b16 %v3976, %v3974
          %v4015 = vpack.c.b16 %v3977, %v3975
          %v4016 = vpack.c.b16 %v3980, %v3978
          %v4017 = vpack.c.b16 %v3981, %v3979
          %v4018 = vpack.c.b16 %v3984, %v3982
          %v4019 = vpack.c.b16 %v3985, %v3983
          %v4020 = vpack.c.b16 %v3988, %v3986
          %v4021 = vpack.c.b16 %v3989, %v3987
          %4054 = vmatprep.subr.bf16.mxu0 %v3991
          %4055 = vmatpush1.bf16.msra.mxu0 %v3990
          %4056 = vmatprep.subr.bf16.mxu0 %v3993
          %4057 = vmatpush1.bf16.msra.mxu0 %v3992
          %4058 = vmatprep.subr.bf16.mxu0 %v3995
          %4059 = vmatpush1.bf16.msra.mxu0 %v3994
          %4060 = vmatprep.subr.bf16.mxu0 %v3997
          %4061 = vmatpush1.bf16.msra.mxu0 %v3996
          %4062 = vmatprep.subr.bf16.mxu0 %v3999
          %4063 = vmatpush1.bf16.msra.mxu0 %v3998
          %4064 = vmatprep.subr.bf16.mxu0 %v4001
          %4065 = vmatpush1.bf16.msra.mxu0 %v4000
          %4066 = vmatprep.subr.bf16.mxu0 %v4003
          %4067 = vmatpush1.bf16.msra.mxu0 %v4002
          %4068 = vmatprep.subr.bf16.mxu0 %v4005
          %4069 = vmatpush1.bf16.msra.mxu0 %v4004
          %4070 = vmatprep.subr.bf16.mxu0 %v4007
          %4071 = vmatpush1.bf16.msra.mxu0 %v4006
          %4072 = vmatprep.subr.bf16.mxu0 %v4009
          %4073 = vmatpush1.bf16.msra.mxu0 %v4008
          %4074 = vmatprep.subr.bf16.mxu0 %v4011
          %4075 = vmatpush1.bf16.msra.mxu0 %v4010
          %4076 = vmatprep.subr.bf16.mxu0 %v4013
          %4077 = vmatpush1.bf16.msra.mxu0 %v4012
          %4078 = vmatprep.subr.bf16.mxu0 %v4015
          %4079 = vmatpush1.bf16.msra.mxu0 %v4014
          %4080 = vmatprep.subr.bf16.mxu0 %v4017
          %4081 = vmatpush1.bf16.msra.mxu0 %v4016
          %4082 = vmatprep.subr.bf16.mxu0 %v4019
          %4083 = vmatpush1.bf16.msra.mxu0 %v4018
          %4084 = vmatprep.subr.bf16.mxu0 %v4021
          %4085 = vmatpush1.bf16.msra.mxu0 %v4020
          %4086 = vmatprep.mubr.bf16.mxu0 %v2927
          %4087 = vmatmul.mubr.bf16.gmra.mrb[0].mxu0 %v2926
          %v4088 = vpop.f32.mrb[0].mxu0
          %v4089 = vadd.f32 0.0, %v4088
          %v4090 = vpop.f32.mrb[0].mxu0
          %v4091 = vadd.f32 0.0, %v4090
          %v4092 = vpop.f32.mrb[0].mxu0
          %v4093 = vpop.f32.mrb[0].mxu0
          %4094 = vdwg.mxu0
          %v4095 = vadd.f32 %v3860, %v4089
          %v4096 = vadd.f32 %v3861, %v4091
          %v4097 = vld [vmem:[#allocation9 + $0x300] sm:$0xff]
          %v4098 = vld [vmem:[#allocation9 + $0x308] sm:$0xff]
          %v4099 = vld [vmem:[#allocation9 + $0x310] sm:$0xff]
          %v4100 = vld [vmem:[#allocation9 + $0x318] sm:$0xff]
          %v4101 = vld [vmem:[#allocation9 + $0x320] sm:$0xff]
          %v4102 = vld [vmem:[#allocation9 + $0x328] sm:$0xff]
          %v4103 = vld [vmem:[#allocation9 + $0x330] sm:$0xff]
          %v4104 = vld [vmem:[#allocation9 + $0x338] sm:$0xff]
          %v4105 = vld [vmem:[#allocation9 + $0x340] sm:$0xff]
          %v4106 = vld [vmem:[#allocation9 + $0x348] sm:$0xff]
          %v4107 = vld [vmem:[#allocation9 + $0x350] sm:$0xff]
          %v4108 = vld [vmem:[#allocation9 + $0x358] sm:$0xff]
          %v4109 = vld [vmem:[#allocation9 + $0x360] sm:$0xff]
          %v4110 = vld [vmem:[#allocation9 + $0x368] sm:$0xff]
          %v4111 = vld [vmem:[#allocation9 + $0x370] sm:$0xff]
          %v4112 = vld [vmem:[#allocation9 + $0x378] sm:$0xff]
          %v4113 = vld [vmem:[#allocation9 + $0x380] sm:$0xff]
          %v4114 = vld [vmem:[#allocation9 + $0x388] sm:$0xff]
          %v4115 = vld [vmem:[#allocation9 + $0x390] sm:$0xff]
          %v4116 = vld [vmem:[#allocation9 + $0x398] sm:$0xff]
          %v4117 = vld [vmem:[#allocation9 + $0x3a0] sm:$0xff]
          %v4118 = vld [vmem:[#allocation9 + $0x3a8] sm:$0xff]
          %v4119 = vld [vmem:[#allocation9 + $0x3b0] sm:$0xff]
          %v4120 = vld [vmem:[#allocation9 + $0x3b8] sm:$0xff]
          %v4121 = vld [vmem:[#allocation9 + $0x3c0] sm:$0xff]
          %v4122 = vld [vmem:[#allocation9 + $0x3c8] sm:$0xff]
          %v4123 = vld [vmem:[#allocation9 + $0x3d0] sm:$0xff]
          %v4124 = vld [vmem:[#allocation9 + $0x3d8] sm:$0xff]
          %v4125 = vld [vmem:[#allocation9 + $0x3e0] sm:$0xff]
          %v4126 = vld [vmem:[#allocation9 + $0x3e8] sm:$0xff]
          %v4127 = vld [vmem:[#allocation9 + $0x3f0] sm:$0xff]
          %v4128 = vld [vmem:[#allocation9 + $0x3f8] sm:$0xff]
          %v4161 = vunpack.c.l.b16 %v4097
          %v4162 = vunpack.c.h.b16 %v4097
          %v4163 = vunpack.c.l.b16 %v4098
          %v4164 = vunpack.c.h.b16 %v4098
          %v4165 = vunpack.c.l.b16 %v4099
          %v4166 = vunpack.c.h.b16 %v4099
          %v4167 = vunpack.c.l.b16 %v4100
          %v4168 = vunpack.c.h.b16 %v4100
          %v4169 = vunpack.c.l.b16 %v4101
          %v4170 = vunpack.c.h.b16 %v4101
          %v4171 = vunpack.c.l.b16 %v4102
          %v4172 = vunpack.c.h.b16 %v4102
          %v4173 = vunpack.c.l.b16 %v4103
          %v4174 = vunpack.c.h.b16 %v4103
          %v4175 = vunpack.c.l.b16 %v4104
          %v4176 = vunpack.c.h.b16 %v4104
          %v4177 = vunpack.c.l.b16 %v4105
          %v4178 = vunpack.c.h.b16 %v4105
          %v4179 = vunpack.c.l.b16 %v4106
          %v4180 = vunpack.c.h.b16 %v4106
          %v4181 = vunpack.c.l.b16 %v4107
          %v4182 = vunpack.c.h.b16 %v4107
          %v4183 = vunpack.c.l.b16 %v4108
          %v4184 = vunpack.c.h.b16 %v4108
          %v4185 = vunpack.c.l.b16 %v4109
          %v4186 = vunpack.c.h.b16 %v4109
          %v4187 = vunpack.c.l.b16 %v4110
          %v4188 = vunpack.c.h.b16 %v4110
          %v4189 = vunpack.c.l.b16 %v4111
          %v4190 = vunpack.c.h.b16 %v4111
          %v4191 = vunpack.c.l.b16 %v4112
          %v4192 = vunpack.c.h.b16 %v4112
          %v4193 = vunpack.c.l.b16 %v4113
          %v4194 = vunpack.c.h.b16 %v4113
          %v4195 = vunpack.c.l.b16 %v4114
          %v4196 = vunpack.c.h.b16 %v4114
          %v4197 = vunpack.c.l.b16 %v4115
          %v4198 = vunpack.c.h.b16 %v4115
          %v4199 = vunpack.c.l.b16 %v4116
          %v4200 = vunpack.c.h.b16 %v4116
          %v4201 = vunpack.c.l.b16 %v4117
          %v4202 = vunpack.c.h.b16 %v4117
          %v4203 = vunpack.c.l.b16 %v4118
          %v4204 = vunpack.c.h.b16 %v4118
          %v4205 = vunpack.c.l.b16 %v4119
          %v4206 = vunpack.c.h.b16 %v4119
          %v4207 = vunpack.c.l.b16 %v4120
          %v4208 = vunpack.c.h.b16 %v4120
          %v4209 = vunpack.c.l.b16 %v4121
          %v4210 = vunpack.c.h.b16 %v4121
          %v4211 = vunpack.c.l.b16 %v4122
          %v4212 = vunpack.c.h.b16 %v4122
          %v4213 = vunpack.c.l.b16 %v4123
          %v4214 = vunpack.c.h.b16 %v4123
          %v4215 = vunpack.c.l.b16 %v4124
          %v4216 = vunpack.c.h.b16 %v4124
          %v4217 = vunpack.c.l.b16 %v4125
          %v4218 = vunpack.c.h.b16 %v4125
          %v4219 = vunpack.c.l.b16 %v4126
          %v4220 = vunpack.c.h.b16 %v4126
          %v4221 = vunpack.c.l.b16 %v4127
          %v4222 = vunpack.c.h.b16 %v4127
          %v4223 = vunpack.c.l.b16 %v4128
          %v4224 = vunpack.c.h.b16 %v4128
          %v4225 = vpack.c.b16 %v4163, %v4161
          %v4226 = vpack.c.b16 %v4164, %v4162
          %v4227 = vpack.c.b16 %v4167, %v4165
          %v4228 = vpack.c.b16 %v4168, %v4166
          %v4229 = vpack.c.b16 %v4171, %v4169
          %v4230 = vpack.c.b16 %v4172, %v4170
          %v4231 = vpack.c.b16 %v4175, %v4173
          %v4232 = vpack.c.b16 %v4176, %v4174
          %v4233 = vpack.c.b16 %v4179, %v4177
          %v4234 = vpack.c.b16 %v4180, %v4178
          %v4235 = vpack.c.b16 %v4183, %v4181
          %v4236 = vpack.c.b16 %v4184, %v4182
          %v4237 = vpack.c.b16 %v4187, %v4185
          %v4238 = vpack.c.b16 %v4188, %v4186
          %v4239 = vpack.c.b16 %v4191, %v4189
          %v4240 = vpack.c.b16 %v4192, %v4190
          %v4241 = vpack.c.b16 %v4195, %v4193
          %v4242 = vpack.c.b16 %v4196, %v4194
          %v4243 = vpack.c.b16 %v4199, %v4197
          %v4244 = vpack.c.b16 %v4200, %v4198
          %v4245 = vpack.c.b16 %v4203, %v4201
          %v4246 = vpack.c.b16 %v4204, %v4202
          %v4247 = vpack.c.b16 %v4207, %v4205
          %v4248 = vpack.c.b16 %v4208, %v4206
          %v4249 = vpack.c.b16 %v4211, %v4209
          %v4250 = vpack.c.b16 %v4212, %v4210
          %v4251 = vpack.c.b16 %v4215, %v4213
          %v4252 = vpack.c.b16 %v4216, %v4214
          %v4253 = vpack.c.b16 %v4219, %v4217
          %v4254 = vpack.c.b16 %v4220, %v4218
          %v4255 = vpack.c.b16 %v4223, %v4221
          %v4256 = vpack.c.b16 %v4224, %v4222
          %4289 = vmatprep.subr.bf16.mxu0 %v4226
          %4290 = vmatpush1.bf16.msra.mxu0 %v4225
          %4291 = vmatprep.subr.bf16.mxu0 %v4228
          %4292 = vmatpush1.bf16.msra.mxu0 %v4227
          %4293 = vmatprep.subr.bf16.mxu0 %v4230
          %4294 = vmatpush1.bf16.msra.mxu0 %v4229
          %4295 = vmatprep.subr.bf16.mxu0 %v4232
          %4296 = vmatpush1.bf16.msra.mxu0 %v4231
          %4297 = vmatprep.subr.bf16.mxu0 %v4234
          %4298 = vmatpush1.bf16.msra.mxu0 %v4233
          %4299 = vmatprep.subr.bf16.mxu0 %v4236
          %4300 = vmatpush1.bf16.msra.mxu0 %v4235
          %4301 = vmatprep.subr.bf16.mxu0 %v4238
          %4302 = vmatpush1.bf16.msra.mxu0 %v4237
          %4303 = vmatprep.subr.bf16.mxu0 %v4240
          %4304 = vmatpush1.bf16.msra.mxu0 %v4239
          %4305 = vmatprep.subr.bf16.mxu0 %v4242
          %4306 = vmatpush1.bf16.msra.mxu0 %v4241
          %4307 = vmatprep.subr.bf16.mxu0 %v4244
          %4308 = vmatpush1.bf16.msra.mxu0 %v4243
          %4309 = vmatprep.subr.bf16.mxu0 %v4246
          %4310 = vmatpush1.bf16.msra.mxu0 %v4245
          %4311 = vmatprep.subr.bf16.mxu0 %v4248
          %4312 = vmatpush1.bf16.msra.mxu0 %v4247
          %4313 = vmatprep.subr.bf16.mxu0 %v4250
          %4314 = vmatpush1.bf16.msra.mxu0 %v4249
          %4315 = vmatprep.subr.bf16.mxu0 %v4252
          %4316 = vmatpush1.bf16.msra.mxu0 %v4251
          %4317 = vmatprep.subr.bf16.mxu0 %v4254
          %4318 = vmatpush1.bf16.msra.mxu0 %v4253
          %4319 = vmatprep.subr.bf16.mxu0 %v4256
          %4320 = vmatpush1.bf16.msra.mxu0 %v4255
          %4321 = vmatprep.mubr.bf16.mxu0 %v3152
          %4322 = vmatmul.mubr.bf16.gmra.mrb[0].mxu0 %v3151
          %v4323 = vpop.f32.mrb[0].mxu0
          %v4324 = vadd.f32 0.0, %v4323
          %v4325 = vpop.f32.mrb[0].mxu0
          %v4326 = vadd.f32 0.0, %v4325
          %v4327 = vpop.f32.mrb[0].mxu0
          %v4328 = vpop.f32.mrb[0].mxu0
          %4329 = vdwg.mxu0
          %v4330 = vadd.f32 %v4095, %v4324
          %v4331 = vadd.f32 %v4096, %v4326
          %v4332 = vpack.c.bf16 %v3371, %v3371
          %v4333 = vpack.c.bf16 %v3372, %v3372
          %v4334 = vld [vmem:[#allocation9 + $0x400] sm:$0xff]
          %v4335 = vld [vmem:[#allocation9 + $0x408] sm:$0xff]
          %v4336 = vld [vmem:[#allocation9 + $0x410] sm:$0xff]
          %v4337 = vld [vmem:[#allocation9 + $0x418] sm:$0xff]
          %v4338 = vld [vmem:[#allocation9 + $0x420] sm:$0xff]
          %v4339 = vld [vmem:[#allocation9 + $0x428] sm:$0xff]
          %v4340 = vld [vmem:[#allocation9 + $0x430] sm:$0xff]
          %v4341 = vld [vmem:[#allocation9 + $0x438] sm:$0xff]
          %v4342 = vld [vmem:[#allocation9 + $0x440] sm:$0xff]
          %v4343 = vld [vmem:[#allocation9 + $0x448] sm:$0xff]
          %v4344 = vld [vmem:[#allocation9 + $0x450] sm:$0xff]
          %v4345 = vld [vmem:[#allocation9 + $0x458] sm:$0xff]
          %v4346 = vld [vmem:[#allocation9 + $0x460] sm:$0xff]
          %v4347 = vld [vmem:[#allocation9 + $0x468] sm:$0xff]
          %v4348 = vld [vmem:[#allocation9 + $0x470] sm:$0xff]
          %v4349 = vld [vmem:[#allocation9 + $0x478] sm:$0xff]
          %v4350 = vld [vmem:[#allocation9 + $0x480] sm:$0xff]
          %v4351 = vld [vmem:[#allocation9 + $0x488] sm:$0xff]
          %v4352 = vld [vmem:[#allocation9 + $0x490] sm:$0xff]
          %v4353 = vld [vmem:[#allocation9 + $0x498] sm:$0xff]
          %v4354 = vld [vmem:[#allocation9 + $0x4a0] sm:$0xff]
          %v4355 = vld [vmem:[#allocation9 + $0x4a8] sm:$0xff]
          %v4356 = vld [vmem:[#allocation9 + $0x4b0] sm:$0xff]
          %v4357 = vld [vmem:[#allocation9 + $0x4b8] sm:$0xff]
          %v4358 = vld [vmem:[#allocation9 + $0x4c0] sm:$0xff]
          %v4359 = vld [vmem:[#allocation9 + $0x4c8] sm:$0xff]
          %v4360 = vld [vmem:[#allocation9 + $0x4d0] sm:$0xff]
          %v4361 = vld [vmem:[#allocation9 + $0x4d8] sm:$0xff]
          %v4362 = vld [vmem:[#allocation9 + $0x4e0] sm:$0xff]
          %v4363 = vld [vmem:[#allocation9 + $0x4e8] sm:$0xff]
          %v4364 = vld [vmem:[#allocation9 + $0x4f0] sm:$0xff]
          %v4365 = vld [vmem:[#allocation9 + $0x4f8] sm:$0xff]
          %v4398 = vunpack.c.l.b16 %v4334
          %v4399 = vunpack.c.h.b16 %v4334
          %v4400 = vunpack.c.l.b16 %v4335
          %v4401 = vunpack.c.h.b16 %v4335
          %v4402 = vunpack.c.l.b16 %v4336
          %v4403 = vunpack.c.h.b16 %v4336
          %v4404 = vunpack.c.l.b16 %v4337
          %v4405 = vunpack.c.h.b16 %v4337
          %v4406 = vunpack.c.l.b16 %v4338
          %v4407 = vunpack.c.h.b16 %v4338
          %v4408 = vunpack.c.l.b16 %v4339
          %v4409 = vunpack.c.h.b16 %v4339
          %v4410 = vunpack.c.l.b16 %v4340
          %v4411 = vunpack.c.h.b16 %v4340
          %v4412 = vunpack.c.l.b16 %v4341
          %v4413 = vunpack.c.h.b16 %v4341
          %v4414 = vunpack.c.l.b16 %v4342
          %v4415 = vunpack.c.h.b16 %v4342
          %v4416 = vunpack.c.l.b16 %v4343
          %v4417 = vunpack.c.h.b16 %v4343
          %v4418 = vunpack.c.l.b16 %v4344
          %v4419 = vunpack.c.h.b16 %v4344
          %v4420 = vunpack.c.l.b16 %v4345
          %v4421 = vunpack.c.h.b16 %v4345
          %v4422 = vunpack.c.l.b16 %v4346
          %v4423 = vunpack.c.h.b16 %v4346
          %v4424 = vunpack.c.l.b16 %v4347
          %v4425 = vunpack.c.h.b16 %v4347
          %v4426 = vunpack.c.l.b16 %v4348
          %v4427 = vunpack.c.h.b16 %v4348
          %v4428 = vunpack.c.l.b16 %v4349
          %v4429 = vunpack.c.h.b16 %v4349
          %v4430 = vunpack.c.l.b16 %v4350
          %v4431 = vunpack.c.h.b16 %v4350
          %v4432 = vunpack.c.l.b16 %v4351
          %v4433 = vunpack.c.h.b16 %v4351
          %v4434 = vunpack.c.l.b16 %v4352
          %v4435 = vunpack.c.h.b16 %v4352
          %v4436 = vunpack.c.l.b16 %v4353
          %v4437 = vunpack.c.h.b16 %v4353
          %v4438 = vunpack.c.l.b16 %v4354
          %v4439 = vunpack.c.h.b16 %v4354
          %v4440 = vunpack.c.l.b16 %v4355
          %v4441 = vunpack.c.h.b16 %v4355
          %v4442 = vunpack.c.l.b16 %v4356
          %v4443 = vunpack.c.h.b16 %v4356
          %v4444 = vunpack.c.l.b16 %v4357
          %v4445 = vunpack.c.h.b16 %v4357
          %v4446 = vunpack.c.l.b16 %v4358
          %v4447 = vunpack.c.h.b16 %v4358
          %v4448 = vunpack.c.l.b16 %v4359
          %v4449 = vunpack.c.h.b16 %v4359
          %v4450 = vunpack.c.l.b16 %v4360
          %v4451 = vunpack.c.h.b16 %v4360
          %v4452 = vunpack.c.l.b16 %v4361
          %v4453 = vunpack.c.h.b16 %v4361
          %v4454 = vunpack.c.l.b16 %v4362
          %v4455 = vunpack.c.h.b16 %v4362
          %v4456 = vunpack.c.l.b16 %v4363
          %v4457 = vunpack.c.h.b16 %v4363
          %v4458 = vunpack.c.l.b16 %v4364
          %v4459 = vunpack.c.h.b16 %v4364
          %v4460 = vunpack.c.l.b16 %v4365
          %v4461 = vunpack.c.h.b16 %v4365
          %v4462 = vpack.c.b16 %v4400, %v4398
          %v4463 = vpack.c.b16 %v4401, %v4399
          %v4464 = vpack.c.b16 %v4404, %v4402
          %v4465 = vpack.c.b16 %v4405, %v4403
          %v4466 = vpack.c.b16 %v4408, %v4406
          %v4467 = vpack.c.b16 %v4409, %v4407
          %v4468 = vpack.c.b16 %v4412, %v4410
          %v4469 = vpack.c.b16 %v4413, %v4411
          %v4470 = vpack.c.b16 %v4416, %v4414
          %v4471 = vpack.c.b16 %v4417, %v4415
          %v4472 = vpack.c.b16 %v4420, %v4418
          %v4473 = vpack.c.b16 %v4421, %v4419
          %v4474 = vpack.c.b16 %v4424, %v4422
          %v4475 = vpack.c.b16 %v4425, %v4423
          %v4476 = vpack.c.b16 %v4428, %v4426
          %v4477 = vpack.c.b16 %v4429, %v4427
          %v4478 = vpack.c.b16 %v4432, %v4430
          %v4479 = vpack.c.b16 %v4433, %v4431
          %v4480 = vpack.c.b16 %v4436, %v4434
          %v4481 = vpack.c.b16 %v4437, %v4435
          %v4482 = vpack.c.b16 %v4440, %v4438
          %v4483 = vpack.c.b16 %v4441, %v4439
          %v4484 = vpack.c.b16 %v4444, %v4442
          %v4485 = vpack.c.b16 %v4445, %v4443
          %v4486 = vpack.c.b16 %v4448, %v4446
          %v4487 = vpack.c.b16 %v4449, %v4447
          %v4488 = vpack.c.b16 %v4452, %v4450
          %v4489 = vpack.c.b16 %v4453, %v4451
          %v4490 = vpack.c.b16 %v4456, %v4454
          %v4491 = vpack.c.b16 %v4457, %v4455
          %v4492 = vpack.c.b16 %v4460, %v4458
          %v4493 = vpack.c.b16 %v4461, %v4459
          %4526 = vmatprep.subr.bf16.mxu0 %v4463
          %4527 = vmatpush1.bf16.msra.mxu0 %v4462
          %4528 = vmatprep.subr.bf16.mxu0 %v4465
          %4529 = vmatpush1.bf16.msra.mxu0 %v4464
          %4530 = vmatprep.subr.bf16.mxu0 %v4467
          %4531 = vmatpush1.bf16.msra.mxu0 %v4466
          %4532 = vmatprep.subr.bf16.mxu0 %v4469
          %4533 = vmatpush1.bf16.msra.mxu0 %v4468
          %4534 = vmatprep.subr.bf16.mxu0 %v4471
          %4535 = vmatpush1.bf16.msra.mxu0 %v4470
          %4536 = vmatprep.subr.bf16.mxu0 %v4473
          %4537 = vmatpush1.bf16.msra.mxu0 %v4472
          %4538 = vmatprep.subr.bf16.mxu0 %v4475
          %4539 = vmatpush1.bf16.msra.mxu0 %v4474
          %4540 = vmatprep.subr.bf16.mxu0 %v4477
          %4541 = vmatpush1.bf16.msra.mxu0 %v4476
          %4542 = vmatprep.subr.bf16.mxu0 %v4479
          %4543 = vmatpush1.bf16.msra.mxu0 %v4478
          %4544 = vmatprep.subr.bf16.mxu0 %v4481
          %4545 = vmatpush1.bf16.msra.mxu0 %v4480
          %4546 = vmatprep.subr.bf16.mxu0 %v4483
          %4547 = vmatpush1.bf16.msra.mxu0 %v4482
          %4548 = vmatprep.subr.bf16.mxu0 %v4485
          %4549 = vmatpush1.bf16.msra.mxu0 %v4484
          %4550 = vmatprep.subr.bf16.mxu0 %v4487
          %4551 = vmatpush1.bf16.msra.mxu0 %v4486
          %4552 = vmatprep.subr.bf16.mxu0 %v4489
          %4553 = vmatpush1.bf16.msra.mxu0 %v4488
          %4554 = vmatprep.subr.bf16.mxu0 %v4491
          %4555 = vmatpush1.bf16.msra.mxu0 %v4490
          %4556 = vmatprep.subr.bf16.mxu0 %v4493
          %4557 = vmatpush1.bf16.msra.mxu0 %v4492
          %4558 = vmatprep.mubr.bf16.mxu0 %v4333
          %4559 = vmatmul.mubr.bf16.gmra.mrb[0].mxu0 %v4332
          %v4560 = vpop.f32.mrb[0].mxu0
          %v4561 = vadd.f32 0.0, %v4560
          %v4562 = vpop.f32.mrb[0].mxu0
          %v4563 = vadd.f32 0.0, %v4562
          %v4564 = vpop.f32.mrb[0].mxu0
          %v4565 = vpop.f32.mrb[0].mxu0
          %4566 = vdwg.mxu0
          %v4567 = vadd.f32 %v4330, %v4561
          %v4568 = vadd.f32 %v4331, %v4563
          %v4569 = vmax.f32 %v4567, 0.0
          %v4570 = vmax.f32 %v4568, 0.0
          %v4571 = vpack.c.bf16 %v4569, %v4569
          %v4572 = vpack.c.bf16 %v4570, %v4570
          %v4573 = vld [vmem:[#allocation12] sm:$0xf]
          %v4574 = vld [vmem:[#allocation12 + $0x4] sm:$0xf]
          %v4575 = vld [vmem:[#allocation12 + $0x8] sm:$0xf]
          %v4576 = vld [vmem:[#allocation12 + $0xc] sm:$0xf]
          %v4577 = vld [vmem:[#allocation12 + $0x10] sm:$0xf]
          %v4578 = vld [vmem:[#allocation12 + $0x14] sm:$0xf]
          %v4579 = vld [vmem:[#allocation12 + $0x18] sm:$0xf]
          %v4580 = vld [vmem:[#allocation12 + $0x1c] sm:$0xf]
          %v4581 = vld [vmem:[#allocation12 + $0x20] sm:$0xf]
          %v4582 = vld [vmem:[#allocation12 + $0x24] sm:$0xf]
          %v4583 = vld [vmem:[#allocation12 + $0x28] sm:$0xf]
          %v4584 = vld [vmem:[#allocation12 + $0x2c] sm:$0xf]
          %v4585 = vld [vmem:[#allocation12 + $0x30] sm:$0xf]
          %v4586 = vld [vmem:[#allocation12 + $0x34] sm:$0xf]
          %v4587 = vld [vmem:[#allocation12 + $0x38] sm:$0xf]
          %v4588 = vld [vmem:[#allocation12 + $0x3c] sm:$0xf]
          %v4589 = vld [vmem:[#allocation12 + $0x40] sm:$0xf]
          %v4590 = vld [vmem:[#allocation12 + $0x44] sm:$0xf]
          %v4591 = vld [vmem:[#allocation12 + $0x48] sm:$0xf]
          %v4592 = vld [vmem:[#allocation12 + $0x4c] sm:$0xf]
          %v4593 = vld [vmem:[#allocation12 + $0x50] sm:$0xf]
          %v4594 = vld [vmem:[#allocation12 + $0x54] sm:$0xf]
          %v4595 = vld [vmem:[#allocation12 + $0x58] sm:$0xf]
          %v4596 = vld [vmem:[#allocation12 + $0x5c] sm:$0xf]
          %v4597 = vld [vmem:[#allocation12 + $0x60] sm:$0xf]
          %v4598 = vld [vmem:[#allocation12 + $0x64] sm:$0xf]
          %v4599 = vld [vmem:[#allocation12 + $0x68] sm:$0xf]
          %v4600 = vld [vmem:[#allocation12 + $0x6c] sm:$0xf]
          %v4601 = vld [vmem:[#allocation12 + $0x70] sm:$0xf]
          %v4602 = vld [vmem:[#allocation12 + $0x74] sm:$0xf]
          %v4603 = vld [vmem:[#allocation12 + $0x78] sm:$0xf]
          %v4604 = vld [vmem:[#allocation12 + $0x7c] sm:$0xf]
          %v4605 = vld [vmem:[#allocation14] sm:$0x1]
          %v4607 = vlaneseq
          %v4608 = vshrl.u32 %v4607, 7
          %v4609 = vsub.s32 0, %v4608
          %v4610 = vrot.slane %v4605, %v4609
          %v4644 = vunpack.c.l.b16 %v4573
          %v4645 = vunpack.c.l.b16 %v4574
          %v4646 = vunpack.c.l.b16 %v4575
          %v4647 = vunpack.c.l.b16 %v4576
          %v4648 = vunpack.c.l.b16 %v4577
          %v4649 = vunpack.c.l.b16 %v4578
          %v4650 = vunpack.c.l.b16 %v4579
          %v4651 = vunpack.c.l.b16 %v4580
          %v4652 = vunpack.c.l.b16 %v4581
          %v4653 = vunpack.c.l.b16 %v4582
          %v4654 = vunpack.c.l.b16 %v4583
          %v4655 = vunpack.c.l.b16 %v4584
          %v4656 = vunpack.c.l.b16 %v4585
          %v4657 = vunpack.c.l.b16 %v4586
          %v4658 = vunpack.c.l.b16 %v4587
          %v4659 = vunpack.c.l.b16 %v4588
          %v4660 = vunpack.c.l.b16 %v4589
          %v4661 = vunpack.c.l.b16 %v4590
          %v4662 = vunpack.c.l.b16 %v4591
          %v4663 = vunpack.c.l.b16 %v4592
          %v4664 = vunpack.c.l.b16 %v4593
          %v4665 = vunpack.c.l.b16 %v4594
          %v4666 = vunpack.c.l.b16 %v4595
          %v4667 = vunpack.c.l.b16 %v4596
          %v4668 = vunpack.c.l.b16 %v4597
          %v4669 = vunpack.c.l.b16 %v4598
          %v4670 = vunpack.c.l.b16 %v4599
          %v4671 = vunpack.c.l.b16 %v4600
          %v4672 = vunpack.c.l.b16 %v4601
          %v4673 = vunpack.c.l.b16 %v4602
          %v4674 = vunpack.c.l.b16 %v4603
          %v4675 = vunpack.c.l.b16 %v4604
          %v4676 = vpack.c.b16 %v4645, %v4644
          %v4677 = vpack.c.b16 %v4647, %v4646
          %v4678 = vpack.c.b16 %v4649, %v4648
          %v4679 = vpack.c.b16 %v4651, %v4650
          %v4680 = vpack.c.b16 %v4653, %v4652
          %v4681 = vpack.c.b16 %v4655, %v4654
          %v4682 = vpack.c.b16 %v4657, %v4656
          %v4683 = vpack.c.b16 %v4659, %v4658
          %v4684 = vpack.c.b16 %v4661, %v4660
          %v4685 = vpack.c.b16 %v4663, %v4662
          %v4686 = vpack.c.b16 %v4665, %v4664
          %v4687 = vpack.c.b16 %v4667, %v4666
          %v4688 = vpack.c.b16 %v4669, %v4668
          %v4689 = vpack.c.b16 %v4671, %v4670
          %v4690 = vpack.c.b16 %v4673, %v4672
          %v4691 = vpack.c.b16 %v4675, %v4674
          %4708 = vmatprep.subr.bf16.mxu0 0
          %4709 = vmatpush1.bf16.msra.mxu0 %v4676
          %4710 = vmatprep.subr.bf16.mxu0 0
          %4711 = vmatpush1.bf16.msra.mxu0 %v4677
          %4712 = vmatprep.subr.bf16.mxu0 0
          %4713 = vmatpush1.bf16.msra.mxu0 %v4678
          %4714 = vmatprep.subr.bf16.mxu0 0
          %4715 = vmatpush1.bf16.msra.mxu0 %v4679
          %4716 = vmatprep.subr.bf16.mxu0 0
          %4717 = vmatpush1.bf16.msra.mxu0 %v4680
          %4718 = vmatprep.subr.bf16.mxu0 0
          %4719 = vmatpush1.bf16.msra.mxu0 %v4681
          %4720 = vmatprep.subr.bf16.mxu0 0
          %4721 = vmatpush1.bf16.msra.mxu0 %v4682
          %4722 = vmatprep.subr.bf16.mxu0 0
          %4723 = vmatpush1.bf16.msra.mxu0 %v4683
          %4724 = vmatprep.subr.bf16.mxu0 0
          %4725 = vmatpush1.bf16.msra.mxu0 %v4684
          %4726 = vmatprep.subr.bf16.mxu0 0
          %4727 = vmatpush1.bf16.msra.mxu0 %v4685
          %4728 = vmatprep.subr.bf16.mxu0 0
          %4729 = vmatpush1.bf16.msra.mxu0 %v4686
          %4730 = vmatprep.subr.bf16.mxu0 0
          %4731 = vmatpush1.bf16.msra.mxu0 %v4687
          %4732 = vmatprep.subr.bf16.mxu0 0
          %4733 = vmatpush1.bf16.msra.mxu0 %v4688
          %4734 = vmatprep.subr.bf16.mxu0 0
          %4735 = vmatpush1.bf16.msra.mxu0 %v4689
          %4736 = vmatprep.subr.bf16.mxu0 0
          %4737 = vmatpush1.bf16.msra.mxu0 %v4690
          %4738 = vmatprep.subr.bf16.mxu0 0
          %4739 = vmatpush1.bf16.msra.mxu0 %v4691
          %4740 = vmatprep.mubr.bf16.mxu0 %v4572
          %4741 = vmatmul.mubr.bf16.gmra.mrb[0].mxu0 %v4571
          %v4742 = vpop.f32.mrb[0].mxu0
          %v4743 = vadd.f32 %v4610, %v4742
          %v4744 = vpop.f32.mrb[0].mxu0
          %v4745 = vpop.f32.mrb[0].mxu0
          %v4746 = vpop.f32.mrb[0].mxu0
          %4747 = vdwg.mxu0
          %v4748 = vmax.f32 %v4743, 0.0
          %v4749 = vpack.c.bf16 %v4748, %v4748
          %v4750 = vld [vmem:[%s8] sm:$0xf]
          %v4751 = vld [vmem:[%s8 + $0x4] sm:$0xf]
          %v4752 = vld [vmem:[%s8 + $0x8] sm:$0xf]
          %v4753 = vld [vmem:[%s8 + $0xc] sm:$0xf]
          %v4754 = vld [vmem:[%s8 + $0x10] sm:$0xf]
          %v4755 = vld [vmem:[%s8 + $0x14] sm:$0xf]
          %v4756 = vld [vmem:[%s8 + $0x18] sm:$0xf]
          %v4757 = vld [vmem:[%s8 + $0x1c] sm:$0xf]
          %v4758 = vld [vmem:[%s8 + $0x20] sm:$0xf]
          %v4759 = vld [vmem:[%s8 + $0x24] sm:$0xf]
          %v4760 = vld [vmem:[%s8 + $0x28] sm:$0xf]
          %v4761 = vld [vmem:[%s8 + $0x2c] sm:$0xf]
          %v4762 = vld [vmem:[%s8 + $0x30] sm:$0xf]
          %v4763 = vld [vmem:[%s8 + $0x34] sm:$0xf]
          %v4764 = vld [vmem:[%s8 + $0x38] sm:$0xf]
          %v4765 = vld [vmem:[%s8 + $0x3c] sm:$0xf]
          %v4766 = vld [vmem:[#allocation15] sm:$0x1]
          %v4768 = vlaneseq
          %v4769 = vshrl.u32 %v4768, 7
          %v4770 = vsub.s32 0, %v4769
          %v4771 = vrot.slane %v4766, %v4770
          %v4789 = vunpack.c.l.b16 %v4750
          %v4790 = vunpack.c.l.b16 %v4751
          %v4791 = vunpack.c.l.b16 %v4752
          %v4792 = vunpack.c.l.b16 %v4753
          %v4793 = vunpack.c.l.b16 %v4754
          %v4794 = vunpack.c.l.b16 %v4755
          %v4795 = vunpack.c.l.b16 %v4756
          %v4796 = vunpack.c.l.b16 %v4757
          %v4797 = vunpack.c.l.b16 %v4758
          %v4798 = vunpack.c.l.b16 %v4759
          %v4799 = vunpack.c.l.b16 %v4760
          %v4800 = vunpack.c.l.b16 %v4761
          %v4801 = vunpack.c.l.b16 %v4762
          %v4802 = vunpack.c.l.b16 %v4763
          %v4803 = vunpack.c.l.b16 %v4764
          %v4804 = vunpack.c.l.b16 %v4765
          %v4805 = vpack.c.b16 %v4790, %v4789
          %v4806 = vpack.c.b16 %v4792, %v4791
          %v4807 = vpack.c.b16 %v4794, %v4793
          %v4808 = vpack.c.b16 %v4796, %v4795
          %v4809 = vpack.c.b16 %v4798, %v4797
          %v4810 = vpack.c.b16 %v4800, %v4799
          %v4811 = vpack.c.b16 %v4802, %v4801
          %v4812 = vpack.c.b16 %v4804, %v4803
          %4821 = vmatprep.subr.bf16.mxu0 0
          %4822 = vmatpush1.bf16.msra.mxu0 %v4805
          %4823 = vmatprep.subr.bf16.mxu0 0
          %4824 = vmatpush1.bf16.msra.mxu0 %v4806
          %4825 = vmatprep.subr.bf16.mxu0 0
          %4826 = vmatpush1.bf16.msra.mxu0 %v4807
          %4827 = vmatprep.subr.bf16.mxu0 0
          %4828 = vmatpush1.bf16.msra.mxu0 %v4808
          %4829 = vmatprep.subr.bf16.mxu0 0
          %4830 = vmatpush1.bf16.msra.mxu0 %v4809
          %4831 = vmatprep.subr.bf16.mxu0 0
          %4832 = vmatpush1.bf16.msra.mxu0 %v4810
          %4833 = vmatprep.subr.bf16.mxu0 0
          %4834 = vmatpush1.bf16.msra.mxu0 %v4811
          %4835 = vmatprep.subr.bf16.mxu0 0
          %4836 = vmatpush1.bf16.msra.mxu0 %v4812
          %4837 = vmatprep.subr.bf16.mxu0 0
          %4838 = vmatpush1.bf16.msra.mxu0 0
          %4839 = vmatprep.subr.bf16.mxu0 0
          %4840 = vmatpush1.bf16.msra.mxu0 0
          %4841 = vmatprep.subr.bf16.mxu0 0
          %4842 = vmatpush1.bf16.msra.mxu0 0
          %4843 = vmatprep.subr.bf16.mxu0 0
          %4844 = vmatpush1.bf16.msra.mxu0 0
          %4845 = vmatprep.subr.bf16.mxu0 0
          %4846 = vmatpush1.bf16.msra.mxu0 0
          %4847 = vmatprep.subr.bf16.mxu0 0
          %4848 = vmatpush1.bf16.msra.mxu0 0
          %4849 = vmatprep.subr.bf16.mxu0 0
          %4850 = vmatpush1.bf16.msra.mxu0 0
          %4851 = vmatprep.subr.bf16.mxu0 0
          %4852 = vmatpush1.bf16.msra.mxu0 0
          %4853 = vmatprep.mubr.bf16.mxu0 0
          %4854 = vmatmul.mubr.bf16.gmra.mrb[0].mxu0 %v4749
          %v4855 = vpop.f32.mrb[0].mxu0
          %v4856 = vadd.f32 %v4771, %v4855
          %v4857 = vpop.f32.mrb[0].mxu0
          %v4858 = vpop.f32.mrb[0].mxu0
          %v4859 = vpop.f32.mrb[0].mxu0
          %4860 = vdwg.mxu0
          %v4861 = vmax.f32 %v4856, 0.0
          %v4862 = vpack.c.bf16 %v4861, %v4861
          %v4863 = vld [vmem:[%s10] sm:$0xf]
          %v4864 = vld [vmem:[%s10 + $0x4] sm:$0xf]
          %v4865 = vld [vmem:[%s10 + $0x8] sm:$0xf]
          %v4866 = vld [vmem:[%s10 + $0xc] sm:$0xf]
          %v4867 = vld [vmem:[%s10 + $0x10] sm:$0xf]
          %v4868 = vld [vmem:[%s10 + $0x14] sm:$0xf]
          %v4869 = vld [vmem:[%s10 + $0x18] sm:$0xf]
          %v4870 = vld [vmem:[%s10 + $0x1c] sm:$0xf]
          %v4871 = vld [vmem:[#allocation3] sm:$0x1]
          %v4873 = vlaneseq
          %v4874 = vshrl.u32 %v4873, 7
          %v4875 = vsub.s32 0, %v4874
          %v4876 = vrot.slane %v4871, %v4875
          %v4886 = vunpack.c.l.b16 %v4863
          %v4887 = vunpack.c.l.b16 %v4864
          %v4888 = vunpack.c.l.b16 %v4865
          %v4889 = vunpack.c.l.b16 %v4866
          %v4890 = vunpack.c.l.b16 %v4867
          %v4891 = vunpack.c.l.b16 %v4868
          %v4892 = vunpack.c.l.b16 %v4869
          %v4893 = vunpack.c.l.b16 %v4870
          %v4894 = vpack.c.b16 %v4887, %v4886
          %v4895 = vpack.c.b16 %v4889, %v4888
          %v4896 = vpack.c.b16 %v4891, %v4890
          %v4897 = vpack.c.b16 %v4893, %v4892
          %vm4902 = vcmask 523264
          %v4904 = vsel %vm4902, %v4862, 0
          %4906 = vmatprep.subr.bf16.mxu0 0
          %4907 = vmatpush1.bf16.msra.mxu0 %v4894
          %4908 = vmatprep.subr.bf16.mxu0 0
          %4909 = vmatpush1.bf16.msra.mxu0 %v4895
          %4910 = vmatprep.subr.bf16.mxu0 0
          %4911 = vmatpush1.bf16.msra.mxu0 %v4896
          %4912 = vmatprep.subr.bf16.mxu0 0
          %4913 = vmatpush1.bf16.msra.mxu0 %v4897
          %4914 = vmatprep.subr.bf16.mxu0 0
          %4915 = vmatpush1.bf16.msra.mxu0 0
          %4916 = vmatprep.subr.bf16.mxu0 0
          %4917 = vmatpush1.bf16.msra.mxu0 0
          %4918 = vmatprep.subr.bf16.mxu0 0
          %4919 = vmatpush1.bf16.msra.mxu0 0
          %4920 = vmatprep.subr.bf16.mxu0 0
          %4921 = vmatpush1.bf16.msra.mxu0 0
          %4922 = vmatprep.subr.bf16.mxu0 0
          %4923 = vmatpush1.bf16.msra.mxu0 0
          %4924 = vmatprep.subr.bf16.mxu0 0
          %4925 = vmatpush1.bf16.msra.mxu0 0
          %4926 = vmatprep.subr.bf16.mxu0 0
          %4927 = vmatpush1.bf16.msra.mxu0 0
          %4928 = vmatprep.subr.bf16.mxu0 0
          %4929 = vmatpush1.bf16.msra.mxu0 0
          %4930 = vmatprep.subr.bf16.mxu0 0
          %4931 = vmatpush1.bf16.msra.mxu0 0
          %4932 = vmatprep.subr.bf16.mxu0 0
          %4933 = vmatpush1.bf16.msra.mxu0 0
          %4934 = vmatprep.subr.bf16.mxu0 0
          %4935 = vmatpush1.bf16.msra.mxu0 0
          %4936 = vmatprep.subr.bf16.mxu0 0
          %4937 = vmatpush1.bf16.msra.mxu0 0
          %4938 = vmatprep.mubr.bf16.mxu0 0
          %4939 = vmatmul.mubr.bf16.gmra.mrb[0].mxu0 %v4904
          %v4940 = vpop.f32.mrb[0].mxu0
          %v4941 = vadd.f32 %v4876, %v4940
          %v4942 = vpop.f32.mrb[0].mxu0
          %v4943 = vpop.f32.mrb[0].mxu0
          %v4944 = vpop.f32.mrb[0].mxu0
          %4945 = vdwg.mxu0
          %v4946 = vxor.u32 %v4941, 2147483648
          %v4947 = vmul.f32 %v4946, 1.442695
          %v4948 = vpow.pop %v4947
          %v4949 = vadd.f32 %v4948, 1.0
          %v4950 = vrcp.pop %v4949
          %v4951 = vmul.f32 1.0, %v4950
          %vm4952 = vcmask 7168
          %4953 = vst.msk [vmem:[%s12] sm:$0xff] %vm4952, %v4951
        $region108: #{lstm_forward.1} parent=67 // pred_fallthru
          _
        // Predicated region
        $region109: #{lstm_forward.1} parent=67 // pred_check
          %p4954 = pneg %p314
        $region110: #{lstm_forward.1} parent=67 // pred_check_branch
          %4956 = sbr.rel (%p4954) target = $region112
        $region111: #{lstm_forward.1} parent=67 // pred_region
          _
        $region112: #{lstm_forward.1} parent=67 // pred_fallthru
          _
        // Predicated region
        $region113: #{lstm_forward.1} parent=67 // pred_check
          %p4957 = pneg %p314
        $region114: #{lstm_forward.1} parent=67 // pred_check_branch
          %4959 = sbr.rel (%p4957) target = $region116
        $region115: #{lstm_forward.1} parent=67 // pred_region
          _
        $region116: #{lstm_forward.1} parent=67 // pred_fallthru
          _
      $region68: #{lstm_forward.1} parent=5 // pred_fallthru
        _
      %p4960 = scmp.le.s32.totalorder 2, %s29
      // Predicated region
      $region117: #{lstm_forward.1} parent=5 // pred_check
        %p4961 = pneg %p4960
      $region118: #{lstm_forward.1} parent=5 // pred_check_branch
        %4963 = sbr.rel (%p4961) target = $region120
      $region119: #{lstm_forward.1} parent=5 // pred_region
        %s4964 = ssub.s32 %s29, 2
      $region120: #{lstm_forward.1} parent=5 // pred_fallthru
        _
    $region6: #{lstm_forward.1} parent=1 // loop_footer
      %s33 = sadd.s32 1, %s29
    $region7: #{lstm_forward.1} parent=1 // loop_footer_branch
      %28 = sbr.rel target = $region3
    $region8: #{lstm_forward.1} parent=1 // loop_exit
      _
    %4965 = vsyncpa [#allocation5], 1
    %s4966 = scalar_lea.sflag [#allocation5], 1
    %4967 = vsyncpa %s4966, 1
    %4968 = vsyncpa [#allocation7], 1
    %s4969 = scalar_lea.sflag [#allocation7], 1
    %4970 = vsyncpa %s4969, 1
    %4971 = vsyncpa [#allocation10], 1
    %4972 = vsyncpa [#allocation13], 1
    %4973 = vsyncpa [#allocation16], 1

</llo_original>
